<compile_context>
chip_gen: v6e
topology: v6e:2x2x1
jax: 0.10.0
libtpu: 0.0.40
codegen_flags: <defaults>
</compile_context>

<pallas_src>
import functools
import math

import jax
import jax.numpy as jnp
from jax.experimental import pallas as pl
from jax.experimental.pallas import tpu as pltpu


# Set to jnp.bfloat16 for production sizes on v6e/v7x (f32 accumulation is kept
# via preferred_element_type); f32 here keeps the small-shape check exact.
MXU_DTYPE = jnp.float32

# dot_general "NT" form: contract last dim of both operands (A @ B^T).
_NT = (((1,), (1,)), ((), ()))


# ---------------------------------------------------------------------------
# Fused Pallas kernel: one grid step == one batch element.  Everything is
# channel-major (C, L) except the tiny token-major K path.
# ---------------------------------------------------------------------------
def _fused_kernel(xlat_ref, xtop_ref,              # (1, C, Lq) cm, (1, Lkv, C) tm
                  wq_ref, bq_ref,                  # (C, C) pre-scaled, (C, 1)
                  wk_ref, bk_ref,                  # (C, C), (1, C)
                  wv_ref, bv_ref,                  # (C, C), (C, 1)
                  wo_ref, bo_ref,                  # (C, C) *2 folded, (C, 1)
                  w1_ref, b1_ref,                  # (F, C), (F, 1)
                  w2_ref, b2_ref,                  # (C, F) *2 folded, (C, 1)
                  g1c_ref, be1c_ref,               # (C, 1) norm1 (column form)
                  g1r_ref, be1r_ref,               # (1, C) norm1 (row form)
                  g2c_ref, be2c_ref,               # (C, 1) norm2
                  o_ref,                           # (1, C, Lq) channel-major output
                  *, nhead, eps):
    C = xlat_ref.shape[1]
    hd = C // nhead
    f32 = jnp.float32

    def mxu(x):
        return x.astype(MXU_DTYPE)

    # Channel-major query-side activations: (C, Lq) -> lanes = Lq (dense).
    x_q = xlat_ref[0].astype(f32)                              # (C, Lq)
    # Token-major key/value-side activations (tiny): (Lkv, C).
    x_kv = xtop_ref[0].astype(f32)                             # (Lkv, C)

    # ---- norm1 ----
    # q side: LayerNorm over the channel axis == sublane reduce.
    mu_q = jnp.mean(x_q, axis=0, keepdims=True)                # (1, Lq)
    var_q = jnp.mean((x_q - mu_q) ** 2, axis=0, keepdims=True)
    qn = (x_q - mu_q) * jax.lax.rsqrt(var_q + eps) * g1c_ref[...].astype(f32) \
         + be1c_ref[...].astype(f32)                           # (C, Lq)
    # kv side: token-major, LayerNorm over last axis == lane reduce.
    mu_k = jnp.mean(x_kv, axis=-1, keepdims=True)              # (Lkv, 1)
    var_k = jnp.mean((x_kv - mu_k) ** 2, axis=-1, keepdims=True)
    kn = (x_kv - mu_k) * jax.lax.rsqrt(var_k + eps) * g1r_ref[...].astype(f32) \
         + be1r_ref[...].astype(f32)                           # (Lkv, C)

    # ---- fused full-width projections (attention scale folded into wq/bq) ----
    # Q channel-major: (C, Lq)
    q = jnp.dot(mxu(wq_ref[...]), mxu(qn),
                preferred_element_type=f32) + bq_ref[...].astype(f32)
    # K token-major: (Lkv, C) = kn @ Wk^T        (NT form)
    kt = jax.lax.dot_general(mxu(kn), mxu(wk_ref[...]), _NT,
                             preferred_element_type=f32) + bk_ref[...].astype(f32)
    # V channel-major: (C, Lkv) = Wv @ kn^T      (NT form)
    v = jax.lax.dot_general(mxu(wv_ref[...]), mxu(kn), _NT,
                            preferred_element_type=f32) + bv_ref[...].astype(f32)

    # ---- multi-head attention: scores kept transposed (Lkv, Lq) so softmax
    #      slabs are fully lane-dense and only NN-form matmuls are needed. ----
    heads = []
    for h in range(nhead):
        lo, hi = h * hd, (h + 1) * hd
        q_h = q[lo:hi, :]                                      # (hd, Lq)   sublane slice
        kt_h = kt[:, lo:hi]                                    # (Lkv, hd)  lane slice
        v_h = v[lo:hi, :]                                      # (hd, Lkv)  sublane slice

        st = jnp.dot(mxu(kt_h), mxu(q_h),
                     preferred_element_type=f32)               # (Lkv, Lq) = scores^T
        m = jnp.max(st, axis=0, keepdims=True)                 # (1, Lq)  sublane reduce
        e = jnp.exp(st - m)                                    # lane-dense exp
        l = jnp.sum(e, axis=0, keepdims=True)                  # (1, Lq)
        p = e * pl.reciprocal(l, approx=True)                  # (Lkv, Lq)

        heads.append(jnp.dot(mxu(v_h), mxu(p),
                             preferred_element_type=f32))      # (hd, Lq) channel-major
    attn = jnp.concatenate(heads, axis=0)                      # (C, Lq)

    # out_proj; the "attn + dropout1(attn)" *2 factor is folded into wo/bo.
    x = jnp.dot(mxu(wo_ref[...]), mxu(attn),
                preferred_element_type=f32) + bo_ref[...].astype(f32)   # (C, Lq)

    # ---- norm2 + FFN (dropout2 residual *2 folded into w2/b2) ----
    mu2 = jnp.mean(x, axis=0, keepdims=True)
    var2 = jnp.mean((x - mu2) ** 2, axis=0, keepdims=True)
    x2 = (x - mu2) * jax.lax.rsqrt(var2 + eps) * g2c_ref[...].astype(f32) \
         + be2c_ref[...].astype(f32)                           # (C, Lq)

    h1 = jnp.dot(mxu(w1_ref[...]), mxu(x2),
                 preferred_element_type=f32) + b1_ref[...].astype(f32)  # (F, Lq)
    h1 = jnp.maximum(h1, 0.0)
    out = jnp.dot(mxu(w2_ref[...]), mxu(h1),
                  preferred_element_type=f32) + b2_ref[...].astype(f32) # (C, Lq)

    # Channel-major, lane-dense (Lq = 256) store; matches NCHW natively.
    o_ref[0] = out.astype(o_ref.dtype)


# ---------------------------------------------------------------------------
# Module forward (wrapper does only free reshapes, one tiny x_top transpose,
# and one-time scalar folding into weights).
# ---------------------------------------------------------------------------
def ground_trans_lite(params, x_top, x_lateral, nhead=4, training=False):
    if training:
        # TODO(synk): training-mode dropout (stateful RNG masks) is not implemented.
        raise NotImplementedError("ground_trans_lite kernel implements eval-mode only")

    B, C, H2, W2 = x_lateral.shape
    _, _, H, W = x_top.shape
    Lq, Lkv = H2 * W2, H * W
    assert C % nhead == 0
    hd = C // nhead
    scale = 1.0 / math.sqrt(hd)

    # Inputs: query side stays channel-major (free reshape of NCHW); key/value
    # side is transposed to token-major once in the wrapper (tiny tensor).
    x_lat_cm = x_lateral.reshape(B, C, Lq)
    x_top_tm = x_top.reshape(B, C, Lkv).transpose(0, 2, 1)

    # Parameter prep (one-time, outside the kernel): scale + dropout-fold.
    w_in, b_in = params["in_proj_w"], params["in_proj_b"]
    wq = w_in[:C] * scale
    bq = (b_in[:C] * scale).reshape(C, 1)
    wk = w_in[C:2 * C]
    bk = b_in[C:2 * C].reshape(1, C)
    wv = w_in[2 * C:]
    bv = b_in[2 * C:].reshape(C, 1)
    wo = 2.0 * params["out_proj_w"]
    bo = 2.0 * params["out_proj_b"].reshape(C, 1)
    w1 = params["lin1_w"]
    F_ = w1.shape[0]
    b1 = params["lin1_b"].reshape(F_, 1)
    w2 = 2.0 * params["lin2_w"]
    b2 = 2.0 * params["lin2_b"].reshape(C, 1)
    g1c = params["norm1_g"].reshape(C, 1)
    be1c = params["norm1_b"].reshape(C, 1)
    g1r = params["norm1_g"].reshape(1, C)
    be1r = params["norm1_b"].reshape(1, C)
    g2c = params["norm2_g"].reshape(C, 1)
    be2c = params["norm2_b"].reshape(C, 1)

    kern = functools.partial(_fused_kernel, nhead=nhead, eps=1e-5)

    def w_spec(shape):
        return pl.BlockSpec(shape, lambda b: (0, 0))

    # TODO(synk): for production H*W / C, tile the Lq (lane) axis and set
    # vmem_limit_bytes against v7x's 64 MiB VMEM; whole-slab blocks fit here.
    out_cm = pl.pallas_call(
        kern,
        out_shape=jax.ShapeDtypeStruct((B, C, Lq), x_lateral.dtype),
        grid=(B,),
        in_specs=[
            pl.BlockSpec((1, C, Lq), lambda b: (b, 0, 0)),    # x_lateral (channel-major)
            pl.BlockSpec((1, Lkv, C), lambda b: (b, 0, 0)),   # x_top (token-major)
            w_spec((C, C)), w_spec((C, 1)),                   # Wq*scale, bq*scale
            w_spec((C, C)), w_spec((1, C)),                   # Wk, bk
            w_spec((C, C)), w_spec((C, 1)),                   # Wv, bv
            w_spec((C, C)), w_spec((C, 1)),                   # 2*Wo, 2*bo
            w_spec((F_, C)), w_spec((F_, 1)),                 # W1, b1
            w_spec((C, F_)), w_spec((C, 1)),                  # 2*W2, 2*b2
            w_spec((C, 1)), w_spec((C, 1)),                   # norm1 gamma/beta (col)
            w_spec((1, C)), w_spec((1, C)),                   # norm1 gamma/beta (row)
            w_spec((C, 1)), w_spec((C, 1)),                   # norm2 gamma/beta (col)
        ],
        out_specs=pl.BlockSpec((1, C, Lq), lambda b: (b, 0, 0)),
        compiler_params=pltpu.CompilerParams(dimension_semantics=("parallel",)),
    )(x_lat_cm, x_top_tm, wq, bq, wk, bk, wv, bv, wo, bo,
      w1, b1, w2, b2, g1c, be1c, g1r, be1r, g2c, be2c)

    # Already channel-major -> free reshape back to NCHW.
    return out_cm.reshape(B, C, H2, W2)


# ---------------------------------------------------------------------------
# Pure-JAX reference (same eval-mode semantics) for sanity checking
# ---------------------------------------------------------------------------
def _ref_forward(params, x_top, x_lateral, nhead=4):
    B, C, H2, W2 = x_lateral.shape
    Lq = H2 * W2
    Lkv = x_top.shape[2] * x_top.shape[3]
    hd = C // nhead
    scale = 1.0 / math.sqrt(hd)

    def ln(x, g, b):
        mu = x.mean(-1, keepdims=True)
        var = ((x - mu) ** 2).mean(-1, keepdims=True)
        return (x - mu) / jnp.sqrt(var + 1e-5) * g + b

    qs = x_lateral.reshape(B, C, Lq).transpose(0, 2, 1)
    ks = x_top.reshape(B, C, Lkv).transpose(0, 2, 1)
    qn = ln(qs, params["norm1_g"], params["norm1_b"])
    kn = ln(ks, params["norm1_g"], params["norm1_b"])
    wq, wk, wv = jnp.split(params["in_proj_w"], 3, axis=0)
    bq, bk, bv = jnp.split(params["in_proj_b"], 3, axis=0)
    q = qn @ wq.T + bq
    k = kn @ wk.T + bk
    v = kn @ wv.T + bv
    qh = q.reshape(B, Lq, nhead, hd).transpose(0, 2, 1, 3)
    kh = k.reshape(B, Lkv, nhead, hd).transpose(0, 2, 1, 3)
    vh = v.reshape(B, Lkv, nhead, hd).transpose(0, 2, 1, 3)
    s = jnp.einsum("bhqd,bhkd->bhqk", qh * scale, kh)
    p = jax.nn.softmax(s, axis=-1)
    a = jnp.einsum("bhqk,bhkd->bhqd", p, vh).transpose(0, 2, 1, 3).reshape(B, Lq, C)
    x = 2.0 * (a @ params["out_proj_w"].T + params["out_proj_b"])
    x2 = ln(x, params["norm2_g"], params["norm2_b"])
    h1 = jnp.maximum(x2 @ params["lin1_w"].T + params["lin1_b"], 0.0)
    out = 2.0 * (h1 @ params["lin2_w"].T + params["lin2_b"])
    return out.transpose(0, 2, 1).reshape(B, C, H2, W2)


# ---------------------------------------------------------------------------
# Main
# ---------------------------------------------------------------------------
if __name__ == "__main__":
    B, C, H, W = 2, 32, 8, 8          # d_model = C = 32, nhead = 4
    dim_ff = 64
    nhead = 4

    key = jax.random.PRNGKey(0)
    ks = jax.random.split(key, 14)

    params = {
        "in_proj_w":  0.1 * jax.random.normal(ks[0], (3 * C, C), jnp.float32),
        "in_proj_b":  0.05 * jax.random.normal(ks[1], (3 * C,), jnp.float32),
        "out_proj_w": 0.1 * jax.random.normal(ks[2], (C, C), jnp.float32),
        "out_proj_b": 0.05 * jax.random.normal(ks[3], (C,), jnp.float32),
        "lin1_w":     0.1 * jax.random.normal(ks[4], (dim_ff, C), jnp.float32),
        "lin1_b":     0.05 * jax.random.normal(ks[5], (dim_ff,), jnp.float32),
        "lin2_w":     0.1 * jax.random.normal(ks[6], (C, dim_ff), jnp.float32),
        "lin2_b":     0.05 * jax.random.normal(ks[7], (C,), jnp.float32),
        "norm1_g":    1.0 + 0.05 * jax.random.normal(ks[8], (C,), jnp.float32),
        "norm1_b":    0.05 * jax.random.normal(ks[9], (C,), jnp.float32),
        "norm2_g":    1.0 + 0.05 * jax.random.normal(ks[10], (C,), jnp.float32),
        "norm2_b":    0.05 * jax.random.normal(ks[11], (C,), jnp.float32),
    }

    x_top = jax.random.normal(ks[12], (B, C, H, W), jnp.float32)
    x_lateral = jax.random.normal(ks[13], (B, C, 2 * H, 2 * W), jnp.float32)

    fwd = jax.jit(functools.partial(ground_trans_lite, nhead=nhead))
    out = fwd(params, x_top, x_lateral)
    out = jax.block_until_ready(out)

    ref = _ref_forward(params, x_top, x_lateral, nhead=nhead)
    assert out.shape == (B, C, 2 * H, 2 * W)
    # Only intentional numerics deviation: pl.reciprocal(approx=True) in softmax.
    assert jnp.max(jnp.abs(out - ref)) < 2e-2, "mismatch vs reference"

    print("KERNEL_OK")
</pallas_src>

<mosaic_0001>
module attributes {stable_mosaic.version = 11 : i64} {
  func.func @_fused_kernel(%arg0: i32, %arg1: memref<1x32x256xf32, #tpu.memory_space<vmem>>, %arg2: memref<1x64x32xf32, #tpu.memory_space<vmem>>, %arg3: memref<32x32xf32, #tpu.memory_space<vmem>>, %arg4: memref<32x1xf32, #tpu.memory_space<vmem>>, %arg5: memref<32x32xf32, #tpu.memory_space<vmem>>, %arg6: memref<1x32xf32, #tpu.memory_space<vmem>>, %arg7: memref<32x32xf32, #tpu.memory_space<vmem>>, %arg8: memref<32x1xf32, #tpu.memory_space<vmem>>, %arg9: memref<32x32xf32, #tpu.memory_space<vmem>>, %arg10: memref<32x1xf32, #tpu.memory_space<vmem>>, %arg11: memref<64x32xf32, #tpu.memory_space<vmem>>, %arg12: memref<64x1xf32, #tpu.memory_space<vmem>>, %arg13: memref<32x64xf32, #tpu.memory_space<vmem>>, %arg14: memref<32x1xf32, #tpu.memory_space<vmem>>, %arg15: memref<32x1xf32, #tpu.memory_space<vmem>>, %arg16: memref<32x1xf32, #tpu.memory_space<vmem>>, %arg17: memref<1x32xf32, #tpu.memory_space<vmem>>, %arg18: memref<1x32xf32, #tpu.memory_space<vmem>>, %arg19: memref<32x1xf32, #tpu.memory_space<vmem>>, %arg20: memref<32x1xf32, #tpu.memory_space<vmem>>, %arg21: memref<1x32x256xf32, #tpu.memory_space<vmem>>) attributes {dimension_semantics = [#tpu.dimension_semantics<parallel>], iteration_bounds = array<i64: 2>, scalar_prefetch = 0 : i64, scratch_operands = 0 : i64, tpu.core_type = #tpu.core_type<tc>, window_params = [{transform_indices = @transform_0, window_bounds = array<i64: 1, 32, 256>}, {transform_indices = @transform_1, window_bounds = array<i64: 1, 64, 32>}, {pipeline_mode = #tpu.pipeline_mode<synchronous>, transform_indices = @transform_2, window_bounds = array<i64: 32, 32>}, {pipeline_mode = #tpu.pipeline_mode<synchronous>, transform_indices = @transform_3, window_bounds = array<i64: 32, 1>}, {pipeline_mode = #tpu.pipeline_mode<synchronous>, transform_indices = @transform_4, window_bounds = array<i64: 32, 32>}, {pipeline_mode = #tpu.pipeline_mode<synchronous>, transform_indices = @transform_5, window_bounds = array<i64: 1, 32>}, {pipeline_mode = #tpu.pipeline_mode<synchronous>, transform_indices = @transform_6, window_bounds = array<i64: 32, 32>}, {pipeline_mode = #tpu.pipeline_mode<synchronous>, transform_indices = @transform_7, window_bounds = array<i64: 32, 1>}, {pipeline_mode = #tpu.pipeline_mode<synchronous>, transform_indices = @transform_8, window_bounds = array<i64: 32, 32>}, {pipeline_mode = #tpu.pipeline_mode<synchronous>, transform_indices = @transform_9, window_bounds = array<i64: 32, 1>}, {pipeline_mode = #tpu.pipeline_mode<synchronous>, transform_indices = @transform_10, window_bounds = array<i64: 64, 32>}, {pipeline_mode = #tpu.pipeline_mode<synchronous>, transform_indices = @transform_11, window_bounds = array<i64: 64, 1>}, {pipeline_mode = #tpu.pipeline_mode<synchronous>, transform_indices = @transform_12, window_bounds = array<i64: 32, 64>}, {pipeline_mode = #tpu.pipeline_mode<synchronous>, transform_indices = @transform_13, window_bounds = array<i64: 32, 1>}, {pipeline_mode = #tpu.pipeline_mode<synchronous>, transform_indices = @transform_14, window_bounds = array<i64: 32, 1>}, {pipeline_mode = #tpu.pipeline_mode<synchronous>, transform_indices = @transform_15, window_bounds = array<i64: 32, 1>}, {pipeline_mode = #tpu.pipeline_mode<synchronous>, transform_indices = @transform_16, window_bounds = array<i64: 1, 32>}, {pipeline_mode = #tpu.pipeline_mode<synchronous>, transform_indices = @transform_17, window_bounds = array<i64: 1, 32>}, {pipeline_mode = #tpu.pipeline_mode<synchronous>, transform_indices = @transform_18, window_bounds = array<i64: 32, 1>}, {pipeline_mode = #tpu.pipeline_mode<synchronous>, transform_indices = @transform_19, window_bounds = array<i64: 32, 1>}, {transform_indices = @transform_20, window_bounds = array<i64: 1, 32, 256>}]} {
    %c0 = arith.constant 0 : index
    %c0_0 = arith.constant 0 : index
    %c0_1 = arith.constant 0 : index
    %0 = vector.load %arg1[%c0, %c0_0, %c0_1] : memref<1x32x256xf32, #tpu.memory_space<vmem>>, vector<1x32x256xf32>
    %1 = vector.shape_cast %0 : vector<1x32x256xf32> to vector<32x256xf32>
    %c0_2 = arith.constant 0 : index
    %c0_3 = arith.constant 0 : index
    %c0_4 = arith.constant 0 : index
    %2 = vector.load %arg2[%c0_2, %c0_3, %c0_4] : memref<1x64x32xf32, #tpu.memory_space<vmem>>, vector<1x64x32xf32>
    %3 = vector.shape_cast %2 : vector<1x64x32xf32> to vector<64x32xf32>
    %cst = arith.constant dense<0.000000e+00> : vector<256xf32>
    %4 = vector.multi_reduction <add>, %1, %cst [0] : vector<32x256xf32> to vector<256xf32>
    %5 = vector.shape_cast %4 : vector<256xf32> to vector<1x256xf32>
    %cst_5 = arith.constant 3.200000e+01 : f32
    %6 = vector.broadcast %cst_5 : f32 to vector<1x256xf32>
    %7 = arith.divf %5, %6 : vector<1x256xf32>
    %8 = vector.broadcast %7 : vector<1x256xf32> to vector<32x256xf32>
    %9 = arith.subf %1, %8 : vector<32x256xf32>
    %10 = arith.mulf %9, %9 : vector<32x256xf32>
    %cst_6 = arith.constant dense<0.000000e+00> : vector<256xf32>
    %11 = vector.multi_reduction <add>, %10, %cst_6 [0] : vector<32x256xf32> to vector<256xf32>
    %12 = vector.shape_cast %11 : vector<256xf32> to vector<1x256xf32>
    %cst_7 = arith.constant 3.200000e+01 : f32
    %13 = vector.broadcast %cst_7 : f32 to vector<1x256xf32>
    %14 = arith.divf %12, %13 : vector<1x256xf32>
    %15 = vector.broadcast %7 : vector<1x256xf32> to vector<32x256xf32>
    %16 = arith.subf %1, %15 : vector<32x256xf32>
    %cst_8 = arith.constant 9.99999974E-6 : f32
    %17 = vector.broadcast %cst_8 : f32 to vector<1x256xf32>
    %18 = arith.addf %14, %17 : vector<1x256xf32>
    %19 = math.rsqrt %18 : vector<1x256xf32>
    %20 = vector.broadcast %19 : vector<1x256xf32> to vector<32x256xf32>
    %21 = arith.mulf %16, %20 : vector<32x256xf32>
    %c0_9 = arith.constant 0 : index
    %c0_10 = arith.constant 0 : index
    %22 = vector.load %arg15[%c0_9, %c0_10] : memref<32x1xf32, #tpu.memory_space<vmem>>, vector<32x1xf32>
    %23 = vector.broadcast %22 : vector<32x1xf32> to vector<32x256xf32>
    %24 = arith.mulf %21, %23 : vector<32x256xf32>
    %c0_11 = arith.constant 0 : index
    %c0_12 = arith.constant 0 : index
    %25 = vector.load %arg16[%c0_11, %c0_12] : memref<32x1xf32, #tpu.memory_space<vmem>>, vector<32x1xf32>
    %26 = vector.broadcast %25 : vector<32x1xf32> to vector<32x256xf32>
    %27 = arith.addf %24, %26 : vector<32x256xf32>
    %cst_13 = arith.constant dense<0.000000e+00> : vector<64xf32>
    %28 = vector.multi_reduction <add>, %3, %cst_13 [1] : vector<64x32xf32> to vector<64xf32>
    %29 = vector.shape_cast %28 : vector<64xf32> to vector<64x1xf32>
    %cst_14 = arith.constant 3.200000e+01 : f32
    %30 = vector.broadcast %cst_14 : f32 to vector<64x1xf32>
    %31 = arith.divf %29, %30 : vector<64x1xf32>
    %32 = vector.broadcast %31 : vector<64x1xf32> to vector<64x32xf32>
    %33 = arith.subf %3, %32 : vector<64x32xf32>
    %34 = arith.mulf %33, %33 : vector<64x32xf32>
    %cst_15 = arith.constant dense<0.000000e+00> : vector<64xf32>
    %35 = vector.multi_reduction <add>, %34, %cst_15 [1] : vector<64x32xf32> to vector<64xf32>
    %36 = vector.shape_cast %35 : vector<64xf32> to vector<64x1xf32>
    %cst_16 = arith.constant 3.200000e+01 : f32
    %37 = vector.broadcast %cst_16 : f32 to vector<64x1xf32>
    %38 = arith.divf %36, %37 : vector<64x1xf32>
    %39 = vector.broadcast %31 : vector<64x1xf32> to vector<64x32xf32>
    %40 = arith.subf %3, %39 : vector<64x32xf32>
    %cst_17 = arith.constant 9.99999974E-6 : f32
    %41 = vector.broadcast %cst_17 : f32 to vector<64x1xf32>
    %42 = arith.addf %38, %41 : vector<64x1xf32>
    %43 = math.rsqrt %42 : vector<64x1xf32>
    %44 = vector.broadcast %43 : vector<64x1xf32> to vector<64x32xf32>
    %45 = arith.mulf %40, %44 : vector<64x32xf32>
    %c0_18 = arith.constant 0 : index
    %c0_19 = arith.constant 0 : index
    %46 = vector.load %arg17[%c0_18, %c0_19] : memref<1x32xf32, #tpu.memory_space<vmem>>, vector<1x32xf32>
    %47 = vector.broadcast %46 : vector<1x32xf32> to vector<64x32xf32>
    %48 = arith.mulf %45, %47 : vector<64x32xf32>
    %c0_20 = arith.constant 0 : index
    %c0_21 = arith.constant 0 : index
    %49 = vector.load %arg18[%c0_20, %c0_21] : memref<1x32xf32, #tpu.memory_space<vmem>>, vector<1x32xf32>
    %50 = vector.broadcast %49 : vector<1x32xf32> to vector<64x32xf32>
    %51 = arith.addf %48, %50 : vector<64x32xf32>
    %c0_22 = arith.constant 0 : index
    %c0_23 = arith.constant 0 : index
    %52 = vector.load %arg3[%c0_22, %c0_23] : memref<32x32xf32, #tpu.memory_space<vmem>>, vector<32x32xf32>
    %cst_24 = arith.constant dense<0.000000e+00> : vector<32x256xf32>
    %53 = tpu.matmul %52, %27, %cst_24 {dimension_numbers = #tpu.dot_dimension_numbers<[1], [0], [0], [1], [0, 0, 1, 1], [], []>} : vector<32x32xf32>, vector<32x256xf32>, vector<32x256xf32> -> vector<32x256xf32>
    %c0_25 = arith.constant 0 : index
    %c0_26 = arith.constant 0 : index
    %54 = vector.load %arg4[%c0_25, %c0_26] : memref<32x1xf32, #tpu.memory_space<vmem>>, vector<32x1xf32>
    %55 = vector.broadcast %54 : vector<32x1xf32> to vector<32x256xf32>
    %56 = arith.addf %53, %55 : vector<32x256xf32>
    %c0_27 = arith.constant 0 : index
    %c0_28 = arith.constant 0 : index
    %57 = vector.load %arg5[%c0_27, %c0_28] : memref<32x32xf32, #tpu.memory_space<vmem>>, vector<32x32xf32>
    %cst_29 = arith.constant dense<0.000000e+00> : vector<64x32xf32>
    %58 = tpu.matmul %51, %57, %cst_29 {dimension_numbers = #tpu.dot_dimension_numbers<[1], [1], [0], [0], [0, 0, 1, 0], [], []>} : vector<64x32xf32>, vector<32x32xf32>, vector<64x32xf32> -> vector<64x32xf32>
    %c0_30 = arith.constant 0 : index
    %c0_31 = arith.constant 0 : index
    %59 = vector.load %arg6[%c0_30, %c0_31] : memref<1x32xf32, #tpu.memory_space<vmem>>, vector<1x32xf32>
    %60 = vector.broadcast %59 : vector<1x32xf32> to vector<64x32xf32>
    %61 = arith.addf %58, %60 : vector<64x32xf32>
    %c0_32 = arith.constant 0 : index
    %c0_33 = arith.constant 0 : index
    %62 = vector.load %arg7[%c0_32, %c0_33] : memref<32x32xf32, #tpu.memory_space<vmem>>, vector<32x32xf32>
    %cst_34 = arith.constant dense<0.000000e+00> : vector<32x64xf32>
    %63 = tpu.matmul %62, %51, %cst_34 {dimension_numbers = #tpu.dot_dimension_numbers<[1], [1], [0], [0], [0, 0, 1, 0], [], []>} : vector<32x32xf32>, vector<64x32xf32>, vector<32x64xf32> -> vector<32x64xf32>
    %c0_35 = arith.constant 0 : index
    %c0_36 = arith.constant 0 : index
    %64 = vector.load %arg8[%c0_35, %c0_36] : memref<32x1xf32, #tpu.memory_space<vmem>>, vector<32x1xf32>
    %65 = vector.broadcast %64 : vector<32x1xf32> to vector<32x64xf32>
    %66 = arith.addf %63, %65 : vector<32x64xf32>
    %67 = vector.extract_strided_slice %56 {offsets = [0, 0], sizes = [8, 256], strides = [1, 1]} : vector<32x256xf32> to vector<8x256xf32>
    %68 = vector.extract_strided_slice %61 {offsets = [0, 0], sizes = [64, 8], strides = [1, 1]} : vector<64x32xf32> to vector<64x8xf32>
    %69 = vector.extract_strided_slice %66 {offsets = [0, 0], sizes = [8, 64], strides = [1, 1]} : vector<32x64xf32> to vector<8x64xf32>
    %cst_37 = arith.constant dense<0.000000e+00> : vector<64x256xf32>
    %70 = tpu.matmul %68, %67, %cst_37 {dimension_numbers = #tpu.dot_dimension_numbers<[1], [0], [0], [1], [0, 0, 1, 1], [], []>} : vector<64x8xf32>, vector<8x256xf32>, vector<64x256xf32> -> vector<64x256xf32>
    %cst_38 = arith.constant dense<0xFF800000> : vector<256xf32>
    %71 = vector.multi_reduction <maximumf>, %70, %cst_38 [0] : vector<64x256xf32> to vector<256xf32>
    %72 = vector.shape_cast %71 : vector<256xf32> to vector<1x256xf32>
    %73 = vector.broadcast %72 : vector<1x256xf32> to vector<64x256xf32>
    %74 = arith.subf %70, %73 : vector<64x256xf32>
    %75 = math.exp %74 : vector<64x256xf32>
    %cst_39 = arith.constant dense<0.000000e+00> : vector<256xf32>
    %76 = vector.multi_reduction <add>, %75, %cst_39 [0] : vector<64x256xf32> to vector<256xf32>
    %77 = vector.shape_cast %76 : vector<256xf32> to vector<1x256xf32>
    %78 = tpu.reciprocal %77 {approx = true} : vector<1x256xf32> -> vector<1x256xf32>
    %79 = vector.broadcast %78 : vector<1x256xf32> to vector<64x256xf32>
    %80 = arith.mulf %75, %79 : vector<64x256xf32>
    %cst_40 = arith.constant dense<0.000000e+00> : vector<8x256xf32>
    %81 = tpu.matmul %69, %80, %cst_40 {dimension_numbers = #tpu.dot_dimension_numbers<[1], [0], [0], [1], [0, 0, 1, 1], [], []>} : vector<8x64xf32>, vector<64x256xf32>, vector<8x256xf32> -> vector<8x256xf32>
    %82 = vector.extract_strided_slice %56 {offsets = [8, 0], sizes = [8, 256], strides = [1, 1]} : vector<32x256xf32> to vector<8x256xf32>
    %83 = vector.extract_strided_slice %61 {offsets = [0, 8], sizes = [64, 8], strides = [1, 1]} : vector<64x32xf32> to vector<64x8xf32>
    %84 = vector.extract_strided_slice %66 {offsets = [8, 0], sizes = [8, 64], strides = [1, 1]} : vector<32x64xf32> to vector<8x64xf32>
    %cst_41 = arith.constant dense<0.000000e+00> : vector<64x256xf32>
    %85 = tpu.matmul %83, %82, %cst_41 {dimension_numbers = #tpu.dot_dimension_numbers<[1], [0], [0], [1], [0, 0, 1, 1], [], []>} : vector<64x8xf32>, vector<8x256xf32>, vector<64x256xf32> -> vector<64x256xf32>
    %cst_42 = arith.constant dense<0xFF800000> : vector<256xf32>
    %86 = vector.multi_reduction <maximumf>, %85, %cst_42 [0] : vector<64x256xf32> to vector<256xf32>
    %87 = vector.shape_cast %86 : vector<256xf32> to vector<1x256xf32>
    %88 = vector.broadcast %87 : vector<1x256xf32> to vector<64x256xf32>
    %89 = arith.subf %85, %88 : vector<64x256xf32>
    %90 = math.exp %89 : vector<64x256xf32>
    %cst_43 = arith.constant dense<0.000000e+00> : vector<256xf32>
    %91 = vector.multi_reduction <add>, %90, %cst_43 [0] : vector<64x256xf32> to vector<256xf32>
    %92 = vector.shape_cast %91 : vector<256xf32> to vector<1x256xf32>
    %93 = tpu.reciprocal %92 {approx = true} : vector<1x256xf32> -> vector<1x256xf32>
    %94 = vector.broadcast %93 : vector<1x256xf32> to vector<64x256xf32>
    %95 = arith.mulf %90, %94 : vector<64x256xf32>
    %cst_44 = arith.constant dense<0.000000e+00> : vector<8x256xf32>
    %96 = tpu.matmul %84, %95, %cst_44 {dimension_numbers = #tpu.dot_dimension_numbers<[1], [0], [0], [1], [0, 0, 1, 1], [], []>} : vector<8x64xf32>, vector<64x256xf32>, vector<8x256xf32> -> vector<8x256xf32>
    %97 = vector.extract_strided_slice %56 {offsets = [16, 0], sizes = [8, 256], strides = [1, 1]} : vector<32x256xf32> to vector<8x256xf32>
    %98 = vector.extract_strided_slice %61 {offsets = [0, 16], sizes = [64, 8], strides = [1, 1]} : vector<64x32xf32> to vector<64x8xf32>
    %99 = vector.extract_strided_slice %66 {offsets = [16, 0], sizes = [8, 64], strides = [1, 1]} : vector<32x64xf32> to vector<8x64xf32>
    %cst_45 = arith.constant dense<0.000000e+00> : vector<64x256xf32>
    %100 = tpu.matmul %98, %97, %cst_45 {dimension_numbers = #tpu.dot_dimension_numbers<[1], [0], [0], [1], [0, 0, 1, 1], [], []>} : vector<64x8xf32>, vector<8x256xf32>, vector<64x256xf32> -> vector<64x256xf32>
    %cst_46 = arith.constant dense<0xFF800000> : vector<256xf32>
    %101 = vector.multi_reduction <maximumf>, %100, %cst_46 [0] : vector<64x256xf32> to vector<256xf32>
    %102 = vector.shape_cast %101 : vector<256xf32> to vector<1x256xf32>
    %103 = vector.broadcast %102 : vector<1x256xf32> to vector<64x256xf32>
    %104 = arith.subf %100, %103 : vector<64x256xf32>
    %105 = math.exp %104 : vector<64x256xf32>
    %cst_47 = arith.constant dense<0.000000e+00> : vector<256xf32>
    %106 = vector.multi_reduction <add>, %105, %cst_47 [0] : vector<64x256xf32> to vector<256xf32>
    %107 = vector.shape_cast %106 : vector<256xf32> to vector<1x256xf32>
    %108 = tpu.reciprocal %107 {approx = true} : vector<1x256xf32> -> vector<1x256xf32>
    %109 = vector.broadcast %108 : vector<1x256xf32> to vector<64x256xf32>
    %110 = arith.mulf %105, %109 : vector<64x256xf32>
    %cst_48 = arith.constant dense<0.000000e+00> : vector<8x256xf32>
    %111 = tpu.matmul %99, %110, %cst_48 {dimension_numbers = #tpu.dot_dimension_numbers<[1], [0], [0], [1], [0, 0, 1, 1], [], []>} : vector<8x64xf32>, vector<64x256xf32>, vector<8x256xf32> -> vector<8x256xf32>
    %112 = vector.extract_strided_slice %56 {offsets = [24, 0], sizes = [8, 256], strides = [1, 1]} : vector<32x256xf32> to vector<8x256xf32>
    %113 = vector.extract_strided_slice %61 {offsets = [0, 24], sizes = [64, 8], strides = [1, 1]} : vector<64x32xf32> to vector<64x8xf32>
    %114 = vector.extract_strided_slice %66 {offsets = [24, 0], sizes = [8, 64], strides = [1, 1]} : vector<32x64xf32> to vector<8x64xf32>
    %cst_49 = arith.constant dense<0.000000e+00> : vector<64x256xf32>
    %115 = tpu.matmul %113, %112, %cst_49 {dimension_numbers = #tpu.dot_dimension_numbers<[1], [0], [0], [1], [0, 0, 1, 1], [], []>} : vector<64x8xf32>, vector<8x256xf32>, vector<64x256xf32> -> vector<64x256xf32>
    %cst_50 = arith.constant dense<0xFF800000> : vector<256xf32>
    %116 = vector.multi_reduction <maximumf>, %115, %cst_50 [0] : vector<64x256xf32> to vector<256xf32>
    %117 = vector.shape_cast %116 : vector<256xf32> to vector<1x256xf32>
    %118 = vector.broadcast %117 : vector<1x256xf32> to vector<64x256xf32>
    %119 = arith.subf %115, %118 : vector<64x256xf32>
    %120 = math.exp %119 : vector<64x256xf32>
    %cst_51 = arith.constant dense<0.000000e+00> : vector<256xf32>
    %121 = vector.multi_reduction <add>, %120, %cst_51 [0] : vector<64x256xf32> to vector<256xf32>
    %122 = vector.shape_cast %121 : vector<256xf32> to vector<1x256xf32>
    %123 = tpu.reciprocal %122 {approx = true} : vector<1x256xf32> -> vector<1x256xf32>
    %124 = vector.broadcast %123 : vector<1x256xf32> to vector<64x256xf32>
    %125 = arith.mulf %120, %124 : vector<64x256xf32>
    %cst_52 = arith.constant dense<0.000000e+00> : vector<8x256xf32>
    %126 = tpu.matmul %114, %125, %cst_52 {dimension_numbers = #tpu.dot_dimension_numbers<[1], [0], [0], [1], [0, 0, 1, 1], [], []>} : vector<8x64xf32>, vector<64x256xf32>, vector<8x256xf32> -> vector<8x256xf32>
    %127 = tpu.concatenate %81, %96, %111, %126 in 0 : vector<8x256xf32>, vector<8x256xf32>, vector<8x256xf32>, vector<8x256xf32> -> vector<32x256xf32>
    %c0_53 = arith.constant 0 : index
    %c0_54 = arith.constant 0 : index
    %128 = vector.load %arg9[%c0_53, %c0_54] : memref<32x32xf32, #tpu.memory_space<vmem>>, vector<32x32xf32>
    %cst_55 = arith.constant dense<0.000000e+00> : vector<32x256xf32>
    %129 = tpu.matmul %128, %127, %cst_55 {dimension_numbers = #tpu.dot_dimension_numbers<[1], [0], [0], [1], [0, 0, 1, 1], [], []>} : vector<32x32xf32>, vector<32x256xf32>, vector<32x256xf32> -> vector<32x256xf32>
    %c0_56 = arith.constant 0 : index
    %c0_57 = arith.constant 0 : index
    %130 = vector.load %arg10[%c0_56, %c0_57] : memref<32x1xf32, #tpu.memory_space<vmem>>, vector<32x1xf32>
    %131 = vector.broadcast %130 : vector<32x1xf32> to vector<32x256xf32>
    %132 = arith.addf %129, %131 : vector<32x256xf32>
    %cst_58 = arith.constant dense<0.000000e+00> : vector<256xf32>
    %133 = vector.multi_reduction <add>, %132, %cst_58 [0] : vector<32x256xf32> to vector<256xf32>
    %134 = vector.shape_cast %133 : vector<256xf32> to vector<1x256xf32>
    %cst_59 = arith.constant 3.200000e+01 : f32
    %135 = vector.broadcast %cst_59 : f32 to vector<1x256xf32>
    %136 = arith.divf %134, %135 : vector<1x256xf32>
    %137 = vector.broadcast %136 : vector<1x256xf32> to vector<32x256xf32>
    %138 = arith.subf %132, %137 : vector<32x256xf32>
    %139 = arith.mulf %138, %138 : vector<32x256xf32>
    %cst_60 = arith.constant dense<0.000000e+00> : vector<256xf32>
    %140 = vector.multi_reduction <add>, %139, %cst_60 [0] : vector<32x256xf32> to vector<256xf32>
    %141 = vector.shape_cast %140 : vector<256xf32> to vector<1x256xf32>
    %cst_61 = arith.constant 3.200000e+01 : f32
    %142 = vector.broadcast %cst_61 : f32 to vector<1x256xf32>
    %143 = arith.divf %141, %142 : vector<1x256xf32>
    %144 = vector.broadcast %136 : vector<1x256xf32> to vector<32x256xf32>
    %145 = arith.subf %132, %144 : vector<32x256xf32>
    %cst_62 = arith.constant 9.99999974E-6 : f32
    %146 = vector.broadcast %cst_62 : f32 to vector<1x256xf32>
    %147 = arith.addf %143, %146 : vector<1x256xf32>
    %148 = math.rsqrt %147 : vector<1x256xf32>
    %149 = vector.broadcast %148 : vector<1x256xf32> to vector<32x256xf32>
    %150 = arith.mulf %145, %149 : vector<32x256xf32>
    %c0_63 = arith.constant 0 : index
    %c0_64 = arith.constant 0 : index
    %151 = vector.load %arg19[%c0_63, %c0_64] : memref<32x1xf32, #tpu.memory_space<vmem>>, vector<32x1xf32>
    %152 = vector.broadcast %151 : vector<32x1xf32> to vector<32x256xf32>
    %153 = arith.mulf %150, %152 : vector<32x256xf32>
    %c0_65 = arith.constant 0 : index
    %c0_66 = arith.constant 0 : index
    %154 = vector.load %arg20[%c0_65, %c0_66] : memref<32x1xf32, #tpu.memory_space<vmem>>, vector<32x1xf32>
    %155 = vector.broadcast %154 : vector<32x1xf32> to vector<32x256xf32>
    %156 = arith.addf %153, %155 : vector<32x256xf32>
    %c0_67 = arith.constant 0 : index
    %c0_68 = arith.constant 0 : index
    %157 = vector.load %arg11[%c0_67, %c0_68] : memref<64x32xf32, #tpu.memory_space<vmem>>, vector<64x32xf32>
    %cst_69 = arith.constant dense<0.000000e+00> : vector<64x256xf32>
    %158 = tpu.matmul %157, %156, %cst_69 {dimension_numbers = #tpu.dot_dimension_numbers<[1], [0], [0], [1], [0, 0, 1, 1], [], []>} : vector<64x32xf32>, vector<32x256xf32>, vector<64x256xf32> -> vector<64x256xf32>
    %c0_70 = arith.constant 0 : index
    %c0_71 = arith.constant 0 : index
    %159 = vector.load %arg12[%c0_70, %c0_71] : memref<64x1xf32, #tpu.memory_space<vmem>>, vector<64x1xf32>
    %160 = vector.broadcast %159 : vector<64x1xf32> to vector<64x256xf32>
    %161 = arith.addf %158, %160 : vector<64x256xf32>
    %cst_72 = arith.constant 0.000000e+00 : f32
    %162 = vector.broadcast %cst_72 : f32 to vector<64x256xf32>
    %163 = arith.maximumf %161, %162 : vector<64x256xf32>
    %c0_73 = arith.constant 0 : index
    %c0_74 = arith.constant 0 : index
    %164 = vector.load %arg13[%c0_73, %c0_74] : memref<32x64xf32, #tpu.memory_space<vmem>>, vector<32x64xf32>
    %cst_75 = arith.constant dense<0.000000e+00> : vector<32x256xf32>
    %165 = tpu.matmul %164, %163, %cst_75 {dimension_numbers = #tpu.dot_dimension_numbers<[1], [0], [0], [1], [0, 0, 1, 1], [], []>} : vector<32x64xf32>, vector<64x256xf32>, vector<32x256xf32> -> vector<32x256xf32>
    %c0_76 = arith.constant 0 : index
    %c0_77 = arith.constant 0 : index
    %166 = vector.load %arg14[%c0_76, %c0_77] : memref<32x1xf32, #tpu.memory_space<vmem>>, vector<32x1xf32>
    %167 = vector.broadcast %166 : vector<32x1xf32> to vector<32x256xf32>
    %168 = arith.addf %165, %167 : vector<32x256xf32>
    %c0_78 = arith.constant 0 : index
    %c0_79 = arith.constant 0 : index
    %c0_80 = arith.constant 0 : index
    %169 = vector.load %arg21[%c0_78, %c0_79, %c0_80] : memref<1x32x256xf32, #tpu.memory_space<vmem>>, vector<1x32x256xf32>
    %170 = vector.shape_cast %169 : vector<1x32x256xf32> to vector<32x256xf32>
    %171 = vector.shape_cast %168 : vector<32x256xf32> to vector<1x32x256xf32>
    tpu.vector_store %arg21[%c0_78, %c0_79, %c0_80], %171 {strides = array<i32>} : memref<1x32x256xf32, #tpu.memory_space<vmem>>, vector<1x32x256xf32>,
    return
  }
  func.func @transform_0(%arg0: i32) -> (i32, i32, i32) {
    %c0_i32 = arith.constant 0 : i32
    %c0_i32_0 = arith.constant 0 : i32
    %c0_i32_1 = arith.constant 0 : i32
    return %arg0, %c0_i32, %c0_i32_0 : i32, i32, i32
  }
  func.func @transform_1(%arg0: i32) -> (i32, i32, i32) {
    %c0_i32 = arith.constant 0 : i32
    %c0_i32_0 = arith.constant 0 : i32
    %c0_i32_1 = arith.constant 0 : i32
    return %arg0, %c0_i32, %c0_i32_0 : i32, i32, i32
  }
  func.func @transform_2(%arg0: i32) -> (i32, i32) {
    %c0_i32 = arith.constant 0 : i32
    %c0_i32_0 = arith.constant 0 : i32
    %c0_i32_1 = arith.constant 0 : i32
    return %c0_i32, %c0_i32_0 : i32, i32
  }
  func.func @transform_3(%arg0: i32) -> (i32, i32) {
    %c0_i32 = arith.constant 0 : i32
    %c0_i32_0 = arith.constant 0 : i32
    %c0_i32_1 = arith.constant 0 : i32
    return %c0_i32, %c0_i32_0 : i32, i32
  }
  func.func @transform_4(%arg0: i32) -> (i32, i32) {
    %c0_i32 = arith.constant 0 : i32
    %c0_i32_0 = arith.constant 0 : i32
    %c0_i32_1 = arith.constant 0 : i32
    return %c0_i32, %c0_i32_0 : i32, i32
  }
  func.func @transform_5(%arg0: i32) -> (i32, i32) {
    %c0_i32 = arith.constant 0 : i32
    %c0_i32_0 = arith.constant 0 : i32
    %c0_i32_1 = arith.constant 0 : i32
    return %c0_i32, %c0_i32_0 : i32, i32
  }
  func.func @transform_6(%arg0: i32) -> (i32, i32) {
    %c0_i32 = arith.constant 0 : i32
    %c0_i32_0 = arith.constant 0 : i32
    %c0_i32_1 = arith.constant 0 : i32
    return %c0_i32, %c0_i32_0 : i32, i32
  }
  func.func @transform_7(%arg0: i32) -> (i32, i32) {
    %c0_i32 = arith.constant 0 : i32
    %c0_i32_0 = arith.constant 0 : i32
    %c0_i32_1 = arith.constant 0 : i32
    return %c0_i32, %c0_i32_0 : i32, i32
  }
  func.func @transform_8(%arg0: i32) -> (i32, i32) {
    %c0_i32 = arith.constant 0 : i32
    %c0_i32_0 = arith.constant 0 : i32
    %c0_i32_1 = arith.constant 0 : i32
    return %c0_i32, %c0_i32_0 : i32, i32
  }
  func.func @transform_9(%arg0: i32) -> (i32, i32) {
    %c0_i32 = arith.constant 0 : i32
    %c0_i32_0 = arith.constant 0 : i32
    %c0_i32_1 = arith.constant 0 : i32
    return %c0_i32, %c0_i32_0 : i32, i32
  }
  func.func @transform_10(%arg0: i32) -> (i32, i32) {
    %c0_i32 = arith.constant 0 : i32
    %c0_i32_0 = arith.constant 0 : i32
    %c0_i32_1 = arith.constant 0 : i32
    return %c0_i32, %c0_i32_0 : i32, i32
  }
  func.func @transform_11(%arg0: i32) -> (i32, i32) {
    %c0_i32 = arith.constant 0 : i32
    %c0_i32_0 = arith.constant 0 : i32
    %c0_i32_1 = arith.constant 0 : i32
    return %c0_i32, %c0_i32_0 : i32, i32
  }
  func.func @transform_12(%arg0: i32) -> (i32, i32) {
    %c0_i32 = arith.constant 0 : i32
    %c0_i32_0 = arith.constant 0 : i32
    %c0_i32_1 = arith.constant 0 : i32
    return %c0_i32, %c0_i32_0 : i32, i32
  }
  func.func @transform_13(%arg0: i32) -> (i32, i32) {
    %c0_i32 = arith.constant 0 : i32
    %c0_i32_0 = arith.constant 0 : i32
    %c0_i32_1 = arith.constant 0 : i32
    return %c0_i32, %c0_i32_0 : i32, i32
  }
  func.func @transform_14(%arg0: i32) -> (i32, i32) {
    %c0_i32 = arith.constant 0 : i32
    %c0_i32_0 = arith.constant 0 : i32
    %c0_i32_1 = arith.constant 0 : i32
    return %c0_i32, %c0_i32_0 : i32, i32
  }
  func.func @transform_15(%arg0: i32) -> (i32, i32) {
    %c0_i32 = arith.constant 0 : i32
    %c0_i32_0 = arith.constant 0 : i32
    %c0_i32_1 = arith.constant 0 : i32
    return %c0_i32, %c0_i32_0 : i32, i32
  }
  func.func @transform_16(%arg0: i32) -> (i32, i32) {
    %c0_i32 = arith.constant 0 : i32
    %c0_i32_0 = arith.constant 0 : i32
    %c0_i32_1 = arith.constant 0 : i32
    return %c0_i32, %c0_i32_0 : i32, i32
  }
  func.func @transform_17(%arg0: i32) -> (i32, i32) {
    %c0_i32 = arith.constant 0 : i32
    %c0_i32_0 = arith.constant 0 : i32
    %c0_i32_1 = arith.constant 0 : i32
    return %c0_i32, %c0_i32_0 : i32, i32
  }
  func.func @transform_18(%arg0: i32) -> (i32, i32) {
    %c0_i32 = arith.constant 0 : i32
    %c0_i32_0 = arith.constant 0 : i32
    %c0_i32_1 = arith.constant 0 : i32
    return %c0_i32, %c0_i32_0 : i32, i32
  }
  func.func @transform_19(%arg0: i32) -> (i32, i32) {
    %c0_i32 = arith.constant 0 : i32
    %c0_i32_0 = arith.constant 0 : i32
    %c0_i32_1 = arith.constant 0 : i32
    return %c0_i32, %c0_i32_0 : i32, i32
  }
  func.func @transform_20(%arg0: i32) -> (i32, i32, i32) {
    %c0_i32 = arith.constant 0 : i32
    %c0_i32_0 = arith.constant 0 : i32
    %c0_i32_1 = arith.constant 0 : i32
    return %arg0, %c0_i32, %c0_i32_0 : i32, i32, i32
  }
}

</mosaic_0001>

<llo_original>
// kernel: ground_trans_lite.1
$region0: #{ground_trans_lite.1}
  #allocation0 [shape = 'u32[]', space=smem, size = 0x4, offset = 0x4, fixed_abs, tag = 'smem constant byte address 0x4 - core index']
  #allocation1 [shape = 'u32[144,128]{1,0:T(1,128)}', space=vmem, size = 0x12000, scoped, tag = 'internal scratch']
  %s0 = inlined_call_operand.vmem [shape: f32[2,32,256], index: 0, kind: input, shape index: {}]
  %s1 = inlined_call_operand.vmem [shape: f32[2,64,32], index: 1, kind: input, shape index: {}]
  %s2 = inlined_call_operand.vmem [shape: f32[32,32], index: 2, kind: input, shape index: {}]
  %s3 = inlined_call_operand.vmem [shape: f32[32,1], index: 3, kind: input, shape index: {}]
  %s4 = inlined_call_operand.vmem [shape: f32[32,32], index: 4, kind: input, shape index: {}]
  %s5 = inlined_call_operand.vmem [shape: f32[1,32], index: 5, kind: input, shape index: {}]
  %s6 = inlined_call_operand.vmem [shape: f32[32,32], index: 6, kind: input, shape index: {}]
  %s7 = inlined_call_operand.vmem [shape: f32[32,1], index: 7, kind: input, shape index: {}]
  %s8 = inlined_call_operand.vmem [shape: f32[32,32], index: 8, kind: input, shape index: {}]
  %s9 = inlined_call_operand.vmem [shape: f32[32,1], index: 9, kind: input, shape index: {}]
  %s10 = inlined_call_operand.vmem [shape: f32[64,32], index: 10, kind: input, shape index: {}]
  %s11 = inlined_call_operand.vmem [shape: f32[64,1], index: 11, kind: input, shape index: {}]
  %s12 = inlined_call_operand.vmem [shape: f32[32,64], index: 12, kind: input, shape index: {}]
  %s13 = inlined_call_operand.vmem [shape: f32[32,1], index: 13, kind: input, shape index: {}]
  %s14 = inlined_call_operand.vmem [shape: f32[32,1], index: 14, kind: input, shape index: {}]
  %s15 = inlined_call_operand.vmem [shape: f32[32,1], index: 15, kind: input, shape index: {}]
  %s16 = inlined_call_operand.vmem [shape: f32[1,32], index: 16, kind: input, shape index: {}]
  %s17 = inlined_call_operand.vmem [shape: f32[1,32], index: 17, kind: input, shape index: {}]
  %s18 = inlined_call_operand.vmem [shape: f32[32,1], index: 18, kind: input, shape index: {}]
  %s19 = inlined_call_operand.vmem [shape: f32[32,1], index: 19, kind: input, shape index: {}]
  %s20 = inlined_call_operand.vmem [shape: f32[2,32,256], index: 20, kind: output, shape index: {}]
  %s21 = sld [smem:[#allocation0]]
  $region113: #{ground_trans_lite.1} parent=0
    _
  %s23 = ssub.s32 1, %s21
  %s24 = scalar_select 0, %s23, %s21
  loop: start=0, step=1, limit=4
  $region2: #{ground_trans_lite.1} parent=0 // loop_pre_header
    _
  $region3: #{ground_trans_lite.1} parent=0 // loop_header
    %s26 = sphi 0, %s30
    %p27 = scmp.ge.s32.totalorder %s26, 4
    %s36 = sphi 0, %s38
    %s39 = sphi 0, %s36
    %s40 = sphi 0, %s39
    %s56 = sphi 0, %s40
    %s62 = sphi 0, %s64
    %s65 = sphi 0, %s62
    %s66 = sphi 0, %s65
    %s82 = sphi 0, %s66
    %s86 = sphi 0, %s86
    %s88 = sphi 0, %s86
    %s89 = sphi 0, %s88
    %s103 = sphi 0, %s89
    %s107 = sphi 0, %s107
    %s109 = sphi 0, %s107
    %s110 = sphi 0, %s109
    %s124 = sphi 0, %s110
    %s128 = sphi 0, %s128
    %s130 = sphi 0, %s128
    %s131 = sphi 0, %s130
    %s145 = sphi 0, %s131
    %s149 = sphi 0, %s149
    %s151 = sphi 0, %s149
    %s152 = sphi 0, %s151
    %s166 = sphi 0, %s152
    %s170 = sphi 0, %s170
    %s172 = sphi 0, %s170
    %s173 = sphi 0, %s172
    %s187 = sphi 0, %s173
    %s191 = sphi 0, %s191
    %s193 = sphi 0, %s191
    %s194 = sphi 0, %s193
    %s208 = sphi 0, %s194
    %s212 = sphi 0, %s212
    %s214 = sphi 0, %s212
    %s215 = sphi 0, %s214
    %s229 = sphi 0, %s215
    %s233 = sphi 0, %s233
    %s235 = sphi 0, %s233
    %s236 = sphi 0, %s235
    %s250 = sphi 0, %s236
    %s254 = sphi 0, %s254
    %s256 = sphi 0, %s254
    %s257 = sphi 0, %s256
    %s271 = sphi 0, %s257
    %s275 = sphi 0, %s275
    %s277 = sphi 0, %s275
    %s278 = sphi 0, %s277
    %s292 = sphi 0, %s278
    %s296 = sphi 0, %s296
    %s298 = sphi 0, %s296
    %s299 = sphi 0, %s298
    %s313 = sphi 0, %s299
    %s317 = sphi 0, %s317
    %s319 = sphi 0, %s317
    %s320 = sphi 0, %s319
    %s334 = sphi 0, %s320
    %s338 = sphi 0, %s338
    %s340 = sphi 0, %s338
    %s341 = sphi 0, %s340
    %s355 = sphi 0, %s341
    %s359 = sphi 0, %s359
    %s361 = sphi 0, %s359
    %s362 = sphi 0, %s361
    %s376 = sphi 0, %s362
    %s380 = sphi 0, %s380
    %s382 = sphi 0, %s380
    %s383 = sphi 0, %s382
    %s397 = sphi 0, %s383
    %s401 = sphi 0, %s401
    %s403 = sphi 0, %s401
    %s404 = sphi 0, %s403
    %s418 = sphi 0, %s404
    %s422 = sphi 0, %s422
    %s424 = sphi 0, %s422
    %s425 = sphi 0, %s424
    %s439 = sphi 0, %s425
    %s443 = sphi 0, %s443
    %s445 = sphi 0, %s443
    %s446 = sphi 0, %s445
    %s460 = sphi 0, %s446
    %s466 = sphi 0, %s468
    %s469 = sphi 0, %s466
    %s470 = sphi 0, %s469
    %s486 = sphi 0, %s470
  $region4: #{ground_trans_lite.1} parent=0 // loop_header_branch
    %29 = sbr.rel (%p27) target = $region8
  $region5: #{ground_trans_lite.1} parent=0 // loop_body
    %s31 = ssub.s32 %s26, 1
    %s32 = ssub.s32 %s26, 2
    %s33 = sadd.s32 %s26, 1
    %s34 = ssub.s32 %s26, %s33
    %p35 = scmp.eq.s32.totalorder %s34, 0
    %s37 = sadd.s32 %s36, 1
    %s38 = scalar_select %p35, %s36, %s37
    %p41 = pneg %p35
    %p42 = scmp.eq.s32.totalorder %s26, 1
    %p43 = por %p41, %p42
    %p44 = scmp.ne.s32.totalorder %s36, %s39
    %p45 = scmp.eq.s32.totalorder %s26, 0
    %p46 = por %p44, %p45
    %p47 = scmp.ne.s32.totalorder %s36, %s39
    %p48 = scmp.eq.s32.totalorder %s31, 1
    %p49 = por %p47, %p48
    %p50 = scmp.ne.s32.totalorder %s39, %s40
    %p51 = scmp.eq.s32.totalorder %s31, 0
    %p52 = por %p50, %p51
    %p53 = scmp.ne.s32.totalorder %s39, %s40
    %p54 = scmp.eq.s32.totalorder %s32, 1
    %p55 = por %p53, %p54
    %p57 = scmp.ne.s32.totalorder %s40, %s56
    %p58 = scmp.eq.s32.totalorder %s32, 0
    %p59 = por %p57, %p58
    %s60 = ssub.s32 %s26, %s33
    %p61 = scmp.eq.s32.totalorder %s60, 0
    %s63 = sadd.s32 %s62, 1
    %s64 = scalar_select %p61, %s62, %s63
    %p67 = pneg %p61
    %p68 = scmp.eq.s32.totalorder %s26, 1
    %p69 = por %p67, %p68
    %p70 = scmp.ne.s32.totalorder %s62, %s65
    %p71 = scmp.eq.s32.totalorder %s26, 0
    %p72 = por %p70, %p71
    %p73 = scmp.ne.s32.totalorder %s62, %s65
    %p74 = scmp.eq.s32.totalorder %s31, 1
    %p75 = por %p73, %p74
    %p76 = scmp.ne.s32.totalorder %s65, %s66
    %p77 = scmp.eq.s32.totalorder %s31, 0
    %p78 = por %p76, %p77
    %p79 = scmp.ne.s32.totalorder %s65, %s66
    %p80 = scmp.eq.s32.totalorder %s32, 1
    %p81 = por %p79, %p80
    %p83 = scmp.ne.s32.totalorder %s66, %s82
    %p84 = scmp.eq.s32.totalorder %s32, 0
    %p85 = por %p83, %p84
    %s87 = sadd.s32 %s86, 1
    %p90 = scmp.eq.s32.totalorder %s26, 1
    %p91 = scmp.ne.s32.totalorder %s86, %s88
    %p92 = scmp.eq.s32.totalorder %s26, 0
    %p93 = por %p91, %p92
    %p94 = scmp.ne.s32.totalorder %s86, %s88
    %p95 = scmp.eq.s32.totalorder %s31, 1
    %p96 = por %p94, %p95
    %p97 = scmp.ne.s32.totalorder %s88, %s89
    %p98 = scmp.eq.s32.totalorder %s31, 0
    %p99 = por %p97, %p98
    %p100 = scmp.ne.s32.totalorder %s88, %s89
    %p101 = scmp.eq.s32.totalorder %s32, 1
    %p102 = por %p100, %p101
    %p104 = scmp.ne.s32.totalorder %s89, %s103
    %p105 = scmp.eq.s32.totalorder %s32, 0
    %p106 = por %p104, %p105
    %s108 = sadd.s32 %s107, 1
    %p111 = scmp.eq.s32.totalorder %s26, 1
    %p112 = scmp.ne.s32.totalorder %s107, %s109
    %p113 = scmp.eq.s32.totalorder %s26, 0
    %p114 = por %p112, %p113
    %p115 = scmp.ne.s32.totalorder %s107, %s109
    %p116 = scmp.eq.s32.totalorder %s31, 1
    %p117 = por %p115, %p116
    %p118 = scmp.ne.s32.totalorder %s109, %s110
    %p119 = scmp.eq.s32.totalorder %s31, 0
    %p120 = por %p118, %p119
    %p121 = scmp.ne.s32.totalorder %s109, %s110
    %p122 = scmp.eq.s32.totalorder %s32, 1
    %p123 = por %p121, %p122
    %p125 = scmp.ne.s32.totalorder %s110, %s124
    %p126 = scmp.eq.s32.totalorder %s32, 0
    %p127 = por %p125, %p126
    %s129 = sadd.s32 %s128, 1
    %p132 = scmp.eq.s32.totalorder %s26, 1
    %p133 = scmp.ne.s32.totalorder %s128, %s130
    %p134 = scmp.eq.s32.totalorder %s26, 0
    %p135 = por %p133, %p134
    %p136 = scmp.ne.s32.totalorder %s128, %s130
    %p137 = scmp.eq.s32.totalorder %s31, 1
    %p138 = por %p136, %p137
    %p139 = scmp.ne.s32.totalorder %s130, %s131
    %p140 = scmp.eq.s32.totalorder %s31, 0
    %p141 = por %p139, %p140
    %p142 = scmp.ne.s32.totalorder %s130, %s131
    %p143 = scmp.eq.s32.totalorder %s32, 1
    %p144 = por %p142, %p143
    %p146 = scmp.ne.s32.totalorder %s131, %s145
    %p147 = scmp.eq.s32.totalorder %s32, 0
    %p148 = por %p146, %p147
    %s150 = sadd.s32 %s149, 1
    %p153 = scmp.eq.s32.totalorder %s26, 1
    %p154 = scmp.ne.s32.totalorder %s149, %s151
    %p155 = scmp.eq.s32.totalorder %s26, 0
    %p156 = por %p154, %p155
    %p157 = scmp.ne.s32.totalorder %s149, %s151
    %p158 = scmp.eq.s32.totalorder %s31, 1
    %p159 = por %p157, %p158
    %p160 = scmp.ne.s32.totalorder %s151, %s152
    %p161 = scmp.eq.s32.totalorder %s31, 0
    %p162 = por %p160, %p161
    %p163 = scmp.ne.s32.totalorder %s151, %s152
    %p164 = scmp.eq.s32.totalorder %s32, 1
    %p165 = por %p163, %p164
    %p167 = scmp.ne.s32.totalorder %s152, %s166
    %p168 = scmp.eq.s32.totalorder %s32, 0
    %p169 = por %p167, %p168
    %s171 = sadd.s32 %s170, 1
    %p174 = scmp.eq.s32.totalorder %s26, 1
    %p175 = scmp.ne.s32.totalorder %s170, %s172
    %p176 = scmp.eq.s32.totalorder %s26, 0
    %p177 = por %p175, %p176
    %p178 = scmp.ne.s32.totalorder %s170, %s172
    %p179 = scmp.eq.s32.totalorder %s31, 1
    %p180 = por %p178, %p179
    %p181 = scmp.ne.s32.totalorder %s172, %s173
    %p182 = scmp.eq.s32.totalorder %s31, 0
    %p183 = por %p181, %p182
    %p184 = scmp.ne.s32.totalorder %s172, %s173
    %p185 = scmp.eq.s32.totalorder %s32, 1
    %p186 = por %p184, %p185
    %p188 = scmp.ne.s32.totalorder %s173, %s187
    %p189 = scmp.eq.s32.totalorder %s32, 0
    %p190 = por %p188, %p189
    %s192 = sadd.s32 %s191, 1
    %p195 = scmp.eq.s32.totalorder %s26, 1
    %p196 = scmp.ne.s32.totalorder %s191, %s193
    %p197 = scmp.eq.s32.totalorder %s26, 0
    %p198 = por %p196, %p197
    %p199 = scmp.ne.s32.totalorder %s191, %s193
    %p200 = scmp.eq.s32.totalorder %s31, 1
    %p201 = por %p199, %p200
    %p202 = scmp.ne.s32.totalorder %s193, %s194
    %p203 = scmp.eq.s32.totalorder %s31, 0
    %p204 = por %p202, %p203
    %p205 = scmp.ne.s32.totalorder %s193, %s194
    %p206 = scmp.eq.s32.totalorder %s32, 1
    %p207 = por %p205, %p206
    %p209 = scmp.ne.s32.totalorder %s194, %s208
    %p210 = scmp.eq.s32.totalorder %s32, 0
    %p211 = por %p209, %p210
    %s213 = sadd.s32 %s212, 1
    %p216 = scmp.eq.s32.totalorder %s26, 1
    %p217 = scmp.ne.s32.totalorder %s212, %s214
    %p218 = scmp.eq.s32.totalorder %s26, 0
    %p219 = por %p217, %p218
    %p220 = scmp.ne.s32.totalorder %s212, %s214
    %p221 = scmp.eq.s32.totalorder %s31, 1
    %p222 = por %p220, %p221
    %p223 = scmp.ne.s32.totalorder %s214, %s215
    %p224 = scmp.eq.s32.totalorder %s31, 0
    %p225 = por %p223, %p224
    %p226 = scmp.ne.s32.totalorder %s214, %s215
    %p227 = scmp.eq.s32.totalorder %s32, 1
    %p228 = por %p226, %p227
    %p230 = scmp.ne.s32.totalorder %s215, %s229
    %p231 = scmp.eq.s32.totalorder %s32, 0
    %p232 = por %p230, %p231
    %s234 = sadd.s32 %s233, 1
    %p237 = scmp.eq.s32.totalorder %s26, 1
    %p238 = scmp.ne.s32.totalorder %s233, %s235
    %p239 = scmp.eq.s32.totalorder %s26, 0
    %p240 = por %p238, %p239
    %p241 = scmp.ne.s32.totalorder %s233, %s235
    %p242 = scmp.eq.s32.totalorder %s31, 1
    %p243 = por %p241, %p242
    %p244 = scmp.ne.s32.totalorder %s235, %s236
    %p245 = scmp.eq.s32.totalorder %s31, 0
    %p246 = por %p244, %p245
    %p247 = scmp.ne.s32.totalorder %s235, %s236
    %p248 = scmp.eq.s32.totalorder %s32, 1
    %p249 = por %p247, %p248
    %p251 = scmp.ne.s32.totalorder %s236, %s250
    %p252 = scmp.eq.s32.totalorder %s32, 0
    %p253 = por %p251, %p252
    %s255 = sadd.s32 %s254, 1
    %p258 = scmp.eq.s32.totalorder %s26, 1
    %p259 = scmp.ne.s32.totalorder %s254, %s256
    %p260 = scmp.eq.s32.totalorder %s26, 0
    %p261 = por %p259, %p260
    %p262 = scmp.ne.s32.totalorder %s254, %s256
    %p263 = scmp.eq.s32.totalorder %s31, 1
    %p264 = por %p262, %p263
    %p265 = scmp.ne.s32.totalorder %s256, %s257
    %p266 = scmp.eq.s32.totalorder %s31, 0
    %p267 = por %p265, %p266
    %p268 = scmp.ne.s32.totalorder %s256, %s257
    %p269 = scmp.eq.s32.totalorder %s32, 1
    %p270 = por %p268, %p269
    %p272 = scmp.ne.s32.totalorder %s257, %s271
    %p273 = scmp.eq.s32.totalorder %s32, 0
    %p274 = por %p272, %p273
    %s276 = sadd.s32 %s275, 1
    %p279 = scmp.eq.s32.totalorder %s26, 1
    %p280 = scmp.ne.s32.totalorder %s275, %s277
    %p281 = scmp.eq.s32.totalorder %s26, 0
    %p282 = por %p280, %p281
    %p283 = scmp.ne.s32.totalorder %s275, %s277
    %p284 = scmp.eq.s32.totalorder %s31, 1
    %p285 = por %p283, %p284
    %p286 = scmp.ne.s32.totalorder %s277, %s278
    %p287 = scmp.eq.s32.totalorder %s31, 0
    %p288 = por %p286, %p287
    %p289 = scmp.ne.s32.totalorder %s277, %s278
    %p290 = scmp.eq.s32.totalorder %s32, 1
    %p291 = por %p289, %p290
    %p293 = scmp.ne.s32.totalorder %s278, %s292
    %p294 = scmp.eq.s32.totalorder %s32, 0
    %p295 = por %p293, %p294
    %s297 = sadd.s32 %s296, 1
    %p300 = scmp.eq.s32.totalorder %s26, 1
    %p301 = scmp.ne.s32.totalorder %s296, %s298
    %p302 = scmp.eq.s32.totalorder %s26, 0
    %p303 = por %p301, %p302
    %p304 = scmp.ne.s32.totalorder %s296, %s298
    %p305 = scmp.eq.s32.totalorder %s31, 1
    %p306 = por %p304, %p305
    %p307 = scmp.ne.s32.totalorder %s298, %s299
    %p308 = scmp.eq.s32.totalorder %s31, 0
    %p309 = por %p307, %p308
    %p310 = scmp.ne.s32.totalorder %s298, %s299
    %p311 = scmp.eq.s32.totalorder %s32, 1
    %p312 = por %p310, %p311
    %p314 = scmp.ne.s32.totalorder %s299, %s313
    %p315 = scmp.eq.s32.totalorder %s32, 0
    %p316 = por %p314, %p315
    %s318 = sadd.s32 %s317, 1
    %p321 = scmp.eq.s32.totalorder %s26, 1
    %p322 = scmp.ne.s32.totalorder %s317, %s319
    %p323 = scmp.eq.s32.totalorder %s26, 0
    %p324 = por %p322, %p323
    %p325 = scmp.ne.s32.totalorder %s317, %s319
    %p326 = scmp.eq.s32.totalorder %s31, 1
    %p327 = por %p325, %p326
    %p328 = scmp.ne.s32.totalorder %s319, %s320
    %p329 = scmp.eq.s32.totalorder %s31, 0
    %p330 = por %p328, %p329
    %p331 = scmp.ne.s32.totalorder %s319, %s320
    %p332 = scmp.eq.s32.totalorder %s32, 1
    %p333 = por %p331, %p332
    %p335 = scmp.ne.s32.totalorder %s320, %s334
    %p336 = scmp.eq.s32.totalorder %s32, 0
    %p337 = por %p335, %p336
    %s339 = sadd.s32 %s338, 1
    %p342 = scmp.eq.s32.totalorder %s26, 1
    %p343 = scmp.ne.s32.totalorder %s338, %s340
    %p344 = scmp.eq.s32.totalorder %s26, 0
    %p345 = por %p343, %p344
    %p346 = scmp.ne.s32.totalorder %s338, %s340
    %p347 = scmp.eq.s32.totalorder %s31, 1
    %p348 = por %p346, %p347
    %p349 = scmp.ne.s32.totalorder %s340, %s341
    %p350 = scmp.eq.s32.totalorder %s31, 0
    %p351 = por %p349, %p350
    %p352 = scmp.ne.s32.totalorder %s340, %s341
    %p353 = scmp.eq.s32.totalorder %s32, 1
    %p354 = por %p352, %p353
    %p356 = scmp.ne.s32.totalorder %s341, %s355
    %p357 = scmp.eq.s32.totalorder %s32, 0
    %p358 = por %p356, %p357
    %s360 = sadd.s32 %s359, 1
    %p363 = scmp.eq.s32.totalorder %s26, 1
    %p364 = scmp.ne.s32.totalorder %s359, %s361
    %p365 = scmp.eq.s32.totalorder %s26, 0
    %p366 = por %p364, %p365
    %p367 = scmp.ne.s32.totalorder %s359, %s361
    %p368 = scmp.eq.s32.totalorder %s31, 1
    %p369 = por %p367, %p368
    %p370 = scmp.ne.s32.totalorder %s361, %s362
    %p371 = scmp.eq.s32.totalorder %s31, 0
    %p372 = por %p370, %p371
    %p373 = scmp.ne.s32.totalorder %s361, %s362
    %p374 = scmp.eq.s32.totalorder %s32, 1
    %p375 = por %p373, %p374
    %p377 = scmp.ne.s32.totalorder %s362, %s376
    %p378 = scmp.eq.s32.totalorder %s32, 0
    %p379 = por %p377, %p378
    %s381 = sadd.s32 %s380, 1
    %p384 = scmp.eq.s32.totalorder %s26, 1
    %p385 = scmp.ne.s32.totalorder %s380, %s382
    %p386 = scmp.eq.s32.totalorder %s26, 0
    %p387 = por %p385, %p386
    %p388 = scmp.ne.s32.totalorder %s380, %s382
    %p389 = scmp.eq.s32.totalorder %s31, 1
    %p390 = por %p388, %p389
    %p391 = scmp.ne.s32.totalorder %s382, %s383
    %p392 = scmp.eq.s32.totalorder %s31, 0
    %p393 = por %p391, %p392
    %p394 = scmp.ne.s32.totalorder %s382, %s383
    %p395 = scmp.eq.s32.totalorder %s32, 1
    %p396 = por %p394, %p395
    %p398 = scmp.ne.s32.totalorder %s383, %s397
    %p399 = scmp.eq.s32.totalorder %s32, 0
    %p400 = por %p398, %p399
    %s402 = sadd.s32 %s401, 1
    %p405 = scmp.eq.s32.totalorder %s26, 1
    %p406 = scmp.ne.s32.totalorder %s401, %s403
    %p407 = scmp.eq.s32.totalorder %s26, 0
    %p408 = por %p406, %p407
    %p409 = scmp.ne.s32.totalorder %s401, %s403
    %p410 = scmp.eq.s32.totalorder %s31, 1
    %p411 = por %p409, %p410
    %p412 = scmp.ne.s32.totalorder %s403, %s404
    %p413 = scmp.eq.s32.totalorder %s31, 0
    %p414 = por %p412, %p413
    %p415 = scmp.ne.s32.totalorder %s403, %s404
    %p416 = scmp.eq.s32.totalorder %s32, 1
    %p417 = por %p415, %p416
    %p419 = scmp.ne.s32.totalorder %s404, %s418
    %p420 = scmp.eq.s32.totalorder %s32, 0
    %p421 = por %p419, %p420
    %s423 = sadd.s32 %s422, 1
    %p426 = scmp.eq.s32.totalorder %s26, 1
    %p427 = scmp.ne.s32.totalorder %s422, %s424
    %p428 = scmp.eq.s32.totalorder %s26, 0
    %p429 = por %p427, %p428
    %p430 = scmp.ne.s32.totalorder %s422, %s424
    %p431 = scmp.eq.s32.totalorder %s31, 1
    %p432 = por %p430, %p431
    %p433 = scmp.ne.s32.totalorder %s424, %s425
    %p434 = scmp.eq.s32.totalorder %s31, 0
    %p435 = por %p433, %p434
    %p436 = scmp.ne.s32.totalorder %s424, %s425
    %p437 = scmp.eq.s32.totalorder %s32, 1
    %p438 = por %p436, %p437
    %p440 = scmp.ne.s32.totalorder %s425, %s439
    %p441 = scmp.eq.s32.totalorder %s32, 0
    %p442 = por %p440, %p441
    %s444 = sadd.s32 %s443, 1
    %p447 = scmp.eq.s32.totalorder %s26, 1
    %p448 = scmp.ne.s32.totalorder %s443, %s445
    %p449 = scmp.eq.s32.totalorder %s26, 0
    %p450 = por %p448, %p449
    %p451 = scmp.ne.s32.totalorder %s443, %s445
    %p452 = scmp.eq.s32.totalorder %s31, 1
    %p453 = por %p451, %p452
    %p454 = scmp.ne.s32.totalorder %s445, %s446
    %p455 = scmp.eq.s32.totalorder %s31, 0
    %p456 = por %p454, %p455
    %p457 = scmp.ne.s32.totalorder %s445, %s446
    %p458 = scmp.eq.s32.totalorder %s32, 1
    %p459 = por %p457, %p458
    %p461 = scmp.ne.s32.totalorder %s446, %s460
    %p462 = scmp.eq.s32.totalorder %s32, 0
    %p463 = por %p461, %p462
    %s464 = ssub.s32 %s26, %s33
    %p465 = scmp.eq.s32.totalorder %s464, 0
    %s467 = sadd.s32 %s466, 1
    %s468 = scalar_select %p465, %s466, %s467
    %p471 = pneg %p465
    %p472 = scmp.eq.s32.totalorder %s26, 1
    %p473 = por %p471, %p472
    %p474 = scmp.ne.s32.totalorder %s466, %s469
    %p475 = scmp.eq.s32.totalorder %s26, 0
    %p476 = por %p474, %p475
    %p477 = scmp.ne.s32.totalorder %s466, %s469
    %p478 = scmp.eq.s32.totalorder %s31, 1
    %p479 = por %p477, %p478
    %p480 = scmp.ne.s32.totalorder %s469, %s470
    %p481 = scmp.eq.s32.totalorder %s31, 0
    %p482 = por %p480, %p481
    %p483 = scmp.ne.s32.totalorder %s469, %s470
    %p484 = scmp.eq.s32.totalorder %s32, 1
    %p485 = por %p483, %p484
    %p487 = scmp.ne.s32.totalorder %s470, %s486
    %p488 = scmp.eq.s32.totalorder %s32, 0
    %p489 = por %p487, %p488
    %p490 = scmp.le.s32.totalorder 1, %s26
    %p491 = scmp.lt.s32.totalorder %s26, 3
    %p492 = pnand %p490, %p491
    %p493 = pneg %p492
    // Predicated region
    $region9: #{ground_trans_lite.1} parent=5 // pred_check
      _
    $region10: #{ground_trans_lite.1} parent=5 // pred_check_branch
      %495 = sbr.rel (%p492) target = $region12
    $region11: #{ground_trans_lite.1} parent=5 // pred_region
      %s496 = ssub.s32 %s26, 1
      // Predicated region
      $region13: #{ground_trans_lite.1} parent=11 // pred_check
        %p497 = pneg %p99
      $region14: #{ground_trans_lite.1} parent=11 // pred_check_branch
        %499 = sbr.rel (%p497) target = $region16
      $region15: #{ground_trans_lite.1} parent=11 // pred_region
        _
      $region16: #{ground_trans_lite.1} parent=11 // pred_fallthru
        _
      // Predicated region
      $region17: #{ground_trans_lite.1} parent=11 // pred_check
        %p500 = pneg %p120
      $region18: #{ground_trans_lite.1} parent=11 // pred_check_branch
        %502 = sbr.rel (%p500) target = $region20
      $region19: #{ground_trans_lite.1} parent=11 // pred_region
        _
      $region20: #{ground_trans_lite.1} parent=11 // pred_fallthru
        _
      // Predicated region
      $region21: #{ground_trans_lite.1} parent=11 // pred_check
        %p503 = pneg %p141
      $region22: #{ground_trans_lite.1} parent=11 // pred_check_branch
        %505 = sbr.rel (%p503) target = $region24
      $region23: #{ground_trans_lite.1} parent=11 // pred_region
        _
      $region24: #{ground_trans_lite.1} parent=11 // pred_fallthru
        _
      // Predicated region
      $region25: #{ground_trans_lite.1} parent=11 // pred_check
        %p506 = pneg %p162
      $region26: #{ground_trans_lite.1} parent=11 // pred_check_branch
        %508 = sbr.rel (%p506) target = $region28
      $region27: #{ground_trans_lite.1} parent=11 // pred_region
        _
      $region28: #{ground_trans_lite.1} parent=11 // pred_fallthru
        _
      // Predicated region
      $region29: #{ground_trans_lite.1} parent=11 // pred_check
        %p509 = pneg %p183
      $region30: #{ground_trans_lite.1} parent=11 // pred_check_branch
        %511 = sbr.rel (%p509) target = $region32
      $region31: #{ground_trans_lite.1} parent=11 // pred_region
        _
      $region32: #{ground_trans_lite.1} parent=11 // pred_fallthru
        _
      // Predicated region
      $region33: #{ground_trans_lite.1} parent=11 // pred_check
        %p512 = pneg %p204
      $region34: #{ground_trans_lite.1} parent=11 // pred_check_branch
        %514 = sbr.rel (%p512) target = $region36
      $region35: #{ground_trans_lite.1} parent=11 // pred_region
        _
      $region36: #{ground_trans_lite.1} parent=11 // pred_fallthru
        _
      // Predicated region
      $region37: #{ground_trans_lite.1} parent=11 // pred_check
        %p515 = pneg %p225
      $region38: #{ground_trans_lite.1} parent=11 // pred_check_branch
        %517 = sbr.rel (%p515) target = $region40
      $region39: #{ground_trans_lite.1} parent=11 // pred_region
        _
      $region40: #{ground_trans_lite.1} parent=11 // pred_fallthru
        _
      // Predicated region
      $region41: #{ground_trans_lite.1} parent=11 // pred_check
        %p518 = pneg %p246
      $region42: #{ground_trans_lite.1} parent=11 // pred_check_branch
        %520 = sbr.rel (%p518) target = $region44
      $region43: #{ground_trans_lite.1} parent=11 // pred_region
        _
      $region44: #{ground_trans_lite.1} parent=11 // pred_fallthru
        _
      // Predicated region
      $region45: #{ground_trans_lite.1} parent=11 // pred_check
        %p521 = pneg %p267
      $region46: #{ground_trans_lite.1} parent=11 // pred_check_branch
        %523 = sbr.rel (%p521) target = $region48
      $region47: #{ground_trans_lite.1} parent=11 // pred_region
        _
      $region48: #{ground_trans_lite.1} parent=11 // pred_fallthru
        _
      // Predicated region
      $region49: #{ground_trans_lite.1} parent=11 // pred_check
        %p524 = pneg %p288
      $region50: #{ground_trans_lite.1} parent=11 // pred_check_branch
        %526 = sbr.rel (%p524) target = $region52
      $region51: #{ground_trans_lite.1} parent=11 // pred_region
        _
      $region52: #{ground_trans_lite.1} parent=11 // pred_fallthru
        _
      // Predicated region
      $region53: #{ground_trans_lite.1} parent=11 // pred_check
        %p527 = pneg %p309
      $region54: #{ground_trans_lite.1} parent=11 // pred_check_branch
        %529 = sbr.rel (%p527) target = $region56
      $region55: #{ground_trans_lite.1} parent=11 // pred_region
        _
      $region56: #{ground_trans_lite.1} parent=11 // pred_fallthru
        _
      // Predicated region
      $region57: #{ground_trans_lite.1} parent=11 // pred_check
        %p530 = pneg %p330
      $region58: #{ground_trans_lite.1} parent=11 // pred_check_branch
        %532 = sbr.rel (%p530) target = $region60
      $region59: #{ground_trans_lite.1} parent=11 // pred_region
        _
      $region60: #{ground_trans_lite.1} parent=11 // pred_fallthru
        _
      // Predicated region
      $region61: #{ground_trans_lite.1} parent=11 // pred_check
        %p533 = pneg %p351
      $region62: #{ground_trans_lite.1} parent=11 // pred_check_branch
        %535 = sbr.rel (%p533) target = $region64
      $region63: #{ground_trans_lite.1} parent=11 // pred_region
        _
      $region64: #{ground_trans_lite.1} parent=11 // pred_fallthru
        _
      // Predicated region
      $region65: #{ground_trans_lite.1} parent=11 // pred_check
        %p536 = pneg %p372
      $region66: #{ground_trans_lite.1} parent=11 // pred_check_branch
        %538 = sbr.rel (%p536) target = $region68
      $region67: #{ground_trans_lite.1} parent=11 // pred_region
        _
      $region68: #{ground_trans_lite.1} parent=11 // pred_fallthru
        _
      // Predicated region
      $region69: #{ground_trans_lite.1} parent=11 // pred_check
        %p539 = pneg %p393
      $region70: #{ground_trans_lite.1} parent=11 // pred_check_branch
        %541 = sbr.rel (%p539) target = $region72
      $region71: #{ground_trans_lite.1} parent=11 // pred_region
        _
      $region72: #{ground_trans_lite.1} parent=11 // pred_fallthru
        _
      // Predicated region
      $region73: #{ground_trans_lite.1} parent=11 // pred_check
        %p542 = pneg %p414
      $region74: #{ground_trans_lite.1} parent=11 // pred_check_branch
        %544 = sbr.rel (%p542) target = $region76
      $region75: #{ground_trans_lite.1} parent=11 // pred_region
        _
      $region76: #{ground_trans_lite.1} parent=11 // pred_fallthru
        _
      // Predicated region
      $region77: #{ground_trans_lite.1} parent=11 // pred_check
        %p545 = pneg %p435
      $region78: #{ground_trans_lite.1} parent=11 // pred_check_branch
        %547 = sbr.rel (%p545) target = $region80
      $region79: #{ground_trans_lite.1} parent=11 // pred_region
        _
      $region80: #{ground_trans_lite.1} parent=11 // pred_fallthru
        _
      // Predicated region
      $region81: #{ground_trans_lite.1} parent=11 // pred_check
        %p548 = pneg %p456
      $region82: #{ground_trans_lite.1} parent=11 // pred_check_branch
        %550 = sbr.rel (%p548) target = $region84
      $region83: #{ground_trans_lite.1} parent=11 // pred_region
        _
      $region84: #{ground_trans_lite.1} parent=11 // pred_fallthru
        _
    $region12: #{ground_trans_lite.1} parent=5 // pred_fallthru
      _
    %p551 = scmp.lt.s32.totalorder %s26, 2
    // Predicated region
    $region85: #{ground_trans_lite.1} parent=5 // pred_check
      %p552 = pneg %p551
    $region86: #{ground_trans_lite.1} parent=5 // pred_check_branch
      %554 = sbr.rel (%p552) target = $region88
    $region87: #{ground_trans_lite.1} parent=5 // pred_region
      // Predicated region
      $region89: #{ground_trans_lite.1} parent=87 // pred_check
        %p555 = pneg %p46
      $region90: #{ground_trans_lite.1} parent=87 // pred_check_branch
        %557 = sbr.rel (%p555) target = $region92
      $region91: #{ground_trans_lite.1} parent=87 // pred_region
        %p558 = scmp.lt.s32.totalorder %s26, 1
        %s559 = scalar_select %p558, %s26, 1
        %s560 = smul.addr %s559, 8
        %s561 = smul.addr %s560, 8
        %s562 = scalar_lea.vmem %s0, %s561
      $region92: #{ground_trans_lite.1} parent=87 // pred_fallthru
        _
      // Predicated region
      $region93: #{ground_trans_lite.1} parent=87 // pred_check
        %p563 = pneg %p72
      $region94: #{ground_trans_lite.1} parent=87 // pred_check_branch
        %565 = sbr.rel (%p563) target = $region96
      $region95: #{ground_trans_lite.1} parent=87 // pred_region
        %p566 = scmp.lt.s32.totalorder %s26, 1
        %s567 = scalar_select %p566, %s26, 1
        %s568 = smul.addr %s567, 8
        %s569 = smul.addr %s568, 8
        %s570 = scalar_lea.vmem %s1, %s569
      $region96: #{ground_trans_lite.1} parent=87 // pred_fallthru
        _
    $region88: #{ground_trans_lite.1} parent=5 // pred_fallthru
      _
    %p571 = scmp.le.s32.totalorder 1, %s26
    %p572 = scmp.lt.s32.totalorder %s26, 3
    %p573 = pnand %p571, %p572
    %p574 = pneg %p573
    // Predicated region
    $region97: #{ground_trans_lite.1} parent=5 // pred_check
      _
    $region98: #{ground_trans_lite.1} parent=5 // pred_check_branch
      %576 = sbr.rel (%p573) target = $region100
    $region99: #{ground_trans_lite.1} parent=5 // pred_region
      %s577 = ssub.s32 %s26, 1
      %p578 = scmp.lt.s32.totalorder %s31, 1
      %s579 = scalar_select %p578, %s31, 1
      %s580 = smul.addr %s579, 8
      %s581 = smul.addr %s580, 8
      %s582 = scalar_lea.vmem %s0, %s581
      %p583 = pneg %p52
      %p584 = pneg %p49
      %p585 = scmp.lt.s32.totalorder %s31, 1
      %s586 = scalar_select %p585, %s31, 1
      %s587 = smul.addr %s586, 8
      %s588 = smul.addr %s587, 8
      %s589 = scalar_lea.vmem %s1, %s588
      %p590 = pneg %p78
      %p591 = pneg %p75
      %p592 = pneg %p99
      %p593 = pneg %p96
      %p594 = pneg %p120
      %p595 = pneg %p117
      %p596 = pneg %p141
      %p597 = pneg %p138
      %p598 = pneg %p162
      %p599 = pneg %p159
      %p600 = pneg %p183
      %p601 = pneg %p180
      %p602 = pneg %p204
      %p603 = pneg %p201
      %p604 = pneg %p225
      %p605 = pneg %p222
      %p606 = pneg %p246
      %p607 = pneg %p243
      %p608 = pneg %p267
      %p609 = pneg %p264
      %p610 = pneg %p288
      %p611 = pneg %p285
      %p612 = pneg %p309
      %p613 = pneg %p306
      %p614 = pneg %p330
      %p615 = pneg %p327
      %p616 = pneg %p351
      %p617 = pneg %p348
      %p618 = pneg %p372
      %p619 = pneg %p369
      %p620 = pneg %p393
      %p621 = pneg %p390
      %p622 = pneg %p414
      %p623 = pneg %p411
      %p624 = pneg %p435
      %p625 = pneg %p432
      %p626 = pneg %p456
      %p627 = pneg %p453
      %p628 = pneg %p482
      %p629 = pneg %p479
      %p630 = scmp.lt.s32.totalorder %s31, 1
      %s631 = scalar_select %p630, %s31, 1
      %s632 = smul.addr %s631, 8
      %s633 = smul.addr %s632, 8
      %s634 = scalar_lea.vmem %s20, %s633
      %p635 = scmp.lt.s32.totalorder %s31, 1
      %s636 = scalar_select %p635, %s31, 1
      %s637 = smul.addr %s636, 8
      %s638 = smul.addr %s637, 8
      %s639 = scalar_lea.vmem %s0, %s638
      %p640 = scmp.lt.s32.totalorder %s31, 1
      %s641 = scalar_select %p640, %s31, 1
      %s642 = smul.addr %s641, 8
      %s643 = smul.addr %s642, 8
      %s644 = scalar_lea.vmem %s1, %s643
      %p645 = scmp.lt.s32.totalorder %s31, 1
      %s646 = scalar_select %p645, %s31, 1
      %s647 = smul.addr %s646, 8
      %s648 = smul.addr %s647, 8
      %s649 = scalar_lea.vmem %s20, %s648
      %v650 = vld [vmem:[%s639] sm:$0xff]
      %v651 = vld [vmem:[%s639 + $0x8] sm:$0xff]
      %v652 = vld [vmem:[%s639 + $0x10] sm:$0xff]
      %v653 = vld [vmem:[%s639 + $0x18] sm:$0xff]
      %v654 = vld [vmem:[%s639 + $0x20] sm:$0xff]
      %v655 = vld [vmem:[%s639 + $0x28] sm:$0xff]
      %v656 = vld [vmem:[%s639 + $0x30] sm:$0xff]
      %v657 = vld [vmem:[%s639 + $0x38] sm:$0xff]
      %v658 = vld [vmem:[%s644] sm:$0xff]
      %v659 = vld [vmem:[%s644 + $0x8] sm:$0xff]
      %v660 = vld [vmem:[%s644 + $0x10] sm:$0xff]
      %v661 = vld [vmem:[%s644 + $0x18] sm:$0xff]
      %v662 = vld [vmem:[%s644 + $0x20] sm:$0xff]
      %v663 = vld [vmem:[%s644 + $0x28] sm:$0xff]
      %v664 = vld [vmem:[%s644 + $0x30] sm:$0xff]
      %v665 = vld [vmem:[%s644 + $0x38] sm:$0xff]
      %v666 = vadd.f32 %v650, %v652
      %v667 = vadd.f32 %v666, %v654
      %v668 = vadd.f32 %v667, %v656
      %v669 = vrot.slane %v668, 4
      %v670 = vadd.f32 %v668, %v669
      %v671 = vrot.slane %v670, 2
      %v672 = vadd.f32 %v670, %v671
      %v673 = vrot.slane %v672, 1
      %v674 = vadd.f32 %v672, %v673
      %v675 = vadd.f32 %v651, %v653
      %v676 = vadd.f32 %v675, %v655
      %v677 = vadd.f32 %v676, %v657
      %v678 = vrot.slane %v677, 4
      %v679 = vadd.f32 %v677, %v678
      %v680 = vrot.slane %v679, 2
      %v681 = vadd.f32 %v679, %v680
      %v682 = vrot.slane %v681, 1
      %v683 = vadd.f32 %v681, %v682
      %v684 = vrcp.pop 32.0
      %v685 = vmul.f32 %v674, %v684
      %v686 = vmul.f32 %v683, %v684
      %v687 = vsub.f32 %v650, %v685
      %v688 = vsub.f32 %v651, %v686
      %v689 = vsub.f32 %v652, %v685
      %v690 = vsub.f32 %v653, %v686
      %v691 = vsub.f32 %v654, %v685
      %v692 = vsub.f32 %v655, %v686
      %v693 = vsub.f32 %v656, %v685
      %v694 = vsub.f32 %v657, %v686
      %v695 = vmul.f32 %v687, %v687
      %v696 = vmul.f32 %v688, %v688
      %v697 = vmul.f32 %v689, %v689
      %v698 = vmul.f32 %v690, %v690
      %v699 = vmul.f32 %v691, %v691
      %v700 = vmul.f32 %v692, %v692
      %v701 = vmul.f32 %v693, %v693
      %v702 = vmul.f32 %v694, %v694
      %v703 = vadd.f32 %v695, %v697
      %v704 = vadd.f32 %v703, %v699
      %v705 = vadd.f32 %v704, %v701
      %v706 = vrot.slane %v705, 4
      %v707 = vadd.f32 %v705, %v706
      %v708 = vrot.slane %v707, 2
      %v709 = vadd.f32 %v707, %v708
      %v710 = vrot.slane %v709, 1
      %v711 = vadd.f32 %v709, %v710
      %v712 = vadd.f32 %v696, %v698
      %v713 = vadd.f32 %v712, %v700
      %v714 = vadd.f32 %v713, %v702
      %v715 = vrot.slane %v714, 4
      %v716 = vadd.f32 %v714, %v715
      %v717 = vrot.slane %v716, 2
      %v718 = vadd.f32 %v716, %v717
      %v719 = vrot.slane %v718, 1
      %v720 = vadd.f32 %v718, %v719
      %v721 = vmul.f32 %v711, %v684
      %v722 = vmul.f32 %v720, %v684
      %v723 = vadd.f32 %v721, 1e-05
      %v724 = vadd.f32 %v722, 1e-05
      %v725 = vrsqrt.pop %v723
      %v726 = vrsqrt.pop %v724
      %v727 = vmul.f32 %v687, %v725
      %v728 = vmul.f32 %v688, %v726
      %v729 = vmul.f32 %v689, %v725
      %v730 = vmul.f32 %v690, %v726
      %v731 = vmul.f32 %v691, %v725
      %v732 = vmul.f32 %v692, %v726
      %v733 = vmul.f32 %v693, %v725
      %v734 = vmul.f32 %v694, %v726
      %v735 = vld [vmem:[%s14] sm:$0xff]
      %v736 = vld [vmem:[%s14 + $0x8] sm:$0xff]
      %v737 = vld [vmem:[%s14 + $0x10] sm:$0xff]
      %v738 = vld [vmem:[%s14 + $0x18] sm:$0xff]
      %740 = vset.pattern.permute.xlu0 0
      %741 = vperm.xlu0 %740, %v735
      %v742 = vpop.permute.xlu0 %741
      %745 = vset.pattern.permute.xlu0 0
      %746 = vperm.xlu0 %745, %v736
      %v747 = vpop.permute.xlu0 %746
      %750 = vset.pattern.permute.xlu0 0
      %751 = vperm.xlu0 %750, %v737
      %v752 = vpop.permute.xlu0 %751
      %755 = vset.pattern.permute.xlu0 0
      %756 = vperm.xlu0 %755, %v738
      %v757 = vpop.permute.xlu0 %756
      %v759 = vmul.f32 %v727, %v742
      %v760 = vmul.f32 %v728, %v742
      %v761 = vmul.f32 %v729, %v747
      %v762 = vmul.f32 %v730, %v747
      %v763 = vmul.f32 %v731, %v752
      %v764 = vmul.f32 %v732, %v752
      %v765 = vmul.f32 %v733, %v757
      %v766 = vmul.f32 %v734, %v757
      %v767 = vld [vmem:[%s15] sm:$0xff]
      %v768 = vld [vmem:[%s15 + $0x8] sm:$0xff]
      %v769 = vld [vmem:[%s15 + $0x10] sm:$0xff]
      %v770 = vld [vmem:[%s15 + $0x18] sm:$0xff]
      %772 = vset.pattern.permute.xlu0 0
      %773 = vperm.xlu0 %772, %v767
      %v774 = vpop.permute.xlu0 %773
      %777 = vset.pattern.permute.xlu0 0
      %778 = vperm.xlu0 %777, %v768
      %v779 = vpop.permute.xlu0 %778
      %782 = vset.pattern.permute.xlu0 0
      %783 = vperm.xlu0 %782, %v769
      %v784 = vpop.permute.xlu0 %783
      %787 = vset.pattern.permute.xlu0 0
      %788 = vperm.xlu0 %787, %v770
      %v789 = vpop.permute.xlu0 %788
      %v791 = vadd.f32 %v759, %v774
      %v792 = vadd.f32 %v760, %v774
      %v793 = vadd.f32 %v761, %v779
      %v794 = vadd.f32 %v762, %v779
      %v795 = vadd.f32 %v763, %v784
      %v796 = vadd.f32 %v764, %v784
      %v797 = vadd.f32 %v765, %v789
      %v798 = vadd.f32 %v766, %v789
      %vm799 = vcmask 261120
      %v800 = vsel %vm799, %v658, 0.0
      %801 = vadd.xlane.f32.xlu0 %v800
      %v802 = vpop.xlane.xlu0 %801
      %v803 = vsel %vm799, %v659, 0.0
      %804 = vadd.xlane.f32.xlu0 %v803
      %v805 = vpop.xlane.xlu0 %804
      %v806 = vsel %vm799, %v660, 0.0
      %807 = vadd.xlane.f32.xlu0 %v806
      %v808 = vpop.xlane.xlu0 %807
      %v809 = vsel %vm799, %v661, 0.0
      %810 = vadd.xlane.f32.xlu0 %v809
      %v811 = vpop.xlane.xlu0 %810
      %v812 = vsel %vm799, %v662, 0.0
      %813 = vadd.xlane.f32.xlu0 %v812
      %v814 = vpop.xlane.xlu0 %813
      %v815 = vsel %vm799, %v663, 0.0
      %816 = vadd.xlane.f32.xlu0 %v815
      %v817 = vpop.xlane.xlu0 %816
      %v818 = vsel %vm799, %v664, 0.0
      %819 = vadd.xlane.f32.xlu0 %v818
      %v820 = vpop.xlane.xlu0 %819
      %v821 = vsel %vm799, %v665, 0.0
      %822 = vadd.xlane.f32.xlu0 %v821
      %v823 = vpop.xlane.xlu0 %822
      %v824 = vmul.f32 %v802, %v684
      %v825 = vmul.f32 %v805, %v684
      %v826 = vmul.f32 %v808, %v684
      %v827 = vmul.f32 %v811, %v684
      %v828 = vmul.f32 %v814, %v684
      %v829 = vmul.f32 %v817, %v684
      %v830 = vmul.f32 %v820, %v684
      %v831 = vmul.f32 %v823, %v684
      %v832 = vsub.f32 %v658, %v824
      %v833 = vsub.f32 %v659, %v825
      %v834 = vsub.f32 %v660, %v826
      %v835 = vsub.f32 %v661, %v827
      %v836 = vsub.f32 %v662, %v828
      %v837 = vsub.f32 %v663, %v829
      %v838 = vsub.f32 %v664, %v830
      %v839 = vsub.f32 %v665, %v831
      %v840 = vmul.f32 %v832, %v832
      %v841 = vmul.f32 %v833, %v833
      %v842 = vmul.f32 %v834, %v834
      %v843 = vmul.f32 %v835, %v835
      %v844 = vmul.f32 %v836, %v836
      %v845 = vmul.f32 %v837, %v837
      %v846 = vmul.f32 %v838, %v838
      %v847 = vmul.f32 %v839, %v839
      %v848 = vsel %vm799, %v840, 0.0
      %849 = vadd.xlane.f32.xlu0 %v848
      %v850 = vpop.xlane.xlu0 %849
      %v851 = vsel %vm799, %v841, 0.0
      %852 = vadd.xlane.f32.xlu0 %v851
      %v853 = vpop.xlane.xlu0 %852
      %v854 = vsel %vm799, %v842, 0.0
      %855 = vadd.xlane.f32.xlu0 %v854
      %v856 = vpop.xlane.xlu0 %855
      %v857 = vsel %vm799, %v843, 0.0
      %858 = vadd.xlane.f32.xlu0 %v857
      %v859 = vpop.xlane.xlu0 %858
      %v860 = vsel %vm799, %v844, 0.0
      %861 = vadd.xlane.f32.xlu0 %v860
      %v862 = vpop.xlane.xlu0 %861
      %v863 = vsel %vm799, %v845, 0.0
      %864 = vadd.xlane.f32.xlu0 %v863
      %v865 = vpop.xlane.xlu0 %864
      %v866 = vsel %vm799, %v846, 0.0
      %867 = vadd.xlane.f32.xlu0 %v866
      %v868 = vpop.xlane.xlu0 %867
      %v869 = vsel %vm799, %v847, 0.0
      %870 = vadd.xlane.f32.xlu0 %v869
      %v871 = vpop.xlane.xlu0 %870
      %v872 = vmul.f32 %v850, %v684
      %v873 = vmul.f32 %v853, %v684
      %v874 = vmul.f32 %v856, %v684
      %v875 = vmul.f32 %v859, %v684
      %v876 = vmul.f32 %v862, %v684
      %v877 = vmul.f32 %v865, %v684
      %v878 = vmul.f32 %v868, %v684
      %v879 = vmul.f32 %v871, %v684
      %v880 = vadd.f32 %v872, 1e-05
      %v881 = vadd.f32 %v873, 1e-05
      %v882 = vadd.f32 %v874, 1e-05
      %v883 = vadd.f32 %v875, 1e-05
      %v884 = vadd.f32 %v876, 1e-05
      %v885 = vadd.f32 %v877, 1e-05
      %v886 = vadd.f32 %v878, 1e-05
      %v887 = vadd.f32 %v879, 1e-05
      %v888 = vrsqrt.pop %v880
      %v889 = vrsqrt.pop %v881
      %v890 = vrsqrt.pop %v882
      %v891 = vrsqrt.pop %v883
      %v892 = vrsqrt.pop %v884
      %v893 = vrsqrt.pop %v885
      %v894 = vrsqrt.pop %v886
      %v895 = vrsqrt.pop %v887
      %v896 = vmul.f32 %v832, %v888
      %v897 = vmul.f32 %v833, %v889
      %v898 = vmul.f32 %v834, %v890
      %v899 = vmul.f32 %v835, %v891
      %v900 = vmul.f32 %v836, %v892
      %v901 = vmul.f32 %v837, %v893
      %v902 = vmul.f32 %v838, %v894
      %v903 = vmul.f32 %v839, %v895
      %v904 = vld [vmem:[%s16] sm:$0x1]
      %v906 = vlaneseq
      %v907 = vshrl.u32 %v906, 7
      %v908 = vsub.s32 0, %v907
      %v909 = vrot.slane %v904, %v908
      %v911 = vmul.f32 %v896, %v909
      %v912 = vmul.f32 %v897, %v909
      %v913 = vmul.f32 %v898, %v909
      %v914 = vmul.f32 %v899, %v909
      %v915 = vmul.f32 %v900, %v909
      %v916 = vmul.f32 %v901, %v909
      %v917 = vmul.f32 %v902, %v909
      %v918 = vmul.f32 %v903, %v909
      %v919 = vld [vmem:[%s17] sm:$0x1]
      %v921 = vlaneseq
      %v922 = vshrl.u32 %v921, 7
      %v923 = vsub.s32 0, %v922
      %v924 = vrot.slane %v919, %v923
      %v926 = vadd.f32 %v911, %v924
      %v927 = vadd.f32 %v912, %v924
      %v928 = vadd.f32 %v913, %v924
      %v929 = vadd.f32 %v914, %v924
      %v930 = vadd.f32 %v915, %v924
      %v931 = vadd.f32 %v916, %v924
      %v932 = vadd.f32 %v917, %v924
      %v933 = vadd.f32 %v918, %v924
      %v934 = vld [vmem:[%s2] sm:$0xff]
      %v935 = vld [vmem:[%s2 + $0x8] sm:$0xff]
      %v936 = vld [vmem:[%s2 + $0x10] sm:$0xff]
      %v937 = vld [vmem:[%s2 + $0x18] sm:$0xff]
      %v938 = vld [vmem:[%s3] sm:$0xff]
      %v939 = vld [vmem:[%s3 + $0x8] sm:$0xff]
      %v940 = vld [vmem:[%s3 + $0x10] sm:$0xff]
      %v941 = vld [vmem:[%s3 + $0x18] sm:$0xff]
      %943 = vset.pattern.permute.xlu0 0
      %944 = vperm.xlu0 %943, %v938
      %v945 = vpop.permute.xlu0 %944
      %948 = vset.pattern.permute.xlu0 0
      %949 = vperm.xlu0 %948, %v939
      %v950 = vpop.permute.xlu0 %949
      %953 = vset.pattern.permute.xlu0 0
      %954 = vperm.xlu0 %953, %v940
      %v955 = vpop.permute.xlu0 %954
      %958 = vset.pattern.permute.xlu0 0
      %959 = vperm.xlu0 %958, %v941
      %v960 = vpop.permute.xlu0 %959
      %v963 = vsel %vm799, %v934, 0
      %v966 = vsel %vm799, %v935, 0
      %v969 = vsel %vm799, %v936, 0
      %v972 = vsel %vm799, %v937, 0
      %974 = vmatprep.subr.mxu0 0.0
      %975 = vmatpush1.msra.mxu0 0.0
      %976 = vmatprep.subr.mxu0 0.0
      %977 = vmatpush1.msra.mxu0 0.0
      %978 = vmatprep.subr.mxu0 0.0
      %979 = vmatpush1.msra.mxu0 0.0
      %980 = vmatprep.subr.mxu0 0.0
      %981 = vmatpush1.msra.mxu0 0.0
      %982 = vmatprep.subr.mxu0 0.0
      %983 = vmatpush1.msra.mxu0 0.0
      %984 = vmatprep.subr.mxu0 0.0
      %985 = vmatpush1.msra.mxu0 0.0
      %986 = vmatprep.subr.mxu0 0.0
      %987 = vmatpush1.msra.mxu0 0.0
      %988 = vmatprep.subr.mxu0 0.0
      %989 = vmatpush1.msra.mxu0 0.0
      %990 = vmatprep.subr.mxu0 0.0
      %991 = vmatpush1.msra.mxu0 0.0
      %992 = vmatprep.subr.mxu0 0.0
      %993 = vmatpush1.msra.mxu0 0.0
      %994 = vmatprep.subr.mxu0 0.0
      %995 = vmatpush1.msra.mxu0 0.0
      %996 = vmatprep.subr.mxu0 0.0
      %997 = vmatpush1.msra.mxu0 0.0
      %998 = vmatprep.subr.mxu0 %v798
      %999 = vmatpush1.msra.mxu0 %v797
      %1000 = vmatprep.subr.mxu0 %v796
      %1001 = vmatpush1.msra.mxu0 %v795
      %1002 = vmatprep.subr.mxu0 %v794
      %1003 = vmatpush1.msra.mxu0 %v793
      %1004 = vmatprep.subr.mxu0 %v792
      %1005 = vmatpush1.msra.mxu0 %v791
      %1006 = vmatprep.subr.mxu0 0.0
      %1007 = vmatpush2.msra.mxu0 0.0
      %1008 = vmatprep.subr.mxu0 0.0
      %1009 = vmatpush2.msra.mxu0 0.0
      %1010 = vmatprep.subr.mxu0 0.0
      %1011 = vmatpush2.msra.mxu0 0.0
      %1012 = vmatprep.subr.mxu0 0.0
      %1013 = vmatpush2.msra.mxu0 0.0
      %1014 = vmatprep.subr.mxu0 0.0
      %1015 = vmatpush2.msra.mxu0 0.0
      %1016 = vmatprep.subr.mxu0 0.0
      %1017 = vmatpush2.msra.mxu0 0.0
      %1018 = vmatprep.subr.mxu0 0.0
      %1019 = vmatpush2.msra.mxu0 0.0
      %1020 = vmatprep.subr.mxu0 0.0
      %1021 = vmatpush2.msra.mxu0 0.0
      %1022 = vmatprep.subr.mxu0 0.0
      %1023 = vmatpush2.msra.mxu0 0.0
      %1024 = vmatprep.subr.mxu0 0.0
      %1025 = vmatpush2.msra.mxu0 0.0
      %1026 = vmatprep.subr.mxu0 0.0
      %1027 = vmatpush2.msra.mxu0 0.0
      %1028 = vmatprep.subr.mxu0 0.0
      %1029 = vmatpush2.msra.mxu0 0.0
      %1030 = vmatprep.subr.mxu0 0.0
      %1031 = vmatpush2.msra.mxu0 0.0
      %1032 = vmatprep.subr.mxu0 0.0
      %1033 = vmatpush2.msra.mxu0 0.0
      %1034 = vmatprep.subr.mxu0 0.0
      %1035 = vmatpush2.msra.mxu0 0.0
      %1036 = vmatprep.subr.mxu0 0.0
      %1037 = vmatpush2.msra.mxu0 0.0
      %1038 = vmatprep.mubr.f32.mxu0 0.0
      %1039 = vmatmul.mubr.f32.gmra.mxu0 %v963
      %v1040 = vpop.f32.mrf.mxu0
      %v1041 = vadd.f32 %v945, %v1040
      %v1042 = vpop.f32.mrf.mxu0
      %v1043 = vadd.f32 %v945, %v1042
      %1044 = vmatprep.mubr.f32.mxu0 0.0
      %1045 = vmatmul.mubr.f32.gmra.mxu0 %v966
      %v1046 = vpop.f32.mrf.mxu0
      %v1047 = vadd.f32 %v950, %v1046
      %v1048 = vpop.f32.mrf.mxu0
      %v1049 = vadd.f32 %v950, %v1048
      %1050 = vmatprep.mubr.f32.mxu0 0.0
      %1051 = vmatmul.mubr.f32.gmra.mxu0 %v969
      %v1052 = vpop.f32.mrf.mxu0
      %v1053 = vadd.f32 %v955, %v1052
      %v1054 = vpop.f32.mrf.mxu0
      %v1055 = vadd.f32 %v955, %v1054
      %1056 = vmatprep.mubr.f32.mxu0 0.0
      %1057 = vmatmul.mubr.f32.gmra.mxu0 %v972
      %v1058 = vpop.f32.mrf.mxu0
      %v1059 = vadd.f32 %v960, %v1058
      %v1060 = vpop.f32.mrf.mxu0
      %v1061 = vadd.f32 %v960, %v1060
      %1062 = vdwg.mxu0
      %v1063 = vld [vmem:[%s4] sm:$0xff]
      %v1064 = vld [vmem:[%s4 + $0x8] sm:$0xff]
      %v1065 = vld [vmem:[%s4 + $0x10] sm:$0xff]
      %v1066 = vld [vmem:[%s4 + $0x18] sm:$0xff]
      %v1067 = vld [vmem:[%s5] sm:$0x1]
      %v1069 = vlaneseq
      %v1070 = vshrl.u32 %v1069, 7
      %v1071 = vsub.s32 0, %v1070
      %v1072 = vrot.slane %v1067, %v1071
      %v1075 = vsel %vm799, %v926, 0
      %v1078 = vsel %vm799, %v927, 0
      %v1081 = vsel %vm799, %v928, 0
      %v1084 = vsel %vm799, %v929, 0
      %v1087 = vsel %vm799, %v930, 0
      %v1090 = vsel %vm799, %v931, 0
      %v1093 = vsel %vm799, %v932, 0
      %v1096 = vsel %vm799, %v933, 0
      %v1099 = vsel %vm799, %v1063, 0
      %v1102 = vsel %vm799, %v1064, 0
      %v1105 = vsel %vm799, %v1065, 0
      %v1108 = vsel %vm799, %v1066, 0
      %1110 = vmatprep.subr.mxu0 0.0
      %1111 = vmatpush1.xpose.msra.mxu0 0.0
      %1112 = vmatprep.subr.mxu0 0.0
      %1113 = vmatpush1.xpose.msra.mxu0 0.0
      %1114 = vmatprep.subr.mxu0 0.0
      %1115 = vmatpush1.xpose.msra.mxu0 0.0
      %1116 = vmatprep.subr.mxu0 0.0
      %1117 = vmatpush1.xpose.msra.mxu0 0.0
      %1118 = vmatprep.subr.mxu0 0.0
      %1119 = vmatpush1.xpose.msra.mxu0 0.0
      %1120 = vmatprep.subr.mxu0 0.0
      %1121 = vmatpush1.xpose.msra.mxu0 0.0
      %1122 = vmatprep.subr.mxu0 0.0
      %1123 = vmatpush1.xpose.msra.mxu0 0.0
      %1124 = vmatprep.subr.mxu0 0.0
      %1125 = vmatpush1.xpose.msra.mxu0 0.0
      %1126 = vmatprep.subr.mxu0 0.0
      %1127 = vmatpush1.xpose.msra.mxu0 0.0
      %1128 = vmatprep.subr.mxu0 0.0
      %1129 = vmatpush1.xpose.msra.mxu0 0.0
      %1130 = vmatprep.subr.mxu0 0.0
      %1131 = vmatpush1.xpose.msra.mxu0 0.0
      %1132 = vmatprep.subr.mxu0 0.0
      %1133 = vmatpush1.xpose.msra.mxu0 0.0
      %1134 = vmatprep.subr.mxu0 0.0
      %1135 = vmatpush1.xpose.msra.mxu0 %v1108
      %1136 = vmatprep.subr.mxu0 0.0
      %1137 = vmatpush1.xpose.msra.mxu0 %v1105
      %1138 = vmatprep.subr.mxu0 0.0
      %1139 = vmatpush1.xpose.msra.mxu0 %v1102
      %1140 = vmatprep.subr.mxu0 0.0
      %1141 = vmatpush1.xpose.msra.mxu0 %v1099
      %1142 = vmatprep.subr.mxu0 0.0
      %1143 = vmatpush2.xpose.msra.mxu0 0.0
      %1144 = vmatprep.subr.mxu0 0.0
      %1145 = vmatpush2.xpose.msra.mxu0 0.0
      %1146 = vmatprep.subr.mxu0 0.0
      %1147 = vmatpush2.xpose.msra.mxu0 0.0
      %1148 = vmatprep.subr.mxu0 0.0
      %1149 = vmatpush2.xpose.msra.mxu0 0.0
      %1150 = vmatprep.subr.mxu0 0.0
      %1151 = vmatpush2.xpose.msra.mxu0 0.0
      %1152 = vmatprep.subr.mxu0 0.0
      %1153 = vmatpush2.xpose.msra.mxu0 0.0
      %1154 = vmatprep.subr.mxu0 0.0
      %1155 = vmatpush2.xpose.msra.mxu0 0.0
      %1156 = vmatprep.subr.mxu0 0.0
      %1157 = vmatpush2.xpose.msra.mxu0 0.0
      %1158 = vmatprep.subr.mxu0 0.0
      %1159 = vmatpush2.xpose.msra.mxu0 0.0
      %1160 = vmatprep.subr.mxu0 0.0
      %1161 = vmatpush2.xpose.msra.mxu0 0.0
      %1162 = vmatprep.subr.mxu0 0.0
      %1163 = vmatpush2.xpose.msra.mxu0 0.0
      %1164 = vmatprep.subr.mxu0 0.0
      %1165 = vmatpush2.xpose.msra.mxu0 0.0
      %1166 = vmatprep.subr.mxu0 0.0
      %1167 = vmatpush2.xpose.msra.mxu0 0.0
      %1168 = vmatprep.subr.mxu0 0.0
      %1169 = vmatpush2.xpose.msra.mxu0 0.0
      %1170 = vmatprep.subr.mxu0 0.0
      %1171 = vmatpush2.xpose.msra.mxu0 0.0
      %1172 = vmatprep.subr.mxu0 0.0
      %1173 = vmatpush2.xpose.msra.mxu0 0.0
      %1174 = vmatprep.mubr.f32.mxu0 0.0
      %1175 = vmatmul.mubr.f32.gmra.mxu0 %v1075
      %v1176 = vpop.f32.mrf.mxu0
      %v1177 = vadd.f32 %v1072, %v1176
      %v1178 = vpop.f32.mrf.mxu0
      %1179 = vmatprep.mubr.f32.mxu0 0.0
      %1180 = vmatmul.mubr.f32.gmra.mxu0 %v1078
      %v1181 = vpop.f32.mrf.mxu0
      %v1182 = vadd.f32 %v1072, %v1181
      %v1183 = vpop.f32.mrf.mxu0
      %1184 = vmatprep.mubr.f32.mxu0 0.0
      %1185 = vmatmul.mubr.f32.gmra.mxu0 %v1081
      %v1186 = vpop.f32.mrf.mxu0
      %v1187 = vadd.f32 %v1072, %v1186
      %v1188 = vpop.f32.mrf.mxu0
      %1189 = vmatprep.mubr.f32.mxu0 0.0
      %1190 = vmatmul.mubr.f32.gmra.mxu0 %v1084
      %v1191 = vpop.f32.mrf.mxu0
      %v1192 = vadd.f32 %v1072, %v1191
      %v1193 = vpop.f32.mrf.mxu0
      %1194 = vmatprep.mubr.f32.mxu0 0.0
      %1195 = vmatmul.mubr.f32.gmra.mxu0 %v1087
      %v1196 = vpop.f32.mrf.mxu0
      %v1197 = vadd.f32 %v1072, %v1196
      %v1198 = vpop.f32.mrf.mxu0
      %1199 = vmatprep.mubr.f32.mxu0 0.0
      %1200 = vmatmul.mubr.f32.gmra.mxu0 %v1090
      %v1201 = vpop.f32.mrf.mxu0
      %v1202 = vadd.f32 %v1072, %v1201
      %v1203 = vpop.f32.mrf.mxu0
      %1204 = vmatprep.mubr.f32.mxu0 0.0
      %1205 = vmatmul.mubr.f32.gmra.mxu0 %v1093
      %v1206 = vpop.f32.mrf.mxu0
      %v1207 = vadd.f32 %v1072, %v1206
      %v1208 = vpop.f32.mrf.mxu0
      %1209 = vmatprep.mubr.f32.mxu0 0.0
      %1210 = vmatmul.mubr.f32.gmra.mxu0 %v1096
      %v1211 = vpop.f32.mrf.mxu0
      %v1212 = vadd.f32 %v1072, %v1211
      %v1213 = vpop.f32.mrf.mxu0
      %1214 = vdwg.mxu0
      %v1215 = vld [vmem:[%s6] sm:$0xff]
      %v1216 = vld [vmem:[%s6 + $0x8] sm:$0xff]
      %v1217 = vld [vmem:[%s6 + $0x10] sm:$0xff]
      %v1218 = vld [vmem:[%s6 + $0x18] sm:$0xff]
      %v1219 = vld [vmem:[%s7] sm:$0xff]
      %v1220 = vld [vmem:[%s7 + $0x8] sm:$0xff]
      %v1221 = vld [vmem:[%s7 + $0x10] sm:$0xff]
      %v1222 = vld [vmem:[%s7 + $0x18] sm:$0xff]
      %1224 = vset.pattern.permute.xlu0 0
      %1225 = vperm.xlu0 %1224, %v1219
      %v1226 = vpop.permute.xlu0 %1225
      %1229 = vset.pattern.permute.xlu0 0
      %1230 = vperm.xlu0 %1229, %v1220
      %v1231 = vpop.permute.xlu0 %1230
      %1234 = vset.pattern.permute.xlu0 0
      %1235 = vperm.xlu0 %1234, %v1221
      %v1236 = vpop.permute.xlu0 %1235
      %1239 = vset.pattern.permute.xlu0 0
      %1240 = vperm.xlu0 %1239, %v1222
      %v1241 = vpop.permute.xlu0 %1240
      %v1244 = vsel %vm799, %v1215, 0
      %v1247 = vsel %vm799, %v1216, 0
      %v1250 = vsel %vm799, %v1217, 0
      %v1253 = vsel %vm799, %v1218, 0
      %1255 = vmatprep.subr.mxu0 0.0
      %1256 = vmatpush1.xpose.msra.mxu0 0.0
      %1257 = vmatprep.subr.mxu0 0.0
      %1258 = vmatpush1.xpose.msra.mxu0 0.0
      %1259 = vmatprep.subr.mxu0 0.0
      %1260 = vmatpush1.xpose.msra.mxu0 0.0
      %1261 = vmatprep.subr.mxu0 0.0
      %1262 = vmatpush1.xpose.msra.mxu0 0.0
      %1263 = vmatprep.subr.mxu0 0.0
      %1264 = vmatpush1.xpose.msra.mxu0 0.0
      %1265 = vmatprep.subr.mxu0 0.0
      %1266 = vmatpush1.xpose.msra.mxu0 0.0
      %1267 = vmatprep.subr.mxu0 0.0
      %1268 = vmatpush1.xpose.msra.mxu0 0.0
      %1269 = vmatprep.subr.mxu0 0.0
      %1270 = vmatpush1.xpose.msra.mxu0 0.0
      %1271 = vmatprep.subr.mxu0 0.0
      %1272 = vmatpush1.xpose.msra.mxu0 %v1096
      %1273 = vmatprep.subr.mxu0 0.0
      %1274 = vmatpush1.xpose.msra.mxu0 %v1093
      %1275 = vmatprep.subr.mxu0 0.0
      %1276 = vmatpush1.xpose.msra.mxu0 %v1090
      %1277 = vmatprep.subr.mxu0 0.0
      %1278 = vmatpush1.xpose.msra.mxu0 %v1087
      %1279 = vmatprep.subr.mxu0 0.0
      %1280 = vmatpush1.xpose.msra.mxu0 %v1084
      %1281 = vmatprep.subr.mxu0 0.0
      %1282 = vmatpush1.xpose.msra.mxu0 %v1081
      %1283 = vmatprep.subr.mxu0 0.0
      %1284 = vmatpush1.xpose.msra.mxu0 %v1078
      %1285 = vmatprep.subr.mxu0 0.0
      %1286 = vmatpush1.xpose.msra.mxu0 %v1075
      %1287 = vmatprep.subr.mxu0 0.0
      %1288 = vmatpush2.xpose.msra.mxu0 0.0
      %1289 = vmatprep.subr.mxu0 0.0
      %1290 = vmatpush2.xpose.msra.mxu0 0.0
      %1291 = vmatprep.subr.mxu0 0.0
      %1292 = vmatpush2.xpose.msra.mxu0 0.0
      %1293 = vmatprep.subr.mxu0 0.0
      %1294 = vmatpush2.xpose.msra.mxu0 0.0
      %1295 = vmatprep.subr.mxu0 0.0
      %1296 = vmatpush2.xpose.msra.mxu0 0.0
      %1297 = vmatprep.subr.mxu0 0.0
      %1298 = vmatpush2.xpose.msra.mxu0 0.0
      %1299 = vmatprep.subr.mxu0 0.0
      %1300 = vmatpush2.xpose.msra.mxu0 0.0
      %1301 = vmatprep.subr.mxu0 0.0
      %1302 = vmatpush2.xpose.msra.mxu0 0.0
      %1303 = vmatprep.subr.mxu0 0.0
      %1304 = vmatpush2.xpose.msra.mxu0 0.0
      %1305 = vmatprep.subr.mxu0 0.0
      %1306 = vmatpush2.xpose.msra.mxu0 0.0
      %1307 = vmatprep.subr.mxu0 0.0
      %1308 = vmatpush2.xpose.msra.mxu0 0.0
      %1309 = vmatprep.subr.mxu0 0.0
      %1310 = vmatpush2.xpose.msra.mxu0 0.0
      %1311 = vmatprep.subr.mxu0 0.0
      %1312 = vmatpush2.xpose.msra.mxu0 0.0
      %1313 = vmatprep.subr.mxu0 0.0
      %1314 = vmatpush2.xpose.msra.mxu0 0.0
      %1315 = vmatprep.subr.mxu0 0.0
      %1316 = vmatpush2.xpose.msra.mxu0 0.0
      %1317 = vmatprep.subr.mxu0 0.0
      %1318 = vmatpush2.xpose.msra.mxu0 0.0
      %1319 = vmatprep.mubr.f32.mxu0 0.0
      %1320 = vmatmul.mubr.f32.gmra.mxu0 %v1244
      %v1321 = vpop.f32.mrf.mxu0
      %v1322 = vadd.f32 %v1226, %v1321
      %v1323 = vpop.f32.mrf.mxu0
      %1324 = vmatprep.mubr.f32.mxu0 0.0
      %1325 = vmatmul.mubr.f32.gmra.mxu0 %v1247
      %v1326 = vpop.f32.mrf.mxu0
      %v1327 = vadd.f32 %v1231, %v1326
      %v1328 = vpop.f32.mrf.mxu0
      %1329 = vmatprep.mubr.f32.mxu0 0.0
      %1330 = vmatmul.mubr.f32.gmra.mxu0 %v1250
      %v1331 = vpop.f32.mrf.mxu0
      %v1332 = vadd.f32 %v1236, %v1331
      %v1333 = vpop.f32.mrf.mxu0
      %1334 = vmatprep.mubr.f32.mxu0 0.0
      %1335 = vmatmul.mubr.f32.gmra.mxu0 %v1253
      %v1336 = vpop.f32.mrf.mxu0
      %v1337 = vadd.f32 %v1241, %v1336
      %v1338 = vpop.f32.mrf.mxu0
      %1339 = vdwg.mxu0
      %vm1340 = vcmask 64512
      %v1342 = vsel %vm1340, %v1177, 0
      %v1345 = vsel %vm1340, %v1182, 0
      %v1348 = vsel %vm1340, %v1187, 0
      %v1351 = vsel %vm1340, %v1192, 0
      %v1354 = vsel %vm1340, %v1197, 0
      %v1357 = vsel %vm1340, %v1202, 0
      %v1360 = vsel %vm1340, %v1207, 0
      %v1363 = vsel %vm1340, %v1212, 0
      %1365 = vmatprep.subr.mxu0 0.0
      %1366 = vmatpush1.msra.mxu0 0.0
      %1367 = vmatprep.subr.mxu0 0.0
      %1368 = vmatpush1.msra.mxu0 0.0
      %1369 = vmatprep.subr.mxu0 0.0
      %1370 = vmatpush1.msra.mxu0 0.0
      %1371 = vmatprep.subr.mxu0 0.0
      %1372 = vmatpush1.msra.mxu0 0.0
      %1373 = vmatprep.subr.mxu0 0.0
      %1374 = vmatpush1.msra.mxu0 0.0
      %1375 = vmatprep.subr.mxu0 0.0
      %1376 = vmatpush1.msra.mxu0 0.0
      %1377 = vmatprep.subr.mxu0 0.0
      %1378 = vmatpush1.msra.mxu0 0.0
      %1379 = vmatprep.subr.mxu0 0.0
      %1380 = vmatpush1.msra.mxu0 0.0
      %1381 = vmatprep.subr.mxu0 0.0
      %1382 = vmatpush1.msra.mxu0 0.0
      %1383 = vmatprep.subr.mxu0 0.0
      %1384 = vmatpush1.msra.mxu0 0.0
      %1385 = vmatprep.subr.mxu0 0.0
      %1386 = vmatpush1.msra.mxu0 0.0
      %1387 = vmatprep.subr.mxu0 0.0
      %1388 = vmatpush1.msra.mxu0 0.0
      %1389 = vmatprep.subr.mxu0 0.0
      %1390 = vmatpush1.msra.mxu0 0.0
      %1391 = vmatprep.subr.mxu0 0.0
      %1392 = vmatpush1.msra.mxu0 0.0
      %1393 = vmatprep.subr.mxu0 0.0
      %1394 = vmatpush1.msra.mxu0 0.0
      %1395 = vmatprep.subr.mxu0 %v1043
      %1396 = vmatpush1.msra.mxu0 %v1041
      %1397 = vmatprep.subr.mxu0 0.0
      %1398 = vmatpush2.msra.mxu0 0.0
      %1399 = vmatprep.subr.mxu0 0.0
      %1400 = vmatpush2.msra.mxu0 0.0
      %1401 = vmatprep.subr.mxu0 0.0
      %1402 = vmatpush2.msra.mxu0 0.0
      %1403 = vmatprep.subr.mxu0 0.0
      %1404 = vmatpush2.msra.mxu0 0.0
      %1405 = vmatprep.subr.mxu0 0.0
      %1406 = vmatpush2.msra.mxu0 0.0
      %1407 = vmatprep.subr.mxu0 0.0
      %1408 = vmatpush2.msra.mxu0 0.0
      %1409 = vmatprep.subr.mxu0 0.0
      %1410 = vmatpush2.msra.mxu0 0.0
      %1411 = vmatprep.subr.mxu0 0.0
      %1412 = vmatpush2.msra.mxu0 0.0
      %1413 = vmatprep.subr.mxu0 0.0
      %1414 = vmatpush2.msra.mxu0 0.0
      %1415 = vmatprep.subr.mxu0 0.0
      %1416 = vmatpush2.msra.mxu0 0.0
      %1417 = vmatprep.subr.mxu0 0.0
      %1418 = vmatpush2.msra.mxu0 0.0
      %1419 = vmatprep.subr.mxu0 0.0
      %1420 = vmatpush2.msra.mxu0 0.0
      %1421 = vmatprep.subr.mxu0 0.0
      %1422 = vmatpush2.msra.mxu0 0.0
      %1423 = vmatprep.subr.mxu0 0.0
      %1424 = vmatpush2.msra.mxu0 0.0
      %1425 = vmatprep.subr.mxu0 0.0
      %1426 = vmatpush2.msra.mxu0 0.0
      %1427 = vmatprep.subr.mxu0 0.0
      %1428 = vmatpush2.msra.mxu0 0.0
      %1429 = vmatprep.mubr.f32.mxu0 0.0
      %1430 = vmatmul.mubr.f32.gmra.mxu0 %v1342
      %v1431 = vpop.f32.mrf.mxu0
      %v1432 = vadd.f32 0.0, %v1431
      %v1433 = vpop.f32.mrf.mxu0
      %v1434 = vadd.f32 0.0, %v1433
      %1435 = vmatprep.mubr.f32.mxu0 0.0
      %1436 = vmatmul.mubr.f32.gmra.mxu0 %v1345
      %v1437 = vpop.f32.mrf.mxu0
      %v1438 = vadd.f32 0.0, %v1437
      %v1439 = vpop.f32.mrf.mxu0
      %v1440 = vadd.f32 0.0, %v1439
      %1441 = vmatprep.mubr.f32.mxu0 0.0
      %1442 = vmatmul.mubr.f32.gmra.mxu0 %v1348
      %v1443 = vpop.f32.mrf.mxu0
      %v1444 = vadd.f32 0.0, %v1443
      %v1445 = vpop.f32.mrf.mxu0
      %v1446 = vadd.f32 0.0, %v1445
      %1447 = vmatprep.mubr.f32.mxu0 0.0
      %1448 = vmatmul.mubr.f32.gmra.mxu0 %v1351
      %v1449 = vpop.f32.mrf.mxu0
      %v1450 = vadd.f32 0.0, %v1449
      %v1451 = vpop.f32.mrf.mxu0
      %v1452 = vadd.f32 0.0, %v1451
      %1453 = vmatprep.mubr.f32.mxu0 0.0
      %1454 = vmatmul.mubr.f32.gmra.mxu0 %v1354
      %v1455 = vpop.f32.mrf.mxu0
      %v1456 = vadd.f32 0.0, %v1455
      %v1457 = vpop.f32.mrf.mxu0
      %v1458 = vadd.f32 0.0, %v1457
      %1459 = vmatprep.mubr.f32.mxu0 0.0
      %1460 = vmatmul.mubr.f32.gmra.mxu0 %v1357
      %v1461 = vpop.f32.mrf.mxu0
      %v1462 = vadd.f32 0.0, %v1461
      %v1463 = vpop.f32.mrf.mxu0
      %v1464 = vadd.f32 0.0, %v1463
      %1465 = vmatprep.mubr.f32.mxu0 0.0
      %1466 = vmatmul.mubr.f32.gmra.mxu0 %v1360
      %v1467 = vpop.f32.mrf.mxu0
      %v1468 = vadd.f32 0.0, %v1467
      %v1469 = vpop.f32.mrf.mxu0
      %v1470 = vadd.f32 0.0, %v1469
      %1471 = vmatprep.mubr.f32.mxu0 0.0
      %1472 = vmatmul.mubr.f32.gmra.mxu0 %v1363
      %v1473 = vpop.f32.mrf.mxu0
      %v1474 = vadd.f32 0.0, %v1473
      %v1475 = vpop.f32.mrf.mxu0
      %v1476 = vadd.f32 0.0, %v1475
      %1477 = vdwg.mxu0
      %v1478 = vmax.f32 %v1432, %v1444
      %v1479 = vmax.f32 %v1438, %v1450
      %v1480 = vmax.f32 %v1478, %v1456
      %v1481 = vmax.f32 %v1479, %v1462
      %v1482 = vmax.f32 %v1480, %v1468
      %v1483 = vmax.f32 %v1481, %v1474
      %v1484 = vmax.f32 %v1482, %v1483
      %v1485 = vrot.slane %v1484, 4
      %v1486 = vmax.f32 %v1484, %v1485
      %v1487 = vrot.slane %v1486, 2
      %v1488 = vmax.f32 %v1486, %v1487
      %v1489 = vrot.slane %v1488, 1
      %v1490 = vmax.f32 %v1488, %v1489
      %v1491 = vmax.f32 %v1434, %v1446
      %v1492 = vmax.f32 %v1440, %v1452
      %v1493 = vmax.f32 %v1491, %v1458
      %v1494 = vmax.f32 %v1492, %v1464
      %v1495 = vmax.f32 %v1493, %v1470
      %v1496 = vmax.f32 %v1494, %v1476
      %v1497 = vmax.f32 %v1495, %v1496
      %v1498 = vrot.slane %v1497, 4
      %v1499 = vmax.f32 %v1497, %v1498
      %v1500 = vrot.slane %v1499, 2
      %v1501 = vmax.f32 %v1499, %v1500
      %v1502 = vrot.slane %v1501, 1
      %v1503 = vmax.f32 %v1501, %v1502
      %v1504 = vsub.f32 %v1432, %v1490
      %v1505 = vsub.f32 %v1434, %v1503
      %v1506 = vsub.f32 %v1438, %v1490
      %v1507 = vsub.f32 %v1440, %v1503
      %v1508 = vsub.f32 %v1444, %v1490
      %v1509 = vsub.f32 %v1446, %v1503
      %v1510 = vsub.f32 %v1450, %v1490
      %v1511 = vsub.f32 %v1452, %v1503
      %v1512 = vsub.f32 %v1456, %v1490
      %v1513 = vsub.f32 %v1458, %v1503
      %v1514 = vsub.f32 %v1462, %v1490
      %v1515 = vsub.f32 %v1464, %v1503
      %v1516 = vsub.f32 %v1468, %v1490
      %v1517 = vsub.f32 %v1470, %v1503
      %v1518 = vsub.f32 %v1474, %v1490
      %v1519 = vsub.f32 %v1476, %v1503
      %v1520 = vmul.f32 %v1504, 1.442695
      %v1521 = vpow.pop %v1520
      %v1522 = vmul.f32 %v1505, 1.442695
      %v1523 = vpow.pop %v1522
      %v1524 = vmul.f32 %v1506, 1.442695
      %v1525 = vpow.pop %v1524
      %v1526 = vmul.f32 %v1507, 1.442695
      %v1527 = vpow.pop %v1526
      %v1528 = vmul.f32 %v1508, 1.442695
      %v1529 = vpow.pop %v1528
      %v1530 = vmul.f32 %v1509, 1.442695
      %v1531 = vpow.pop %v1530
      %v1532 = vmul.f32 %v1510, 1.442695
      %v1533 = vpow.pop %v1532
      %v1534 = vmul.f32 %v1511, 1.442695
      %v1535 = vpow.pop %v1534
      %v1536 = vmul.f32 %v1512, 1.442695
      %v1537 = vpow.pop %v1536
      %v1538 = vmul.f32 %v1513, 1.442695
      %v1539 = vpow.pop %v1538
      %v1540 = vmul.f32 %v1514, 1.442695
      %v1541 = vpow.pop %v1540
      %v1542 = vmul.f32 %v1515, 1.442695
      %v1543 = vpow.pop %v1542
      %v1544 = vmul.f32 %v1516, 1.442695
      %v1545 = vpow.pop %v1544
      %v1546 = vmul.f32 %v1517, 1.442695
      %v1547 = vpow.pop %v1546
      %v1548 = vmul.f32 %v1518, 1.442695
      %v1549 = vpow.pop %v1548
      %v1550 = vmul.f32 %v1519, 1.442695
      %v1551 = vpow.pop %v1550
      %v1552 = vadd.f32 %v1521, %v1525
      %v1553 = vadd.f32 %v1552, %v1529
      %v1554 = vadd.f32 %v1553, %v1533
      %v1555 = vadd.f32 %v1554, %v1537
      %v1556 = vadd.f32 %v1555, %v1541
      %v1557 = vadd.f32 %v1556, %v1545
      %v1558 = vadd.f32 %v1557, %v1549
      %v1559 = vrot.slane %v1558, 4
      %v1560 = vadd.f32 %v1558, %v1559
      %v1561 = vrot.slane %v1560, 2
      %v1562 = vadd.f32 %v1560, %v1561
      %v1563 = vrot.slane %v1562, 1
      %v1564 = vadd.f32 %v1562, %v1563
      %v1565 = vadd.f32 %v1523, %v1527
      %v1566 = vadd.f32 %v1565, %v1531
      %v1567 = vadd.f32 %v1566, %v1535
      %v1568 = vadd.f32 %v1567, %v1539
      %v1569 = vadd.f32 %v1568, %v1543
      %v1570 = vadd.f32 %v1569, %v1547
      %v1571 = vadd.f32 %v1570, %v1551
      %v1572 = vrot.slane %v1571, 4
      %v1573 = vadd.f32 %v1571, %v1572
      %v1574 = vrot.slane %v1573, 2
      %v1575 = vadd.f32 %v1573, %v1574
      %v1576 = vrot.slane %v1575, 1
      %v1577 = vadd.f32 %v1575, %v1576
      %v1578 = vrcp.pop %v1564
      %v1579 = vrcp.pop %v1577
      %v1580 = vmul.f32 %v1521, %v1578
      %v1581 = vmul.f32 %v1523, %v1579
      %v1582 = vmul.f32 %v1525, %v1578
      %v1583 = vmul.f32 %v1527, %v1579
      %v1584 = vmul.f32 %v1529, %v1578
      %v1585 = vmul.f32 %v1531, %v1579
      %v1586 = vmul.f32 %v1533, %v1578
      %v1587 = vmul.f32 %v1535, %v1579
      %v1588 = vmul.f32 %v1537, %v1578
      %v1589 = vmul.f32 %v1539, %v1579
      %v1590 = vmul.f32 %v1541, %v1578
      %v1591 = vmul.f32 %v1543, %v1579
      %v1592 = vmul.f32 %v1545, %v1578
      %v1593 = vmul.f32 %v1547, %v1579
      %v1594 = vmul.f32 %v1549, %v1578
      %v1595 = vmul.f32 %v1551, %v1579
      %vm1596 = vcmask 523264
      %v1598 = vsel %vm1596, %v1322, 0
      %1600 = vmatprep.subr.mxu0 0.0
      %1601 = vmatpush1.msra.mxu0 0.0
      %1602 = vmatprep.subr.mxu0 0.0
      %1603 = vmatpush1.msra.mxu0 0.0
      %1604 = vmatprep.subr.mxu0 0.0
      %1605 = vmatpush1.msra.mxu0 0.0
      %1606 = vmatprep.subr.mxu0 0.0
      %1607 = vmatpush1.msra.mxu0 0.0
      %1608 = vmatprep.subr.mxu0 0.0
      %1609 = vmatpush1.msra.mxu0 0.0
      %1610 = vmatprep.subr.mxu0 0.0
      %1611 = vmatpush1.msra.mxu0 0.0
      %1612 = vmatprep.subr.mxu0 0.0
      %1613 = vmatpush1.msra.mxu0 0.0
      %1614 = vmatprep.subr.mxu0 0.0
      %1615 = vmatpush1.msra.mxu0 0.0
      %1616 = vmatprep.subr.mxu0 %v1595
      %1617 = vmatpush1.msra.mxu0 %v1594
      %1618 = vmatprep.subr.mxu0 %v1593
      %1619 = vmatpush1.msra.mxu0 %v1592
      %1620 = vmatprep.subr.mxu0 %v1591
      %1621 = vmatpush1.msra.mxu0 %v1590
      %1622 = vmatprep.subr.mxu0 %v1589
      %1623 = vmatpush1.msra.mxu0 %v1588
      %1624 = vmatprep.subr.mxu0 %v1587
      %1625 = vmatpush1.msra.mxu0 %v1586
      %1626 = vmatprep.subr.mxu0 %v1585
      %1627 = vmatpush1.msra.mxu0 %v1584
      %1628 = vmatprep.subr.mxu0 %v1583
      %1629 = vmatpush1.msra.mxu0 %v1582
      %1630 = vmatprep.subr.mxu0 %v1581
      %1631 = vmatpush1.msra.mxu0 %v1580
      %1632 = vmatprep.subr.mxu0 0.0
      %1633 = vmatpush2.msra.mxu0 0.0
      %1634 = vmatprep.subr.mxu0 0.0
      %1635 = vmatpush2.msra.mxu0 0.0
      %1636 = vmatprep.subr.mxu0 0.0
      %1637 = vmatpush2.msra.mxu0 0.0
      %1638 = vmatprep.subr.mxu0 0.0
      %1639 = vmatpush2.msra.mxu0 0.0
      %1640 = vmatprep.subr.mxu0 0.0
      %1641 = vmatpush2.msra.mxu0 0.0
      %1642 = vmatprep.subr.mxu0 0.0
      %1643 = vmatpush2.msra.mxu0 0.0
      %1644 = vmatprep.subr.mxu0 0.0
      %1645 = vmatpush2.msra.mxu0 0.0
      %1646 = vmatprep.subr.mxu0 0.0
      %1647 = vmatpush2.msra.mxu0 0.0
      %1648 = vmatprep.subr.mxu0 0.0
      %1649 = vmatpush2.msra.mxu0 0.0
      %1650 = vmatprep.subr.mxu0 0.0
      %1651 = vmatpush2.msra.mxu0 0.0
      %1652 = vmatprep.subr.mxu0 0.0
      %1653 = vmatpush2.msra.mxu0 0.0
      %1654 = vmatprep.subr.mxu0 0.0
      %1655 = vmatpush2.msra.mxu0 0.0
      %1656 = vmatprep.subr.mxu0 0.0
      %1657 = vmatpush2.msra.mxu0 0.0
      %1658 = vmatprep.subr.mxu0 0.0
      %1659 = vmatpush2.msra.mxu0 0.0
      %1660 = vmatprep.subr.mxu0 0.0
      %1661 = vmatpush2.msra.mxu0 0.0
      %1662 = vmatprep.subr.mxu0 0.0
      %1663 = vmatpush2.msra.mxu0 0.0
      %1664 = vmatprep.mubr.f32.mxu0 0.0
      %1665 = vmatmul.mubr.f32.gmra.mxu0 %v1598
      %v1666 = vpop.f32.mrf.mxu0
      %v1667 = vadd.f32 0.0, %v1666
      %v1668 = vpop.f32.mrf.mxu0
      %v1669 = vadd.f32 0.0, %v1668
      %1670 = vdwg.mxu0
      %1671 = vrot.lane.b32.xlu0 %v1177, 120
      %v1672 = vpop.permute.xlu0 %1671
      %1673 = vrot.lane.b32.xlu0 %v1182, 120
      %v1674 = vpop.permute.xlu0 %1673
      %1675 = vrot.lane.b32.xlu0 %v1187, 120
      %v1676 = vpop.permute.xlu0 %1675
      %1677 = vrot.lane.b32.xlu0 %v1192, 120
      %v1678 = vpop.permute.xlu0 %1677
      %1679 = vrot.lane.b32.xlu0 %v1197, 120
      %v1680 = vpop.permute.xlu0 %1679
      %1681 = vrot.lane.b32.xlu0 %v1202, 120
      %v1682 = vpop.permute.xlu0 %1681
      %1683 = vrot.lane.b32.xlu0 %v1207, 120
      %v1684 = vpop.permute.xlu0 %1683
      %1685 = vrot.lane.b32.xlu0 %v1212, 120
      %v1686 = vpop.permute.xlu0 %1685
      %v1687 = vsel %vm1340, %v1672, 0
      %v1689 = vsel %vm1340, %v1674, 0
      %v1691 = vsel %vm1340, %v1676, 0
      %v1693 = vsel %vm1340, %v1678, 0
      %v1695 = vsel %vm1340, %v1680, 0
      %v1697 = vsel %vm1340, %v1682, 0
      %v1699 = vsel %vm1340, %v1684, 0
      %v1701 = vsel %vm1340, %v1686, 0
      %1703 = vmatprep.subr.mxu0 0.0
      %1704 = vmatpush1.msra.mxu0 0.0
      %1705 = vmatprep.subr.mxu0 0.0
      %1706 = vmatpush1.msra.mxu0 0.0
      %1707 = vmatprep.subr.mxu0 0.0
      %1708 = vmatpush1.msra.mxu0 0.0
      %1709 = vmatprep.subr.mxu0 0.0
      %1710 = vmatpush1.msra.mxu0 0.0
      %1711 = vmatprep.subr.mxu0 0.0
      %1712 = vmatpush1.msra.mxu0 0.0
      %1713 = vmatprep.subr.mxu0 0.0
      %1714 = vmatpush1.msra.mxu0 0.0
      %1715 = vmatprep.subr.mxu0 0.0
      %1716 = vmatpush1.msra.mxu0 0.0
      %1717 = vmatprep.subr.mxu0 0.0
      %1718 = vmatpush1.msra.mxu0 0.0
      %1719 = vmatprep.subr.mxu0 0.0
      %1720 = vmatpush1.msra.mxu0 0.0
      %1721 = vmatprep.subr.mxu0 0.0
      %1722 = vmatpush1.msra.mxu0 0.0
      %1723 = vmatprep.subr.mxu0 0.0
      %1724 = vmatpush1.msra.mxu0 0.0
      %1725 = vmatprep.subr.mxu0 0.0
      %1726 = vmatpush1.msra.mxu0 0.0
      %1727 = vmatprep.subr.mxu0 0.0
      %1728 = vmatpush1.msra.mxu0 0.0
      %1729 = vmatprep.subr.mxu0 0.0
      %1730 = vmatpush1.msra.mxu0 0.0
      %1731 = vmatprep.subr.mxu0 0.0
      %1732 = vmatpush1.msra.mxu0 0.0
      %1733 = vmatprep.subr.mxu0 %v1049
      %1734 = vmatpush1.msra.mxu0 %v1047
      %1735 = vmatprep.subr.mxu0 0.0
      %1736 = vmatpush2.msra.mxu0 0.0
      %1737 = vmatprep.subr.mxu0 0.0
      %1738 = vmatpush2.msra.mxu0 0.0
      %1739 = vmatprep.subr.mxu0 0.0
      %1740 = vmatpush2.msra.mxu0 0.0
      %1741 = vmatprep.subr.mxu0 0.0
      %1742 = vmatpush2.msra.mxu0 0.0
      %1743 = vmatprep.subr.mxu0 0.0
      %1744 = vmatpush2.msra.mxu0 0.0
      %1745 = vmatprep.subr.mxu0 0.0
      %1746 = vmatpush2.msra.mxu0 0.0
      %1747 = vmatprep.subr.mxu0 0.0
      %1748 = vmatpush2.msra.mxu0 0.0
      %1749 = vmatprep.subr.mxu0 0.0
      %1750 = vmatpush2.msra.mxu0 0.0
      %1751 = vmatprep.subr.mxu0 0.0
      %1752 = vmatpush2.msra.mxu0 0.0
      %1753 = vmatprep.subr.mxu0 0.0
      %1754 = vmatpush2.msra.mxu0 0.0
      %1755 = vmatprep.subr.mxu0 0.0
      %1756 = vmatpush2.msra.mxu0 0.0
      %1757 = vmatprep.subr.mxu0 0.0
      %1758 = vmatpush2.msra.mxu0 0.0
      %1759 = vmatprep.subr.mxu0 0.0
      %1760 = vmatpush2.msra.mxu0 0.0
      %1761 = vmatprep.subr.mxu0 0.0
      %1762 = vmatpush2.msra.mxu0 0.0
      %1763 = vmatprep.subr.mxu0 0.0
      %1764 = vmatpush2.msra.mxu0 0.0
      %1765 = vmatprep.subr.mxu0 0.0
      %1766 = vmatpush2.msra.mxu0 0.0
      %1767 = vmatprep.mubr.f32.mxu0 0.0
      %1768 = vmatmul.mubr.f32.gmra.mxu0 %v1687
      %v1769 = vpop.f32.mrf.mxu0
      %v1770 = vadd.f32 0.0, %v1769
      %v1771 = vpop.f32.mrf.mxu0
      %v1772 = vadd.f32 0.0, %v1771
      %1773 = vmatprep.mubr.f32.mxu0 0.0
      %1774 = vmatmul.mubr.f32.gmra.mxu0 %v1689
      %v1775 = vpop.f32.mrf.mxu0
      %v1776 = vadd.f32 0.0, %v1775
      %v1777 = vpop.f32.mrf.mxu0
      %v1778 = vadd.f32 0.0, %v1777
      %1779 = vmatprep.mubr.f32.mxu0 0.0
      %1780 = vmatmul.mubr.f32.gmra.mxu0 %v1691
      %v1781 = vpop.f32.mrf.mxu0
      %v1782 = vadd.f32 0.0, %v1781
      %v1783 = vpop.f32.mrf.mxu0
      %v1784 = vadd.f32 0.0, %v1783
      %1785 = vmatprep.mubr.f32.mxu0 0.0
      %1786 = vmatmul.mubr.f32.gmra.mxu0 %v1693
      %v1787 = vpop.f32.mrf.mxu0
      %v1788 = vadd.f32 0.0, %v1787
      %v1789 = vpop.f32.mrf.mxu0
      %v1790 = vadd.f32 0.0, %v1789
      %1791 = vmatprep.mubr.f32.mxu0 0.0
      %1792 = vmatmul.mubr.f32.gmra.mxu0 %v1695
      %v1793 = vpop.f32.mrf.mxu0
      %v1794 = vadd.f32 0.0, %v1793
      %v1795 = vpop.f32.mrf.mxu0
      %v1796 = vadd.f32 0.0, %v1795
      %1797 = vmatprep.mubr.f32.mxu0 0.0
      %1798 = vmatmul.mubr.f32.gmra.mxu0 %v1697
      %v1799 = vpop.f32.mrf.mxu0
      %v1800 = vadd.f32 0.0, %v1799
      %v1801 = vpop.f32.mrf.mxu0
      %v1802 = vadd.f32 0.0, %v1801
      %1803 = vmatprep.mubr.f32.mxu0 0.0
      %1804 = vmatmul.mubr.f32.gmra.mxu0 %v1699
      %v1805 = vpop.f32.mrf.mxu0
      %v1806 = vadd.f32 0.0, %v1805
      %v1807 = vpop.f32.mrf.mxu0
      %v1808 = vadd.f32 0.0, %v1807
      %1809 = vmatprep.mubr.f32.mxu0 0.0
      %1810 = vmatmul.mubr.f32.gmra.mxu0 %v1701
      %v1811 = vpop.f32.mrf.mxu0
      %v1812 = vadd.f32 0.0, %v1811
      %v1813 = vpop.f32.mrf.mxu0
      %v1814 = vadd.f32 0.0, %v1813
      %1815 = vdwg.mxu0
      %v1816 = vmax.f32 %v1770, %v1782
      %v1817 = vmax.f32 %v1776, %v1788
      %v1818 = vmax.f32 %v1816, %v1794
      %v1819 = vmax.f32 %v1817, %v1800
      %v1820 = vmax.f32 %v1818, %v1806
      %v1821 = vmax.f32 %v1819, %v1812
      %v1822 = vmax.f32 %v1820, %v1821
      %v1823 = vrot.slane %v1822, 4
      %v1824 = vmax.f32 %v1822, %v1823
      %v1825 = vrot.slane %v1824, 2
      %v1826 = vmax.f32 %v1824, %v1825
      %v1827 = vrot.slane %v1826, 1
      %v1828 = vmax.f32 %v1826, %v1827
      %v1829 = vmax.f32 %v1772, %v1784
      %v1830 = vmax.f32 %v1778, %v1790
      %v1831 = vmax.f32 %v1829, %v1796
      %v1832 = vmax.f32 %v1830, %v1802
      %v1833 = vmax.f32 %v1831, %v1808
      %v1834 = vmax.f32 %v1832, %v1814
      %v1835 = vmax.f32 %v1833, %v1834
      %v1836 = vrot.slane %v1835, 4
      %v1837 = vmax.f32 %v1835, %v1836
      %v1838 = vrot.slane %v1837, 2
      %v1839 = vmax.f32 %v1837, %v1838
      %v1840 = vrot.slane %v1839, 1
      %v1841 = vmax.f32 %v1839, %v1840
      %v1842 = vsub.f32 %v1770, %v1828
      %v1843 = vsub.f32 %v1772, %v1841
      %v1844 = vsub.f32 %v1776, %v1828
      %v1845 = vsub.f32 %v1778, %v1841
      %v1846 = vsub.f32 %v1782, %v1828
      %v1847 = vsub.f32 %v1784, %v1841
      %v1848 = vsub.f32 %v1788, %v1828
      %v1849 = vsub.f32 %v1790, %v1841
      %v1850 = vsub.f32 %v1794, %v1828
      %v1851 = vsub.f32 %v1796, %v1841
      %v1852 = vsub.f32 %v1800, %v1828
      %v1853 = vsub.f32 %v1802, %v1841
      %v1854 = vsub.f32 %v1806, %v1828
      %v1855 = vsub.f32 %v1808, %v1841
      %v1856 = vsub.f32 %v1812, %v1828
      %v1857 = vsub.f32 %v1814, %v1841
      %v1858 = vmul.f32 %v1842, 1.442695
      %v1859 = vpow.pop %v1858
      %v1860 = vmul.f32 %v1843, 1.442695
      %v1861 = vpow.pop %v1860
      %v1862 = vmul.f32 %v1844, 1.442695
      %v1863 = vpow.pop %v1862
      %v1864 = vmul.f32 %v1845, 1.442695
      %v1865 = vpow.pop %v1864
      %v1866 = vmul.f32 %v1846, 1.442695
      %v1867 = vpow.pop %v1866
      %v1868 = vmul.f32 %v1847, 1.442695
      %v1869 = vpow.pop %v1868
      %v1870 = vmul.f32 %v1848, 1.442695
      %v1871 = vpow.pop %v1870
      %v1872 = vmul.f32 %v1849, 1.442695
      %v1873 = vpow.pop %v1872
      %v1874 = vmul.f32 %v1850, 1.442695
      %v1875 = vpow.pop %v1874
      %v1876 = vmul.f32 %v1851, 1.442695
      %v1877 = vpow.pop %v1876
      %v1878 = vmul.f32 %v1852, 1.442695
      %v1879 = vpow.pop %v1878
      %v1880 = vmul.f32 %v1853, 1.442695
      %v1881 = vpow.pop %v1880
      %v1882 = vmul.f32 %v1854, 1.442695
      %v1883 = vpow.pop %v1882
      %v1884 = vmul.f32 %v1855, 1.442695
      %v1885 = vpow.pop %v1884
      %v1886 = vmul.f32 %v1856, 1.442695
      %v1887 = vpow.pop %v1886
      %v1888 = vmul.f32 %v1857, 1.442695
      %v1889 = vpow.pop %v1888
      %v1890 = vadd.f32 %v1859, %v1863
      %v1891 = vadd.f32 %v1890, %v1867
      %v1892 = vadd.f32 %v1891, %v1871
      %v1893 = vadd.f32 %v1892, %v1875
      %v1894 = vadd.f32 %v1893, %v1879
      %v1895 = vadd.f32 %v1894, %v1883
      %v1896 = vadd.f32 %v1895, %v1887
      %v1897 = vrot.slane %v1896, 4
      %v1898 = vadd.f32 %v1896, %v1897
      %v1899 = vrot.slane %v1898, 2
      %v1900 = vadd.f32 %v1898, %v1899
      %v1901 = vrot.slane %v1900, 1
      %v1902 = vadd.f32 %v1900, %v1901
      %v1903 = vadd.f32 %v1861, %v1865
      %v1904 = vadd.f32 %v1903, %v1869
      %v1905 = vadd.f32 %v1904, %v1873
      %v1906 = vadd.f32 %v1905, %v1877
      %v1907 = vadd.f32 %v1906, %v1881
      %v1908 = vadd.f32 %v1907, %v1885
      %v1909 = vadd.f32 %v1908, %v1889
      %v1910 = vrot.slane %v1909, 4
      %v1911 = vadd.f32 %v1909, %v1910
      %v1912 = vrot.slane %v1911, 2
      %v1913 = vadd.f32 %v1911, %v1912
      %v1914 = vrot.slane %v1913, 1
      %v1915 = vadd.f32 %v1913, %v1914
      %v1916 = vrcp.pop %v1902
      %v1917 = vrcp.pop %v1915
      %v1918 = vmul.f32 %v1859, %v1916
      %v1919 = vmul.f32 %v1861, %v1917
      %v1920 = vmul.f32 %v1863, %v1916
      %v1921 = vmul.f32 %v1865, %v1917
      %v1922 = vmul.f32 %v1867, %v1916
      %v1923 = vmul.f32 %v1869, %v1917
      %v1924 = vmul.f32 %v1871, %v1916
      %v1925 = vmul.f32 %v1873, %v1917
      %v1926 = vmul.f32 %v1875, %v1916
      %v1927 = vmul.f32 %v1877, %v1917
      %v1928 = vmul.f32 %v1879, %v1916
      %v1929 = vmul.f32 %v1881, %v1917
      %v1930 = vmul.f32 %v1883, %v1916
      %v1931 = vmul.f32 %v1885, %v1917
      %v1932 = vmul.f32 %v1887, %v1916
      %v1933 = vmul.f32 %v1889, %v1917
      %v1935 = vsel %vm1596, %v1327, 0
      %1937 = vmatprep.subr.mxu0 0.0
      %1938 = vmatpush1.msra.mxu0 0.0
      %1939 = vmatprep.subr.mxu0 0.0
      %1940 = vmatpush1.msra.mxu0 0.0
      %1941 = vmatprep.subr.mxu0 0.0
      %1942 = vmatpush1.msra.mxu0 0.0
      %1943 = vmatprep.subr.mxu0 0.0
      %1944 = vmatpush1.msra.mxu0 0.0
      %1945 = vmatprep.subr.mxu0 0.0
      %1946 = vmatpush1.msra.mxu0 0.0
      %1947 = vmatprep.subr.mxu0 0.0
      %1948 = vmatpush1.msra.mxu0 0.0
      %1949 = vmatprep.subr.mxu0 0.0
      %1950 = vmatpush1.msra.mxu0 0.0
      %1951 = vmatprep.subr.mxu0 0.0
      %1952 = vmatpush1.msra.mxu0 0.0
      %1953 = vmatprep.subr.mxu0 %v1933
      %1954 = vmatpush1.msra.mxu0 %v1932
      %1955 = vmatprep.subr.mxu0 %v1931
      %1956 = vmatpush1.msra.mxu0 %v1930
      %1957 = vmatprep.subr.mxu0 %v1929
      %1958 = vmatpush1.msra.mxu0 %v1928
      %1959 = vmatprep.subr.mxu0 %v1927
      %1960 = vmatpush1.msra.mxu0 %v1926
      %1961 = vmatprep.subr.mxu0 %v1925
      %1962 = vmatpush1.msra.mxu0 %v1924
      %1963 = vmatprep.subr.mxu0 %v1923
      %1964 = vmatpush1.msra.mxu0 %v1922
      %1965 = vmatprep.subr.mxu0 %v1921
      %1966 = vmatpush1.msra.mxu0 %v1920
      %1967 = vmatprep.subr.mxu0 %v1919
      %1968 = vmatpush1.msra.mxu0 %v1918
      %1969 = vmatprep.subr.mxu0 0.0
      %1970 = vmatpush2.msra.mxu0 0.0
      %1971 = vmatprep.subr.mxu0 0.0
      %1972 = vmatpush2.msra.mxu0 0.0
      %1973 = vmatprep.subr.mxu0 0.0
      %1974 = vmatpush2.msra.mxu0 0.0
      %1975 = vmatprep.subr.mxu0 0.0
      %1976 = vmatpush2.msra.mxu0 0.0
      %1977 = vmatprep.subr.mxu0 0.0
      %1978 = vmatpush2.msra.mxu0 0.0
      %1979 = vmatprep.subr.mxu0 0.0
      %1980 = vmatpush2.msra.mxu0 0.0
      %1981 = vmatprep.subr.mxu0 0.0
      %1982 = vmatpush2.msra.mxu0 0.0
      %1983 = vmatprep.subr.mxu0 0.0
      %1984 = vmatpush2.msra.mxu0 0.0
      %1985 = vmatprep.subr.mxu0 0.0
      %1986 = vmatpush2.msra.mxu0 0.0
      %1987 = vmatprep.subr.mxu0 0.0
      %1988 = vmatpush2.msra.mxu0 0.0
      %1989 = vmatprep.subr.mxu0 0.0
      %1990 = vmatpush2.msra.mxu0 0.0
      %1991 = vmatprep.subr.mxu0 0.0
      %1992 = vmatpush2.msra.mxu0 0.0
      %1993 = vmatprep.subr.mxu0 0.0
      %1994 = vmatpush2.msra.mxu0 0.0
      %1995 = vmatprep.subr.mxu0 0.0
      %1996 = vmatpush2.msra.mxu0 0.0
      %1997 = vmatprep.subr.mxu0 0.0
      %1998 = vmatpush2.msra.mxu0 0.0
      %1999 = vmatprep.subr.mxu0 0.0
      %2000 = vmatpush2.msra.mxu0 0.0
      %2001 = vmatprep.mubr.f32.mxu0 0.0
      %2002 = vmatmul.mubr.f32.gmra.mxu0 %v1935
      %v2003 = vpop.f32.mrf.mxu0
      %v2004 = vadd.f32 0.0, %v2003
      %v2005 = vpop.f32.mrf.mxu0
      %v2006 = vadd.f32 0.0, %v2005
      %2007 = vdwg.mxu0
      %2008 = vrot.lane.b32.xlu0 %v1177, 112
      %v2009 = vpop.permute.xlu0 %2008
      %2010 = vrot.lane.b32.xlu0 %v1182, 112
      %v2011 = vpop.permute.xlu0 %2010
      %2012 = vrot.lane.b32.xlu0 %v1187, 112
      %v2013 = vpop.permute.xlu0 %2012
      %2014 = vrot.lane.b32.xlu0 %v1192, 112
      %v2015 = vpop.permute.xlu0 %2014
      %2016 = vrot.lane.b32.xlu0 %v1197, 112
      %v2017 = vpop.permute.xlu0 %2016
      %2018 = vrot.lane.b32.xlu0 %v1202, 112
      %v2019 = vpop.permute.xlu0 %2018
      %2020 = vrot.lane.b32.xlu0 %v1207, 112
      %v2021 = vpop.permute.xlu0 %2020
      %2022 = vrot.lane.b32.xlu0 %v1212, 112
      %v2023 = vpop.permute.xlu0 %2022
      %v2024 = vsel %vm1340, %v2009, 0
      %v2026 = vsel %vm1340, %v2011, 0
      %v2028 = vsel %vm1340, %v2013, 0
      %v2030 = vsel %vm1340, %v2015, 0
      %v2032 = vsel %vm1340, %v2017, 0
      %v2034 = vsel %vm1340, %v2019, 0
      %v2036 = vsel %vm1340, %v2021, 0
      %v2038 = vsel %vm1340, %v2023, 0
      %2040 = vmatprep.subr.mxu0 0.0
      %2041 = vmatpush1.msra.mxu0 0.0
      %2042 = vmatprep.subr.mxu0 0.0
      %2043 = vmatpush1.msra.mxu0 0.0
      %2044 = vmatprep.subr.mxu0 0.0
      %2045 = vmatpush1.msra.mxu0 0.0
      %2046 = vmatprep.subr.mxu0 0.0
      %2047 = vmatpush1.msra.mxu0 0.0
      %2048 = vmatprep.subr.mxu0 0.0
      %2049 = vmatpush1.msra.mxu0 0.0
      %2050 = vmatprep.subr.mxu0 0.0
      %2051 = vmatpush1.msra.mxu0 0.0
      %2052 = vmatprep.subr.mxu0 0.0
      %2053 = vmatpush1.msra.mxu0 0.0
      %2054 = vmatprep.subr.mxu0 0.0
      %2055 = vmatpush1.msra.mxu0 0.0
      %2056 = vmatprep.subr.mxu0 0.0
      %2057 = vmatpush1.msra.mxu0 0.0
      %2058 = vmatprep.subr.mxu0 0.0
      %2059 = vmatpush1.msra.mxu0 0.0
      %2060 = vmatprep.subr.mxu0 0.0
      %2061 = vmatpush1.msra.mxu0 0.0
      %2062 = vmatprep.subr.mxu0 0.0
      %2063 = vmatpush1.msra.mxu0 0.0
      %2064 = vmatprep.subr.mxu0 0.0
      %2065 = vmatpush1.msra.mxu0 0.0
      %2066 = vmatprep.subr.mxu0 0.0
      %2067 = vmatpush1.msra.mxu0 0.0
      %2068 = vmatprep.subr.mxu0 0.0
      %2069 = vmatpush1.msra.mxu0 0.0
      %2070 = vmatprep.subr.mxu0 %v1055
      %2071 = vmatpush1.msra.mxu0 %v1053
      %2072 = vmatprep.subr.mxu0 0.0
      %2073 = vmatpush2.msra.mxu0 0.0
      %2074 = vmatprep.subr.mxu0 0.0
      %2075 = vmatpush2.msra.mxu0 0.0
      %2076 = vmatprep.subr.mxu0 0.0
      %2077 = vmatpush2.msra.mxu0 0.0
      %2078 = vmatprep.subr.mxu0 0.0
      %2079 = vmatpush2.msra.mxu0 0.0
      %2080 = vmatprep.subr.mxu0 0.0
      %2081 = vmatpush2.msra.mxu0 0.0
      %2082 = vmatprep.subr.mxu0 0.0
      %2083 = vmatpush2.msra.mxu0 0.0
      %2084 = vmatprep.subr.mxu0 0.0
      %2085 = vmatpush2.msra.mxu0 0.0
      %2086 = vmatprep.subr.mxu0 0.0
      %2087 = vmatpush2.msra.mxu0 0.0
      %2088 = vmatprep.subr.mxu0 0.0
      %2089 = vmatpush2.msra.mxu0 0.0
      %2090 = vmatprep.subr.mxu0 0.0
      %2091 = vmatpush2.msra.mxu0 0.0
      %2092 = vmatprep.subr.mxu0 0.0
      %2093 = vmatpush2.msra.mxu0 0.0
      %2094 = vmatprep.subr.mxu0 0.0
      %2095 = vmatpush2.msra.mxu0 0.0
      %2096 = vmatprep.subr.mxu0 0.0
      %2097 = vmatpush2.msra.mxu0 0.0
      %2098 = vmatprep.subr.mxu0 0.0
      %2099 = vmatpush2.msra.mxu0 0.0
      %2100 = vmatprep.subr.mxu0 0.0
      %2101 = vmatpush2.msra.mxu0 0.0
      %2102 = vmatprep.subr.mxu0 0.0
      %2103 = vmatpush2.msra.mxu0 0.0
      %2104 = vmatprep.mubr.f32.mxu0 0.0
      %2105 = vmatmul.mubr.f32.gmra.mxu0 %v2024
      %v2106 = vpop.f32.mrf.mxu0
      %v2107 = vadd.f32 0.0, %v2106
      %v2108 = vpop.f32.mrf.mxu0
      %v2109 = vadd.f32 0.0, %v2108
      %2110 = vmatprep.mubr.f32.mxu0 0.0
      %2111 = vmatmul.mubr.f32.gmra.mxu0 %v2026
      %v2112 = vpop.f32.mrf.mxu0
      %v2113 = vadd.f32 0.0, %v2112
      %v2114 = vpop.f32.mrf.mxu0
      %v2115 = vadd.f32 0.0, %v2114
      %2116 = vmatprep.mubr.f32.mxu0 0.0
      %2117 = vmatmul.mubr.f32.gmra.mxu0 %v2028
      %v2118 = vpop.f32.mrf.mxu0
      %v2119 = vadd.f32 0.0, %v2118
      %v2120 = vpop.f32.mrf.mxu0
      %v2121 = vadd.f32 0.0, %v2120
      %2122 = vmatprep.mubr.f32.mxu0 0.0
      %2123 = vmatmul.mubr.f32.gmra.mxu0 %v2030
      %v2124 = vpop.f32.mrf.mxu0
      %v2125 = vadd.f32 0.0, %v2124
      %v2126 = vpop.f32.mrf.mxu0
      %v2127 = vadd.f32 0.0, %v2126
      %2128 = vmatprep.mubr.f32.mxu0 0.0
      %2129 = vmatmul.mubr.f32.gmra.mxu0 %v2032
      %v2130 = vpop.f32.mrf.mxu0
      %v2131 = vadd.f32 0.0, %v2130
      %v2132 = vpop.f32.mrf.mxu0
      %v2133 = vadd.f32 0.0, %v2132
      %2134 = vmatprep.mubr.f32.mxu0 0.0
      %2135 = vmatmul.mubr.f32.gmra.mxu0 %v2034
      %v2136 = vpop.f32.mrf.mxu0
      %v2137 = vadd.f32 0.0, %v2136
      %v2138 = vpop.f32.mrf.mxu0
      %v2139 = vadd.f32 0.0, %v2138
      %2140 = vmatprep.mubr.f32.mxu0 0.0
      %2141 = vmatmul.mubr.f32.gmra.mxu0 %v2036
      %v2142 = vpop.f32.mrf.mxu0
      %v2143 = vadd.f32 0.0, %v2142
      %v2144 = vpop.f32.mrf.mxu0
      %v2145 = vadd.f32 0.0, %v2144
      %2146 = vmatprep.mubr.f32.mxu0 0.0
      %2147 = vmatmul.mubr.f32.gmra.mxu0 %v2038
      %v2148 = vpop.f32.mrf.mxu0
      %v2149 = vadd.f32 0.0, %v2148
      %v2150 = vpop.f32.mrf.mxu0
      %v2151 = vadd.f32 0.0, %v2150
      %2152 = vdwg.mxu0
      %v2153 = vmax.f32 %v2107, %v2119
      %v2154 = vmax.f32 %v2113, %v2125
      %v2155 = vmax.f32 %v2153, %v2131
      %v2156 = vmax.f32 %v2154, %v2137
      %v2157 = vmax.f32 %v2155, %v2143
      %v2158 = vmax.f32 %v2156, %v2149
      %v2159 = vmax.f32 %v2157, %v2158
      %v2160 = vrot.slane %v2159, 4
      %v2161 = vmax.f32 %v2159, %v2160
      %v2162 = vrot.slane %v2161, 2
      %v2163 = vmax.f32 %v2161, %v2162
      %v2164 = vrot.slane %v2163, 1
      %v2165 = vmax.f32 %v2163, %v2164
      %v2166 = vmax.f32 %v2109, %v2121
      %v2167 = vmax.f32 %v2115, %v2127
      %v2168 = vmax.f32 %v2166, %v2133
      %v2169 = vmax.f32 %v2167, %v2139
      %v2170 = vmax.f32 %v2168, %v2145
      %v2171 = vmax.f32 %v2169, %v2151
      %v2172 = vmax.f32 %v2170, %v2171
      %v2173 = vrot.slane %v2172, 4
      %v2174 = vmax.f32 %v2172, %v2173
      %v2175 = vrot.slane %v2174, 2
      %v2176 = vmax.f32 %v2174, %v2175
      %v2177 = vrot.slane %v2176, 1
      %v2178 = vmax.f32 %v2176, %v2177
      %v2179 = vsub.f32 %v2107, %v2165
      %v2180 = vsub.f32 %v2109, %v2178
      %v2181 = vsub.f32 %v2113, %v2165
      %v2182 = vsub.f32 %v2115, %v2178
      %v2183 = vsub.f32 %v2119, %v2165
      %v2184 = vsub.f32 %v2121, %v2178
      %v2185 = vsub.f32 %v2125, %v2165
      %v2186 = vsub.f32 %v2127, %v2178
      %v2187 = vsub.f32 %v2131, %v2165
      %v2188 = vsub.f32 %v2133, %v2178
      %v2189 = vsub.f32 %v2137, %v2165
      %v2190 = vsub.f32 %v2139, %v2178
      %v2191 = vsub.f32 %v2143, %v2165
      %v2192 = vsub.f32 %v2145, %v2178
      %v2193 = vsub.f32 %v2149, %v2165
      %v2194 = vsub.f32 %v2151, %v2178
      %v2195 = vmul.f32 %v2179, 1.442695
      %v2196 = vpow.pop %v2195
      %v2197 = vmul.f32 %v2180, 1.442695
      %v2198 = vpow.pop %v2197
      %v2199 = vmul.f32 %v2181, 1.442695
      %v2200 = vpow.pop %v2199
      %v2201 = vmul.f32 %v2182, 1.442695
      %v2202 = vpow.pop %v2201
      %v2203 = vmul.f32 %v2183, 1.442695
      %v2204 = vpow.pop %v2203
      %v2205 = vmul.f32 %v2184, 1.442695
      %v2206 = vpow.pop %v2205
      %v2207 = vmul.f32 %v2185, 1.442695
      %v2208 = vpow.pop %v2207
      %v2209 = vmul.f32 %v2186, 1.442695
      %v2210 = vpow.pop %v2209
      %v2211 = vmul.f32 %v2187, 1.442695
      %v2212 = vpow.pop %v2211
      %v2213 = vmul.f32 %v2188, 1.442695
      %v2214 = vpow.pop %v2213
      %v2215 = vmul.f32 %v2189, 1.442695
      %v2216 = vpow.pop %v2215
      %v2217 = vmul.f32 %v2190, 1.442695
      %v2218 = vpow.pop %v2217
      %v2219 = vmul.f32 %v2191, 1.442695
      %v2220 = vpow.pop %v2219
      %v2221 = vmul.f32 %v2192, 1.442695
      %v2222 = vpow.pop %v2221
      %v2223 = vmul.f32 %v2193, 1.442695
      %v2224 = vpow.pop %v2223
      %v2225 = vmul.f32 %v2194, 1.442695
      %v2226 = vpow.pop %v2225
      %v2227 = vadd.f32 %v2196, %v2200
      %v2228 = vadd.f32 %v2227, %v2204
      %v2229 = vadd.f32 %v2228, %v2208
      %v2230 = vadd.f32 %v2229, %v2212
      %v2231 = vadd.f32 %v2230, %v2216
      %v2232 = vadd.f32 %v2231, %v2220
      %v2233 = vadd.f32 %v2232, %v2224
      %v2234 = vrot.slane %v2233, 4
      %v2235 = vadd.f32 %v2233, %v2234
      %v2236 = vrot.slane %v2235, 2
      %v2237 = vadd.f32 %v2235, %v2236
      %v2238 = vrot.slane %v2237, 1
      %v2239 = vadd.f32 %v2237, %v2238
      %v2240 = vadd.f32 %v2198, %v2202
      %v2241 = vadd.f32 %v2240, %v2206
      %v2242 = vadd.f32 %v2241, %v2210
      %v2243 = vadd.f32 %v2242, %v2214
      %v2244 = vadd.f32 %v2243, %v2218
      %v2245 = vadd.f32 %v2244, %v2222
      %v2246 = vadd.f32 %v2245, %v2226
      %v2247 = vrot.slane %v2246, 4
      %v2248 = vadd.f32 %v2246, %v2247
      %v2249 = vrot.slane %v2248, 2
      %v2250 = vadd.f32 %v2248, %v2249
      %v2251 = vrot.slane %v2250, 1
      %v2252 = vadd.f32 %v2250, %v2251
      %v2253 = vrcp.pop %v2239
      %v2254 = vrcp.pop %v2252
      %v2255 = vmul.f32 %v2196, %v2253
      %v2256 = vmul.f32 %v2198, %v2254
      %v2257 = vmul.f32 %v2200, %v2253
      %v2258 = vmul.f32 %v2202, %v2254
      %v2259 = vmul.f32 %v2204, %v2253
      %v2260 = vmul.f32 %v2206, %v2254
      %v2261 = vmul.f32 %v2208, %v2253
      %v2262 = vmul.f32 %v2210, %v2254
      %v2263 = vmul.f32 %v2212, %v2253
      %v2264 = vmul.f32 %v2214, %v2254
      %v2265 = vmul.f32 %v2216, %v2253
      %v2266 = vmul.f32 %v2218, %v2254
      %v2267 = vmul.f32 %v2220, %v2253
      %v2268 = vmul.f32 %v2222, %v2254
      %v2269 = vmul.f32 %v2224, %v2253
      %v2270 = vmul.f32 %v2226, %v2254
      %v2272 = vsel %vm1596, %v1332, 0
      %2274 = vmatprep.subr.mxu0 0.0
      %2275 = vmatpush1.msra.mxu0 0.0
      %2276 = vmatprep.subr.mxu0 0.0
      %2277 = vmatpush1.msra.mxu0 0.0
      %2278 = vmatprep.subr.mxu0 0.0
      %2279 = vmatpush1.msra.mxu0 0.0
      %2280 = vmatprep.subr.mxu0 0.0
      %2281 = vmatpush1.msra.mxu0 0.0
      %2282 = vmatprep.subr.mxu0 0.0
      %2283 = vmatpush1.msra.mxu0 0.0
      %2284 = vmatprep.subr.mxu0 0.0
      %2285 = vmatpush1.msra.mxu0 0.0
      %2286 = vmatprep.subr.mxu0 0.0
      %2287 = vmatpush1.msra.mxu0 0.0
      %2288 = vmatprep.subr.mxu0 0.0
      %2289 = vmatpush1.msra.mxu0 0.0
      %2290 = vmatprep.subr.mxu0 %v2270
      %2291 = vmatpush1.msra.mxu0 %v2269
      %2292 = vmatprep.subr.mxu0 %v2268
      %2293 = vmatpush1.msra.mxu0 %v2267
      %2294 = vmatprep.subr.mxu0 %v2266
      %2295 = vmatpush1.msra.mxu0 %v2265
      %2296 = vmatprep.subr.mxu0 %v2264
      %2297 = vmatpush1.msra.mxu0 %v2263
      %2298 = vmatprep.subr.mxu0 %v2262
      %2299 = vmatpush1.msra.mxu0 %v2261
      %2300 = vmatprep.subr.mxu0 %v2260
      %2301 = vmatpush1.msra.mxu0 %v2259
      %2302 = vmatprep.subr.mxu0 %v2258
      %2303 = vmatpush1.msra.mxu0 %v2257
      %2304 = vmatprep.subr.mxu0 %v2256
      %2305 = vmatpush1.msra.mxu0 %v2255
      %2306 = vmatprep.subr.mxu0 0.0
      %2307 = vmatpush2.msra.mxu0 0.0
      %2308 = vmatprep.subr.mxu0 0.0
      %2309 = vmatpush2.msra.mxu0 0.0
      %2310 = vmatprep.subr.mxu0 0.0
      %2311 = vmatpush2.msra.mxu0 0.0
      %2312 = vmatprep.subr.mxu0 0.0
      %2313 = vmatpush2.msra.mxu0 0.0
      %2314 = vmatprep.subr.mxu0 0.0
      %2315 = vmatpush2.msra.mxu0 0.0
      %2316 = vmatprep.subr.mxu0 0.0
      %2317 = vmatpush2.msra.mxu0 0.0
      %2318 = vmatprep.subr.mxu0 0.0
      %2319 = vmatpush2.msra.mxu0 0.0
      %2320 = vmatprep.subr.mxu0 0.0
      %2321 = vmatpush2.msra.mxu0 0.0
      %2322 = vmatprep.subr.mxu0 0.0
      %2323 = vmatpush2.msra.mxu0 0.0
      %2324 = vmatprep.subr.mxu0 0.0
      %2325 = vmatpush2.msra.mxu0 0.0
      %2326 = vmatprep.subr.mxu0 0.0
      %2327 = vmatpush2.msra.mxu0 0.0
      %2328 = vmatprep.subr.mxu0 0.0
      %2329 = vmatpush2.msra.mxu0 0.0
      %2330 = vmatprep.subr.mxu0 0.0
      %2331 = vmatpush2.msra.mxu0 0.0
      %2332 = vmatprep.subr.mxu0 0.0
      %2333 = vmatpush2.msra.mxu0 0.0
      %2334 = vmatprep.subr.mxu0 0.0
      %2335 = vmatpush2.msra.mxu0 0.0
      %2336 = vmatprep.subr.mxu0 0.0
      %2337 = vmatpush2.msra.mxu0 0.0
      %2338 = vmatprep.mubr.f32.mxu0 0.0
      %2339 = vmatmul.mubr.f32.gmra.mxu0 %v2272
      %v2340 = vpop.f32.mrf.mxu0
      %v2341 = vadd.f32 0.0, %v2340
      %v2342 = vpop.f32.mrf.mxu0
      %v2343 = vadd.f32 0.0, %v2342
      %2344 = vdwg.mxu0
      %2345 = vrot.lane.b32.xlu0 %v1177, 104
      %v2346 = vpop.permute.xlu0 %2345
      %2347 = vrot.lane.b32.xlu0 %v1182, 104
      %v2348 = vpop.permute.xlu0 %2347
      %2349 = vrot.lane.b32.xlu0 %v1187, 104
      %v2350 = vpop.permute.xlu0 %2349
      %2351 = vrot.lane.b32.xlu0 %v1192, 104
      %v2352 = vpop.permute.xlu0 %2351
      %2353 = vrot.lane.b32.xlu0 %v1197, 104
      %v2354 = vpop.permute.xlu0 %2353
      %2355 = vrot.lane.b32.xlu0 %v1202, 104
      %v2356 = vpop.permute.xlu0 %2355
      %2357 = vrot.lane.b32.xlu0 %v1207, 104
      %v2358 = vpop.permute.xlu0 %2357
      %2359 = vrot.lane.b32.xlu0 %v1212, 104
      %v2360 = vpop.permute.xlu0 %2359
      %v2361 = vsel %vm1340, %v2346, 0
      %v2363 = vsel %vm1340, %v2348, 0
      %v2365 = vsel %vm1340, %v2350, 0
      %v2367 = vsel %vm1340, %v2352, 0
      %v2369 = vsel %vm1340, %v2354, 0
      %v2371 = vsel %vm1340, %v2356, 0
      %v2373 = vsel %vm1340, %v2358, 0
      %v2375 = vsel %vm1340, %v2360, 0
      %2377 = vmatprep.subr.mxu0 0.0
      %2378 = vmatpush1.msra.mxu0 0.0
      %2379 = vmatprep.subr.mxu0 0.0
      %2380 = vmatpush1.msra.mxu0 0.0
      %2381 = vmatprep.subr.mxu0 0.0
      %2382 = vmatpush1.msra.mxu0 0.0
      %2383 = vmatprep.subr.mxu0 0.0
      %2384 = vmatpush1.msra.mxu0 0.0
      %2385 = vmatprep.subr.mxu0 0.0
      %2386 = vmatpush1.msra.mxu0 0.0
      %2387 = vmatprep.subr.mxu0 0.0
      %2388 = vmatpush1.msra.mxu0 0.0
      %2389 = vmatprep.subr.mxu0 0.0
      %2390 = vmatpush1.msra.mxu0 0.0
      %2391 = vmatprep.subr.mxu0 0.0
      %2392 = vmatpush1.msra.mxu0 0.0
      %2393 = vmatprep.subr.mxu0 0.0
      %2394 = vmatpush1.msra.mxu0 0.0
      %2395 = vmatprep.subr.mxu0 0.0
      %2396 = vmatpush1.msra.mxu0 0.0
      %2397 = vmatprep.subr.mxu0 0.0
      %2398 = vmatpush1.msra.mxu0 0.0
      %2399 = vmatprep.subr.mxu0 0.0
      %2400 = vmatpush1.msra.mxu0 0.0
      %2401 = vmatprep.subr.mxu0 0.0
      %2402 = vmatpush1.msra.mxu0 0.0
      %2403 = vmatprep.subr.mxu0 0.0
      %2404 = vmatpush1.msra.mxu0 0.0
      %2405 = vmatprep.subr.mxu0 0.0
      %2406 = vmatpush1.msra.mxu0 0.0
      %2407 = vmatprep.subr.mxu0 %v1061
      %2408 = vmatpush1.msra.mxu0 %v1059
      %2409 = vmatprep.subr.mxu0 0.0
      %2410 = vmatpush2.msra.mxu0 0.0
      %2411 = vmatprep.subr.mxu0 0.0
      %2412 = vmatpush2.msra.mxu0 0.0
      %2413 = vmatprep.subr.mxu0 0.0
      %2414 = vmatpush2.msra.mxu0 0.0
      %2415 = vmatprep.subr.mxu0 0.0
      %2416 = vmatpush2.msra.mxu0 0.0
      %2417 = vmatprep.subr.mxu0 0.0
      %2418 = vmatpush2.msra.mxu0 0.0
      %2419 = vmatprep.subr.mxu0 0.0
      %2420 = vmatpush2.msra.mxu0 0.0
      %2421 = vmatprep.subr.mxu0 0.0
      %2422 = vmatpush2.msra.mxu0 0.0
      %2423 = vmatprep.subr.mxu0 0.0
      %2424 = vmatpush2.msra.mxu0 0.0
      %2425 = vmatprep.subr.mxu0 0.0
      %2426 = vmatpush2.msra.mxu0 0.0
      %2427 = vmatprep.subr.mxu0 0.0
      %2428 = vmatpush2.msra.mxu0 0.0
      %2429 = vmatprep.subr.mxu0 0.0
      %2430 = vmatpush2.msra.mxu0 0.0
      %2431 = vmatprep.subr.mxu0 0.0
      %2432 = vmatpush2.msra.mxu0 0.0
      %2433 = vmatprep.subr.mxu0 0.0
      %2434 = vmatpush2.msra.mxu0 0.0
      %2435 = vmatprep.subr.mxu0 0.0
      %2436 = vmatpush2.msra.mxu0 0.0
      %2437 = vmatprep.subr.mxu0 0.0
      %2438 = vmatpush2.msra.mxu0 0.0
      %2439 = vmatprep.subr.mxu0 0.0
      %2440 = vmatpush2.msra.mxu0 0.0
      %2441 = vmatprep.mubr.f32.mxu0 0.0
      %2442 = vmatmul.mubr.f32.gmra.mxu0 %v2361
      %v2443 = vpop.f32.mrf.mxu0
      %v2444 = vadd.f32 0.0, %v2443
      %v2445 = vpop.f32.mrf.mxu0
      %v2446 = vadd.f32 0.0, %v2445
      %2447 = vmatprep.mubr.f32.mxu0 0.0
      %2448 = vmatmul.mubr.f32.gmra.mxu0 %v2363
      %v2449 = vpop.f32.mrf.mxu0
      %v2450 = vadd.f32 0.0, %v2449
      %v2451 = vpop.f32.mrf.mxu0
      %v2452 = vadd.f32 0.0, %v2451
      %2453 = vmatprep.mubr.f32.mxu0 0.0
      %2454 = vmatmul.mubr.f32.gmra.mxu0 %v2365
      %v2455 = vpop.f32.mrf.mxu0
      %v2456 = vadd.f32 0.0, %v2455
      %v2457 = vpop.f32.mrf.mxu0
      %v2458 = vadd.f32 0.0, %v2457
      %2459 = vmatprep.mubr.f32.mxu0 0.0
      %2460 = vmatmul.mubr.f32.gmra.mxu0 %v2367
      %v2461 = vpop.f32.mrf.mxu0
      %v2462 = vadd.f32 0.0, %v2461
      %v2463 = vpop.f32.mrf.mxu0
      %v2464 = vadd.f32 0.0, %v2463
      %2465 = vmatprep.mubr.f32.mxu0 0.0
      %2466 = vmatmul.mubr.f32.gmra.mxu0 %v2369
      %v2467 = vpop.f32.mrf.mxu0
      %v2468 = vadd.f32 0.0, %v2467
      %v2469 = vpop.f32.mrf.mxu0
      %v2470 = vadd.f32 0.0, %v2469
      %2471 = vmatprep.mubr.f32.mxu0 0.0
      %2472 = vmatmul.mubr.f32.gmra.mxu0 %v2371
      %v2473 = vpop.f32.mrf.mxu0
      %v2474 = vadd.f32 0.0, %v2473
      %v2475 = vpop.f32.mrf.mxu0
      %v2476 = vadd.f32 0.0, %v2475
      %2477 = vmatprep.mubr.f32.mxu0 0.0
      %2478 = vmatmul.mubr.f32.gmra.mxu0 %v2373
      %v2479 = vpop.f32.mrf.mxu0
      %v2480 = vadd.f32 0.0, %v2479
      %v2481 = vpop.f32.mrf.mxu0
      %v2482 = vadd.f32 0.0, %v2481
      %2483 = vmatprep.mubr.f32.mxu0 0.0
      %2484 = vmatmul.mubr.f32.gmra.mxu0 %v2375
      %v2485 = vpop.f32.mrf.mxu0
      %v2486 = vadd.f32 0.0, %v2485
      %v2487 = vpop.f32.mrf.mxu0
      %v2488 = vadd.f32 0.0, %v2487
      %2489 = vdwg.mxu0
      %v2490 = vmax.f32 %v2444, %v2456
      %v2491 = vmax.f32 %v2450, %v2462
      %v2492 = vmax.f32 %v2490, %v2468
      %v2493 = vmax.f32 %v2491, %v2474
      %v2494 = vmax.f32 %v2492, %v2480
      %v2495 = vmax.f32 %v2493, %v2486
      %v2496 = vmax.f32 %v2494, %v2495
      %v2497 = vrot.slane %v2496, 4
      %v2498 = vmax.f32 %v2496, %v2497
      %v2499 = vrot.slane %v2498, 2
      %v2500 = vmax.f32 %v2498, %v2499
      %v2501 = vrot.slane %v2500, 1
      %v2502 = vmax.f32 %v2500, %v2501
      %v2503 = vmax.f32 %v2446, %v2458
      %v2504 = vmax.f32 %v2452, %v2464
      %v2505 = vmax.f32 %v2503, %v2470
      %v2506 = vmax.f32 %v2504, %v2476
      %v2507 = vmax.f32 %v2505, %v2482
      %v2508 = vmax.f32 %v2506, %v2488
      %v2509 = vmax.f32 %v2507, %v2508
      %v2510 = vrot.slane %v2509, 4
      %v2511 = vmax.f32 %v2509, %v2510
      %v2512 = vrot.slane %v2511, 2
      %v2513 = vmax.f32 %v2511, %v2512
      %v2514 = vrot.slane %v2513, 1
      %v2515 = vmax.f32 %v2513, %v2514
      %v2516 = vsub.f32 %v2444, %v2502
      %v2517 = vsub.f32 %v2446, %v2515
      %v2518 = vsub.f32 %v2450, %v2502
      %v2519 = vsub.f32 %v2452, %v2515
      %v2520 = vsub.f32 %v2456, %v2502
      %v2521 = vsub.f32 %v2458, %v2515
      %v2522 = vsub.f32 %v2462, %v2502
      %v2523 = vsub.f32 %v2464, %v2515
      %v2524 = vsub.f32 %v2468, %v2502
      %v2525 = vsub.f32 %v2470, %v2515
      %v2526 = vsub.f32 %v2474, %v2502
      %v2527 = vsub.f32 %v2476, %v2515
      %v2528 = vsub.f32 %v2480, %v2502
      %v2529 = vsub.f32 %v2482, %v2515
      %v2530 = vsub.f32 %v2486, %v2502
      %v2531 = vsub.f32 %v2488, %v2515
      %v2532 = vmul.f32 %v2516, 1.442695
      %v2533 = vpow.pop %v2532
      %v2534 = vmul.f32 %v2517, 1.442695
      %v2535 = vpow.pop %v2534
      %v2536 = vmul.f32 %v2518, 1.442695
      %v2537 = vpow.pop %v2536
      %v2538 = vmul.f32 %v2519, 1.442695
      %v2539 = vpow.pop %v2538
      %v2540 = vmul.f32 %v2520, 1.442695
      %v2541 = vpow.pop %v2540
      %v2542 = vmul.f32 %v2521, 1.442695
      %v2543 = vpow.pop %v2542
      %v2544 = vmul.f32 %v2522, 1.442695
      %v2545 = vpow.pop %v2544
      %v2546 = vmul.f32 %v2523, 1.442695
      %v2547 = vpow.pop %v2546
      %v2548 = vmul.f32 %v2524, 1.442695
      %v2549 = vpow.pop %v2548
      %v2550 = vmul.f32 %v2525, 1.442695
      %v2551 = vpow.pop %v2550
      %v2552 = vmul.f32 %v2526, 1.442695
      %v2553 = vpow.pop %v2552
      %v2554 = vmul.f32 %v2527, 1.442695
      %v2555 = vpow.pop %v2554
      %v2556 = vmul.f32 %v2528, 1.442695
      %v2557 = vpow.pop %v2556
      %v2558 = vmul.f32 %v2529, 1.442695
      %v2559 = vpow.pop %v2558
      %v2560 = vmul.f32 %v2530, 1.442695
      %v2561 = vpow.pop %v2560
      %v2562 = vmul.f32 %v2531, 1.442695
      %v2563 = vpow.pop %v2562
      %v2564 = vadd.f32 %v2533, %v2537
      %v2565 = vadd.f32 %v2564, %v2541
      %v2566 = vadd.f32 %v2565, %v2545
      %v2567 = vadd.f32 %v2566, %v2549
      %v2568 = vadd.f32 %v2567, %v2553
      %v2569 = vadd.f32 %v2568, %v2557
      %v2570 = vadd.f32 %v2569, %v2561
      %v2571 = vrot.slane %v2570, 4
      %v2572 = vadd.f32 %v2570, %v2571
      %v2573 = vrot.slane %v2572, 2
      %v2574 = vadd.f32 %v2572, %v2573
      %v2575 = vrot.slane %v2574, 1
      %v2576 = vadd.f32 %v2574, %v2575
      %v2577 = vadd.f32 %v2535, %v2539
      %v2578 = vadd.f32 %v2577, %v2543
      %v2579 = vadd.f32 %v2578, %v2547
      %v2580 = vadd.f32 %v2579, %v2551
      %v2581 = vadd.f32 %v2580, %v2555
      %v2582 = vadd.f32 %v2581, %v2559
      %v2583 = vadd.f32 %v2582, %v2563
      %v2584 = vrot.slane %v2583, 4
      %v2585 = vadd.f32 %v2583, %v2584
      %v2586 = vrot.slane %v2585, 2
      %v2587 = vadd.f32 %v2585, %v2586
      %v2588 = vrot.slane %v2587, 1
      %v2589 = vadd.f32 %v2587, %v2588
      %v2590 = vrcp.pop %v2576
      %v2591 = vrcp.pop %v2589
      %v2592 = vmul.f32 %v2533, %v2590
      %v2593 = vmul.f32 %v2535, %v2591
      %v2594 = vmul.f32 %v2537, %v2590
      %v2595 = vmul.f32 %v2539, %v2591
      %v2596 = vmul.f32 %v2541, %v2590
      %v2597 = vmul.f32 %v2543, %v2591
      %v2598 = vmul.f32 %v2545, %v2590
      %v2599 = vmul.f32 %v2547, %v2591
      %v2600 = vmul.f32 %v2549, %v2590
      %v2601 = vmul.f32 %v2551, %v2591
      %v2602 = vmul.f32 %v2553, %v2590
      %v2603 = vmul.f32 %v2555, %v2591
      %v2604 = vmul.f32 %v2557, %v2590
      %v2605 = vmul.f32 %v2559, %v2591
      %v2606 = vmul.f32 %v2561, %v2590
      %v2607 = vmul.f32 %v2563, %v2591
      %v2609 = vsel %vm1596, %v1337, 0
      %2611 = vmatprep.subr.mxu0 0.0
      %2612 = vmatpush1.msra.mxu0 0.0
      %2613 = vmatprep.subr.mxu0 0.0
      %2614 = vmatpush1.msra.mxu0 0.0
      %2615 = vmatprep.subr.mxu0 0.0
      %2616 = vmatpush1.msra.mxu0 0.0
      %2617 = vmatprep.subr.mxu0 0.0
      %2618 = vmatpush1.msra.mxu0 0.0
      %2619 = vmatprep.subr.mxu0 0.0
      %2620 = vmatpush1.msra.mxu0 0.0
      %2621 = vmatprep.subr.mxu0 0.0
      %2622 = vmatpush1.msra.mxu0 0.0
      %2623 = vmatprep.subr.mxu0 0.0
      %2624 = vmatpush1.msra.mxu0 0.0
      %2625 = vmatprep.subr.mxu0 0.0
      %2626 = vmatpush1.msra.mxu0 0.0
      %2627 = vmatprep.subr.mxu0 %v2607
      %2628 = vmatpush1.msra.mxu0 %v2606
      %2629 = vmatprep.subr.mxu0 %v2605
      %2630 = vmatpush1.msra.mxu0 %v2604
      %2631 = vmatprep.subr.mxu0 %v2603
      %2632 = vmatpush1.msra.mxu0 %v2602
      %2633 = vmatprep.subr.mxu0 %v2601
      %2634 = vmatpush1.msra.mxu0 %v2600
      %2635 = vmatprep.subr.mxu0 %v2599
      %2636 = vmatpush1.msra.mxu0 %v2598
      %2637 = vmatprep.subr.mxu0 %v2597
      %2638 = vmatpush1.msra.mxu0 %v2596
      %2639 = vmatprep.subr.mxu0 %v2595
      %2640 = vmatpush1.msra.mxu0 %v2594
      %2641 = vmatprep.subr.mxu0 %v2593
      %2642 = vmatpush1.msra.mxu0 %v2592
      %2643 = vmatprep.subr.mxu0 0.0
      %2644 = vmatpush2.msra.mxu0 0.0
      %2645 = vmatprep.subr.mxu0 0.0
      %2646 = vmatpush2.msra.mxu0 0.0
      %2647 = vmatprep.subr.mxu0 0.0
      %2648 = vmatpush2.msra.mxu0 0.0
      %2649 = vmatprep.subr.mxu0 0.0
      %2650 = vmatpush2.msra.mxu0 0.0
      %2651 = vmatprep.subr.mxu0 0.0
      %2652 = vmatpush2.msra.mxu0 0.0
      %2653 = vmatprep.subr.mxu0 0.0
      %2654 = vmatpush2.msra.mxu0 0.0
      %2655 = vmatprep.subr.mxu0 0.0
      %2656 = vmatpush2.msra.mxu0 0.0
      %2657 = vmatprep.subr.mxu0 0.0
      %2658 = vmatpush2.msra.mxu0 0.0
      %2659 = vmatprep.subr.mxu0 0.0
      %2660 = vmatpush2.msra.mxu0 0.0
      %2661 = vmatprep.subr.mxu0 0.0
      %2662 = vmatpush2.msra.mxu0 0.0
      %2663 = vmatprep.subr.mxu0 0.0
      %2664 = vmatpush2.msra.mxu0 0.0
      %2665 = vmatprep.subr.mxu0 0.0
      %2666 = vmatpush2.msra.mxu0 0.0
      %2667 = vmatprep.subr.mxu0 0.0
      %2668 = vmatpush2.msra.mxu0 0.0
      %2669 = vmatprep.subr.mxu0 0.0
      %2670 = vmatpush2.msra.mxu0 0.0
      %2671 = vmatprep.subr.mxu0 0.0
      %2672 = vmatpush2.msra.mxu0 0.0
      %2673 = vmatprep.subr.mxu0 0.0
      %2674 = vmatpush2.msra.mxu0 0.0
      %2675 = vmatprep.mubr.f32.mxu0 0.0
      %2676 = vmatmul.mubr.f32.gmra.mxu0 %v2609
      %v2677 = vpop.f32.mrf.mxu0
      %v2678 = vadd.f32 0.0, %v2677
      %v2679 = vpop.f32.mrf.mxu0
      %v2680 = vadd.f32 0.0, %v2679
      %2681 = vdwg.mxu0
      %v2682 = vld [vmem:[%s8] sm:$0xff]
      %v2683 = vld [vmem:[%s8 + $0x8] sm:$0xff]
      %v2684 = vld [vmem:[%s8 + $0x10] sm:$0xff]
      %v2685 = vld [vmem:[%s8 + $0x18] sm:$0xff]
      %v2686 = vld [vmem:[%s9] sm:$0xff]
      %v2687 = vld [vmem:[%s9 + $0x8] sm:$0xff]
      %v2688 = vld [vmem:[%s9 + $0x10] sm:$0xff]
      %v2689 = vld [vmem:[%s9 + $0x18] sm:$0xff]
      %2691 = vset.pattern.permute.xlu0 0
      %2692 = vperm.xlu0 %2691, %v2686
      %v2693 = vpop.permute.xlu0 %2692
      %2696 = vset.pattern.permute.xlu0 0
      %2697 = vperm.xlu0 %2696, %v2687
      %v2698 = vpop.permute.xlu0 %2697
      %2701 = vset.pattern.permute.xlu0 0
      %2702 = vperm.xlu0 %2701, %v2688
      %v2703 = vpop.permute.xlu0 %2702
      %2706 = vset.pattern.permute.xlu0 0
      %2707 = vperm.xlu0 %2706, %v2689
      %v2708 = vpop.permute.xlu0 %2707
      %v2711 = vsel %vm799, %v2682, 0
      %v2714 = vsel %vm799, %v2683, 0
      %v2717 = vsel %vm799, %v2684, 0
      %v2720 = vsel %vm799, %v2685, 0
      %2722 = vmatprep.subr.mxu0 0.0
      %2723 = vmatpush1.msra.mxu0 0.0
      %2724 = vmatprep.subr.mxu0 0.0
      %2725 = vmatpush1.msra.mxu0 0.0
      %2726 = vmatprep.subr.mxu0 0.0
      %2727 = vmatpush1.msra.mxu0 0.0
      %2728 = vmatprep.subr.mxu0 0.0
      %2729 = vmatpush1.msra.mxu0 0.0
      %2730 = vmatprep.subr.mxu0 0.0
      %2731 = vmatpush1.msra.mxu0 0.0
      %2732 = vmatprep.subr.mxu0 0.0
      %2733 = vmatpush1.msra.mxu0 0.0
      %2734 = vmatprep.subr.mxu0 0.0
      %2735 = vmatpush1.msra.mxu0 0.0
      %2736 = vmatprep.subr.mxu0 0.0
      %2737 = vmatpush1.msra.mxu0 0.0
      %2738 = vmatprep.subr.mxu0 0.0
      %2739 = vmatpush1.msra.mxu0 0.0
      %2740 = vmatprep.subr.mxu0 0.0
      %2741 = vmatpush1.msra.mxu0 0.0
      %2742 = vmatprep.subr.mxu0 0.0
      %2743 = vmatpush1.msra.mxu0 0.0
      %2744 = vmatprep.subr.mxu0 0.0
      %2745 = vmatpush1.msra.mxu0 0.0
      %2746 = vmatprep.subr.mxu0 %v2680
      %2747 = vmatpush1.msra.mxu0 %v2678
      %2748 = vmatprep.subr.mxu0 %v2343
      %2749 = vmatpush1.msra.mxu0 %v2341
      %2750 = vmatprep.subr.mxu0 %v2006
      %2751 = vmatpush1.msra.mxu0 %v2004
      %2752 = vmatprep.subr.mxu0 %v1669
      %2753 = vmatpush1.msra.mxu0 %v1667
      %2754 = vmatprep.subr.mxu0 0.0
      %2755 = vmatpush2.msra.mxu0 0.0
      %2756 = vmatprep.subr.mxu0 0.0
      %2757 = vmatpush2.msra.mxu0 0.0
      %2758 = vmatprep.subr.mxu0 0.0
      %2759 = vmatpush2.msra.mxu0 0.0
      %2760 = vmatprep.subr.mxu0 0.0
      %2761 = vmatpush2.msra.mxu0 0.0
      %2762 = vmatprep.subr.mxu0 0.0
      %2763 = vmatpush2.msra.mxu0 0.0
      %2764 = vmatprep.subr.mxu0 0.0
      %2765 = vmatpush2.msra.mxu0 0.0
      %2766 = vmatprep.subr.mxu0 0.0
      %2767 = vmatpush2.msra.mxu0 0.0
      %2768 = vmatprep.subr.mxu0 0.0
      %2769 = vmatpush2.msra.mxu0 0.0
      %2770 = vmatprep.subr.mxu0 0.0
      %2771 = vmatpush2.msra.mxu0 0.0
      %2772 = vmatprep.subr.mxu0 0.0
      %2773 = vmatpush2.msra.mxu0 0.0
      %2774 = vmatprep.subr.mxu0 0.0
      %2775 = vmatpush2.msra.mxu0 0.0
      %2776 = vmatprep.subr.mxu0 0.0
      %2777 = vmatpush2.msra.mxu0 0.0
      %2778 = vmatprep.subr.mxu0 0.0
      %2779 = vmatpush2.msra.mxu0 0.0
      %2780 = vmatprep.subr.mxu0 0.0
      %2781 = vmatpush2.msra.mxu0 0.0
      %2782 = vmatprep.subr.mxu0 0.0
      %2783 = vmatpush2.msra.mxu0 0.0
      %2784 = vmatprep.subr.mxu0 0.0
      %2785 = vmatpush2.msra.mxu0 0.0
      %2786 = vmatprep.mubr.f32.mxu0 0.0
      %2787 = vmatmul.mubr.f32.gmra.mxu0 %v2711
      %v2788 = vpop.f32.mrf.mxu0
      %v2789 = vadd.f32 %v2693, %v2788
      %v2790 = vpop.f32.mrf.mxu0
      %v2791 = vadd.f32 %v2693, %v2790
      %2792 = vmatprep.mubr.f32.mxu0 0.0
      %2793 = vmatmul.mubr.f32.gmra.mxu0 %v2714
      %v2794 = vpop.f32.mrf.mxu0
      %v2795 = vadd.f32 %v2698, %v2794
      %v2796 = vpop.f32.mrf.mxu0
      %v2797 = vadd.f32 %v2698, %v2796
      %2798 = vmatprep.mubr.f32.mxu0 0.0
      %2799 = vmatmul.mubr.f32.gmra.mxu0 %v2717
      %v2800 = vpop.f32.mrf.mxu0
      %v2801 = vadd.f32 %v2703, %v2800
      %v2802 = vpop.f32.mrf.mxu0
      %v2803 = vadd.f32 %v2703, %v2802
      %2804 = vmatprep.mubr.f32.mxu0 0.0
      %2805 = vmatmul.mubr.f32.gmra.mxu0 %v2720
      %v2806 = vpop.f32.mrf.mxu0
      %v2807 = vadd.f32 %v2708, %v2806
      %v2808 = vpop.f32.mrf.mxu0
      %v2809 = vadd.f32 %v2708, %v2808
      %2810 = vdwg.mxu0
      %v2811 = vadd.f32 %v2789, %v2795
      %v2812 = vadd.f32 %v2811, %v2801
      %v2813 = vadd.f32 %v2812, %v2807
      %v2814 = vrot.slane %v2813, 4
      %v2815 = vadd.f32 %v2813, %v2814
      %v2816 = vrot.slane %v2815, 2
      %v2817 = vadd.f32 %v2815, %v2816
      %v2818 = vrot.slane %v2817, 1
      %v2819 = vadd.f32 %v2817, %v2818
      %v2820 = vadd.f32 %v2791, %v2797
      %v2821 = vadd.f32 %v2820, %v2803
      %v2822 = vadd.f32 %v2821, %v2809
      %v2823 = vrot.slane %v2822, 4
      %v2824 = vadd.f32 %v2822, %v2823
      %v2825 = vrot.slane %v2824, 2
      %v2826 = vadd.f32 %v2824, %v2825
      %v2827 = vrot.slane %v2826, 1
      %v2828 = vadd.f32 %v2826, %v2827
      %v2829 = vmul.f32 %v2819, %v684
      %v2830 = vmul.f32 %v2828, %v684
      %v2831 = vsub.f32 %v2789, %v2829
      %v2832 = vsub.f32 %v2791, %v2830
      %v2833 = vsub.f32 %v2795, %v2829
      %v2834 = vsub.f32 %v2797, %v2830
      %v2835 = vsub.f32 %v2801, %v2829
      %v2836 = vsub.f32 %v2803, %v2830
      %v2837 = vsub.f32 %v2807, %v2829
      %v2838 = vsub.f32 %v2809, %v2830
      %v2839 = vmul.f32 %v2831, %v2831
      %v2840 = vmul.f32 %v2832, %v2832
      %v2841 = vmul.f32 %v2833, %v2833
      %v2842 = vmul.f32 %v2834, %v2834
      %v2843 = vmul.f32 %v2835, %v2835
      %v2844 = vmul.f32 %v2836, %v2836
      %v2845 = vmul.f32 %v2837, %v2837
      %v2846 = vmul.f32 %v2838, %v2838
      %v2847 = vadd.f32 %v2839, %v2841
      %v2848 = vadd.f32 %v2847, %v2843
      %v2849 = vadd.f32 %v2848, %v2845
      %v2850 = vrot.slane %v2849, 4
      %v2851 = vadd.f32 %v2849, %v2850
      %v2852 = vrot.slane %v2851, 2
      %v2853 = vadd.f32 %v2851, %v2852
      %v2854 = vrot.slane %v2853, 1
      %v2855 = vadd.f32 %v2853, %v2854
      %v2856 = vadd.f32 %v2840, %v2842
      %v2857 = vadd.f32 %v2856, %v2844
      %v2858 = vadd.f32 %v2857, %v2846
      %v2859 = vrot.slane %v2858, 4
      %v2860 = vadd.f32 %v2858, %v2859
      %v2861 = vrot.slane %v2860, 2
      %v2862 = vadd.f32 %v2860, %v2861
      %v2863 = vrot.slane %v2862, 1
      %v2864 = vadd.f32 %v2862, %v2863
      %v2865 = vmul.f32 %v2855, %v684
      %v2866 = vmul.f32 %v2864, %v684
      %v2867 = vadd.f32 %v2865, 1e-05
      %v2868 = vadd.f32 %v2866, 1e-05
      %v2869 = vrsqrt.pop %v2867
      %v2870 = vrsqrt.pop %v2868
      %v2871 = vmul.f32 %v2831, %v2869
      %v2872 = vmul.f32 %v2832, %v2870
      %v2873 = vmul.f32 %v2833, %v2869
      %v2874 = vmul.f32 %v2834, %v2870
      %v2875 = vmul.f32 %v2835, %v2869
      %v2876 = vmul.f32 %v2836, %v2870
      %v2877 = vmul.f32 %v2837, %v2869
      %v2878 = vmul.f32 %v2838, %v2870
      %v2879 = vld [vmem:[%s18] sm:$0xff]
      %v2880 = vld [vmem:[%s18 + $0x8] sm:$0xff]
      %v2881 = vld [vmem:[%s18 + $0x10] sm:$0xff]
      %v2882 = vld [vmem:[%s18 + $0x18] sm:$0xff]
      %2884 = vset.pattern.permute.xlu0 0
      %2885 = vperm.xlu0 %2884, %v2879
      %v2886 = vpop.permute.xlu0 %2885
      %2889 = vset.pattern.permute.xlu0 0
      %2890 = vperm.xlu0 %2889, %v2880
      %v2891 = vpop.permute.xlu0 %2890
      %2894 = vset.pattern.permute.xlu0 0
      %2895 = vperm.xlu0 %2894, %v2881
      %v2896 = vpop.permute.xlu0 %2895
      %2899 = vset.pattern.permute.xlu0 0
      %2900 = vperm.xlu0 %2899, %v2882
      %v2901 = vpop.permute.xlu0 %2900
      %v2903 = vmul.f32 %v2871, %v2886
      %v2904 = vmul.f32 %v2872, %v2886
      %v2905 = vmul.f32 %v2873, %v2891
      %v2906 = vmul.f32 %v2874, %v2891
      %v2907 = vmul.f32 %v2875, %v2896
      %v2908 = vmul.f32 %v2876, %v2896
      %v2909 = vmul.f32 %v2877, %v2901
      %v2910 = vmul.f32 %v2878, %v2901
      %v2911 = vld [vmem:[%s19] sm:$0xff]
      %v2912 = vld [vmem:[%s19 + $0x8] sm:$0xff]
      %v2913 = vld [vmem:[%s19 + $0x10] sm:$0xff]
      %v2914 = vld [vmem:[%s19 + $0x18] sm:$0xff]
      %2916 = vset.pattern.permute.xlu0 0
      %2917 = vperm.xlu0 %2916, %v2911
      %v2918 = vpop.permute.xlu0 %2917
      %2921 = vset.pattern.permute.xlu0 0
      %2922 = vperm.xlu0 %2921, %v2912
      %v2923 = vpop.permute.xlu0 %2922
      %2926 = vset.pattern.permute.xlu0 0
      %2927 = vperm.xlu0 %2926, %v2913
      %v2928 = vpop.permute.xlu0 %2927
      %2931 = vset.pattern.permute.xlu0 0
      %2932 = vperm.xlu0 %2931, %v2914
      %v2933 = vpop.permute.xlu0 %2932
      %v2935 = vadd.f32 %v2903, %v2918
      %v2936 = vadd.f32 %v2904, %v2918
      %v2937 = vadd.f32 %v2905, %v2923
      %v2938 = vadd.f32 %v2906, %v2923
      %v2939 = vadd.f32 %v2907, %v2928
      %v2940 = vadd.f32 %v2908, %v2928
      %v2941 = vadd.f32 %v2909, %v2933
      %v2942 = vadd.f32 %v2910, %v2933
      %v2943 = vld [vmem:[%s10] sm:$0xff]
      %v2944 = vld [vmem:[%s10 + $0x8] sm:$0xff]
      %v2945 = vld [vmem:[%s10 + $0x10] sm:$0xff]
      %v2946 = vld [vmem:[%s10 + $0x18] sm:$0xff]
      %v2947 = vld [vmem:[%s10 + $0x20] sm:$0xff]
      %v2948 = vld [vmem:[%s10 + $0x28] sm:$0xff]
      %v2949 = vld [vmem:[%s10 + $0x30] sm:$0xff]
      %v2950 = vld [vmem:[%s10 + $0x38] sm:$0xff]
      %v2951 = vld [vmem:[%s11] sm:$0xff]
      %v2952 = vld [vmem:[%s11 + $0x8] sm:$0xff]
      %v2953 = vld [vmem:[%s11 + $0x10] sm:$0xff]
      %v2954 = vld [vmem:[%s11 + $0x18] sm:$0xff]
      %v2955 = vld [vmem:[%s11 + $0x20] sm:$0xff]
      %v2956 = vld [vmem:[%s11 + $0x28] sm:$0xff]
      %v2957 = vld [vmem:[%s11 + $0x30] sm:$0xff]
      %v2958 = vld [vmem:[%s11 + $0x38] sm:$0xff]
      %2960 = vset.pattern.permute.xlu0 0
      %2961 = vperm.xlu0 %2960, %v2951
      %v2962 = vpop.permute.xlu0 %2961
      %2965 = vset.pattern.permute.xlu0 0
      %2966 = vperm.xlu0 %2965, %v2952
      %v2967 = vpop.permute.xlu0 %2966
      %2970 = vset.pattern.permute.xlu0 0
      %2971 = vperm.xlu0 %2970, %v2953
      %v2972 = vpop.permute.xlu0 %2971
      %2975 = vset.pattern.permute.xlu0 0
      %2976 = vperm.xlu0 %2975, %v2954
      %v2977 = vpop.permute.xlu0 %2976
      %2980 = vset.pattern.permute.xlu0 0
      %2981 = vperm.xlu0 %2980, %v2955
      %v2982 = vpop.permute.xlu0 %2981
      %2985 = vset.pattern.permute.xlu0 0
      %2986 = vperm.xlu0 %2985, %v2956
      %v2987 = vpop.permute.xlu0 %2986
      %2990 = vset.pattern.permute.xlu0 0
      %2991 = vperm.xlu0 %2990, %v2957
      %v2992 = vpop.permute.xlu0 %2991
      %2995 = vset.pattern.permute.xlu0 0
      %2996 = vperm.xlu0 %2995, %v2958
      %v2997 = vpop.permute.xlu0 %2996
      %v3000 = vsel %vm799, %v2943, 0
      %v3003 = vsel %vm799, %v2944, 0
      %v3006 = vsel %vm799, %v2945, 0
      %v3009 = vsel %vm799, %v2946, 0
      %v3012 = vsel %vm799, %v2947, 0
      %v3015 = vsel %vm799, %v2948, 0
      %v3018 = vsel %vm799, %v2949, 0
      %v3021 = vsel %vm799, %v2950, 0
      %3023 = vmatprep.subr.mxu0 0.0
      %3024 = vmatpush1.msra.mxu0 0.0
      %3025 = vmatprep.subr.mxu0 0.0
      %3026 = vmatpush1.msra.mxu0 0.0
      %3027 = vmatprep.subr.mxu0 0.0
      %3028 = vmatpush1.msra.mxu0 0.0
      %3029 = vmatprep.subr.mxu0 0.0
      %3030 = vmatpush1.msra.mxu0 0.0
      %3031 = vmatprep.subr.mxu0 0.0
      %3032 = vmatpush1.msra.mxu0 0.0
      %3033 = vmatprep.subr.mxu0 0.0
      %3034 = vmatpush1.msra.mxu0 0.0
      %3035 = vmatprep.subr.mxu0 0.0
      %3036 = vmatpush1.msra.mxu0 0.0
      %3037 = vmatprep.subr.mxu0 0.0
      %3038 = vmatpush1.msra.mxu0 0.0
      %3039 = vmatprep.subr.mxu0 0.0
      %3040 = vmatpush1.msra.mxu0 0.0
      %3041 = vmatprep.subr.mxu0 0.0
      %3042 = vmatpush1.msra.mxu0 0.0
      %3043 = vmatprep.subr.mxu0 0.0
      %3044 = vmatpush1.msra.mxu0 0.0
      %3045 = vmatprep.subr.mxu0 0.0
      %3046 = vmatpush1.msra.mxu0 0.0
      %3047 = vmatprep.subr.mxu0 %v2942
      %3048 = vmatpush1.msra.mxu0 %v2941
      %3049 = vmatprep.subr.mxu0 %v2940
      %3050 = vmatpush1.msra.mxu0 %v2939
      %3051 = vmatprep.subr.mxu0 %v2938
      %3052 = vmatpush1.msra.mxu0 %v2937
      %3053 = vmatprep.subr.mxu0 %v2936
      %3054 = vmatpush1.msra.mxu0 %v2935
      %3055 = vmatprep.subr.mxu0 0.0
      %3056 = vmatpush2.msra.mxu0 0.0
      %3057 = vmatprep.subr.mxu0 0.0
      %3058 = vmatpush2.msra.mxu0 0.0
      %3059 = vmatprep.subr.mxu0 0.0
      %3060 = vmatpush2.msra.mxu0 0.0
      %3061 = vmatprep.subr.mxu0 0.0
      %3062 = vmatpush2.msra.mxu0 0.0
      %3063 = vmatprep.subr.mxu0 0.0
      %3064 = vmatpush2.msra.mxu0 0.0
      %3065 = vmatprep.subr.mxu0 0.0
      %3066 = vmatpush2.msra.mxu0 0.0
      %3067 = vmatprep.subr.mxu0 0.0
      %3068 = vmatpush2.msra.mxu0 0.0
      %3069 = vmatprep.subr.mxu0 0.0
      %3070 = vmatpush2.msra.mxu0 0.0
      %3071 = vmatprep.subr.mxu0 0.0
      %3072 = vmatpush2.msra.mxu0 0.0
      %3073 = vmatprep.subr.mxu0 0.0
      %3074 = vmatpush2.msra.mxu0 0.0
      %3075 = vmatprep.subr.mxu0 0.0
      %3076 = vmatpush2.msra.mxu0 0.0
      %3077 = vmatprep.subr.mxu0 0.0
      %3078 = vmatpush2.msra.mxu0 0.0
      %3079 = vmatprep.subr.mxu0 0.0
      %3080 = vmatpush2.msra.mxu0 0.0
      %3081 = vmatprep.subr.mxu0 0.0
      %3082 = vmatpush2.msra.mxu0 0.0
      %3083 = vmatprep.subr.mxu0 0.0
      %3084 = vmatpush2.msra.mxu0 0.0
      %3085 = vmatprep.subr.mxu0 0.0
      %3086 = vmatpush2.msra.mxu0 0.0
      %3087 = vmatprep.mubr.f32.mxu0 0.0
      %3088 = vmatmul.mubr.f32.gmra.mxu0 %v3000
      %v3089 = vpop.f32.mrf.mxu0
      %v3090 = vadd.f32 %v2962, %v3089
      %v3091 = vpop.f32.mrf.mxu0
      %v3092 = vadd.f32 %v2962, %v3091
      %3093 = vmatprep.mubr.f32.mxu0 0.0
      %3094 = vmatmul.mubr.f32.gmra.mxu0 %v3003
      %v3095 = vpop.f32.mrf.mxu0
      %v3096 = vadd.f32 %v2967, %v3095
      %v3097 = vpop.f32.mrf.mxu0
      %v3098 = vadd.f32 %v2967, %v3097
      %3099 = vmatprep.mubr.f32.mxu0 0.0
      %3100 = vmatmul.mubr.f32.gmra.mxu0 %v3006
      %v3101 = vpop.f32.mrf.mxu0
      %v3102 = vadd.f32 %v2972, %v3101
      %v3103 = vpop.f32.mrf.mxu0
      %v3104 = vadd.f32 %v2972, %v3103
      %3105 = vmatprep.mubr.f32.mxu0 0.0
      %3106 = vmatmul.mubr.f32.gmra.mxu0 %v3009
      %v3107 = vpop.f32.mrf.mxu0
      %v3108 = vadd.f32 %v2977, %v3107
      %v3109 = vpop.f32.mrf.mxu0
      %v3110 = vadd.f32 %v2977, %v3109
      %3111 = vmatprep.mubr.f32.mxu0 0.0
      %3112 = vmatmul.mubr.f32.gmra.mxu0 %v3012
      %v3113 = vpop.f32.mrf.mxu0
      %v3114 = vadd.f32 %v2982, %v3113
      %v3115 = vpop.f32.mrf.mxu0
      %v3116 = vadd.f32 %v2982, %v3115
      %3117 = vmatprep.mubr.f32.mxu0 0.0
      %3118 = vmatmul.mubr.f32.gmra.mxu0 %v3015
      %v3119 = vpop.f32.mrf.mxu0
      %v3120 = vadd.f32 %v2987, %v3119
      %v3121 = vpop.f32.mrf.mxu0
      %v3122 = vadd.f32 %v2987, %v3121
      %3123 = vmatprep.mubr.f32.mxu0 0.0
      %3124 = vmatmul.mubr.f32.gmra.mxu0 %v3018
      %v3125 = vpop.f32.mrf.mxu0
      %v3126 = vadd.f32 %v2992, %v3125
      %v3127 = vpop.f32.mrf.mxu0
      %v3128 = vadd.f32 %v2992, %v3127
      %3129 = vmatprep.mubr.f32.mxu0 0.0
      %3130 = vmatmul.mubr.f32.gmra.mxu0 %v3021
      %v3131 = vpop.f32.mrf.mxu0
      %v3132 = vadd.f32 %v2997, %v3131
      %v3133 = vpop.f32.mrf.mxu0
      %v3134 = vadd.f32 %v2997, %v3133
      %3135 = vdwg.mxu0
      %v3136 = vmax.f32 %v3090, 0.0
      %v3137 = vmax.f32 %v3092, 0.0
      %v3138 = vmax.f32 %v3096, 0.0
      %v3139 = vmax.f32 %v3098, 0.0
      %v3140 = vmax.f32 %v3102, 0.0
      %v3141 = vmax.f32 %v3104, 0.0
      %v3142 = vmax.f32 %v3108, 0.0
      %v3143 = vmax.f32 %v3110, 0.0
      %v3144 = vmax.f32 %v3114, 0.0
      %v3145 = vmax.f32 %v3116, 0.0
      %v3146 = vmax.f32 %v3120, 0.0
      %v3147 = vmax.f32 %v3122, 0.0
      %v3148 = vmax.f32 %v3126, 0.0
      %v3149 = vmax.f32 %v3128, 0.0
      %v3150 = vmax.f32 %v3132, 0.0
      %v3151 = vmax.f32 %v3134, 0.0
      %v3152 = vld [vmem:[%s12] sm:$0xff]
      %v3153 = vld [vmem:[%s12 + $0x8] sm:$0xff]
      %v3154 = vld [vmem:[%s12 + $0x10] sm:$0xff]
      %v3155 = vld [vmem:[%s12 + $0x18] sm:$0xff]
      %v3156 = vld [vmem:[%s13] sm:$0xff]
      %v3157 = vld [vmem:[%s13 + $0x8] sm:$0xff]
      %v3158 = vld [vmem:[%s13 + $0x10] sm:$0xff]
      %v3159 = vld [vmem:[%s13 + $0x18] sm:$0xff]
      %3161 = vset.pattern.permute.xlu0 0
      %3162 = vperm.xlu0 %3161, %v3156
      %v3163 = vpop.permute.xlu0 %3162
      %3166 = vset.pattern.permute.xlu0 0
      %3167 = vperm.xlu0 %3166, %v3157
      %v3168 = vpop.permute.xlu0 %3167
      %3171 = vset.pattern.permute.xlu0 0
      %3172 = vperm.xlu0 %3171, %v3158
      %v3173 = vpop.permute.xlu0 %3172
      %3176 = vset.pattern.permute.xlu0 0
      %3177 = vperm.xlu0 %3176, %v3159
      %v3178 = vpop.permute.xlu0 %3177
      %v3181 = vsel %vm1596, %v3152, 0
      %v3184 = vsel %vm1596, %v3153, 0
      %v3187 = vsel %vm1596, %v3154, 0
      %v3190 = vsel %vm1596, %v3155, 0
      %3192 = vmatprep.subr.mxu0 0.0
      %3193 = vmatpush1.msra.mxu0 0.0
      %3194 = vmatprep.subr.mxu0 0.0
      %3195 = vmatpush1.msra.mxu0 0.0
      %3196 = vmatprep.subr.mxu0 0.0
      %3197 = vmatpush1.msra.mxu0 0.0
      %3198 = vmatprep.subr.mxu0 0.0
      %3199 = vmatpush1.msra.mxu0 0.0
      %3200 = vmatprep.subr.mxu0 0.0
      %3201 = vmatpush1.msra.mxu0 0.0
      %3202 = vmatprep.subr.mxu0 0.0
      %3203 = vmatpush1.msra.mxu0 0.0
      %3204 = vmatprep.subr.mxu0 0.0
      %3205 = vmatpush1.msra.mxu0 0.0
      %3206 = vmatprep.subr.mxu0 0.0
      %3207 = vmatpush1.msra.mxu0 0.0
      %3208 = vmatprep.subr.mxu0 %v3151
      %3209 = vmatpush1.msra.mxu0 %v3150
      %3210 = vmatprep.subr.mxu0 %v3149
      %3211 = vmatpush1.msra.mxu0 %v3148
      %3212 = vmatprep.subr.mxu0 %v3147
      %3213 = vmatpush1.msra.mxu0 %v3146
      %3214 = vmatprep.subr.mxu0 %v3145
      %3215 = vmatpush1.msra.mxu0 %v3144
      %3216 = vmatprep.subr.mxu0 %v3143
      %3217 = vmatpush1.msra.mxu0 %v3142
      %3218 = vmatprep.subr.mxu0 %v3141
      %3219 = vmatpush1.msra.mxu0 %v3140
      %3220 = vmatprep.subr.mxu0 %v3139
      %3221 = vmatpush1.msra.mxu0 %v3138
      %3222 = vmatprep.subr.mxu0 %v3137
      %3223 = vmatpush1.msra.mxu0 %v3136
      %3224 = vmatprep.subr.mxu0 0.0
      %3225 = vmatpush2.msra.mxu0 0.0
      %3226 = vmatprep.subr.mxu0 0.0
      %3227 = vmatpush2.msra.mxu0 0.0
      %3228 = vmatprep.subr.mxu0 0.0
      %3229 = vmatpush2.msra.mxu0 0.0
      %3230 = vmatprep.subr.mxu0 0.0
      %3231 = vmatpush2.msra.mxu0 0.0
      %3232 = vmatprep.subr.mxu0 0.0
      %3233 = vmatpush2.msra.mxu0 0.0
      %3234 = vmatprep.subr.mxu0 0.0
      %3235 = vmatpush2.msra.mxu0 0.0
      %3236 = vmatprep.subr.mxu0 0.0
      %3237 = vmatpush2.msra.mxu0 0.0
      %3238 = vmatprep.subr.mxu0 0.0
      %3239 = vmatpush2.msra.mxu0 0.0
      %3240 = vmatprep.subr.mxu0 0.0
      %3241 = vmatpush2.msra.mxu0 0.0
      %3242 = vmatprep.subr.mxu0 0.0
      %3243 = vmatpush2.msra.mxu0 0.0
      %3244 = vmatprep.subr.mxu0 0.0
      %3245 = vmatpush2.msra.mxu0 0.0
      %3246 = vmatprep.subr.mxu0 0.0
      %3247 = vmatpush2.msra.mxu0 0.0
      %3248 = vmatprep.subr.mxu0 0.0
      %3249 = vmatpush2.msra.mxu0 0.0
      %3250 = vmatprep.subr.mxu0 0.0
      %3251 = vmatpush2.msra.mxu0 0.0
      %3252 = vmatprep.subr.mxu0 0.0
      %3253 = vmatpush2.msra.mxu0 0.0
      %3254 = vmatprep.subr.mxu0 0.0
      %3255 = vmatpush2.msra.mxu0 0.0
      %3256 = vmatprep.mubr.f32.mxu0 0.0
      %3257 = vmatmul.mubr.f32.gmra.mxu0 %v3181
      %v3258 = vpop.f32.mrf.mxu0
      %v3259 = vadd.f32 %v3163, %v3258
      %v3260 = vpop.f32.mrf.mxu0
      %v3261 = vadd.f32 %v3163, %v3260
      %3262 = vmatprep.mubr.f32.mxu0 0.0
      %3263 = vmatmul.mubr.f32.gmra.mxu0 %v3184
      %v3264 = vpop.f32.mrf.mxu0
      %v3265 = vadd.f32 %v3168, %v3264
      %v3266 = vpop.f32.mrf.mxu0
      %v3267 = vadd.f32 %v3168, %v3266
      %3268 = vmatprep.mubr.f32.mxu0 0.0
      %3269 = vmatmul.mubr.f32.gmra.mxu0 %v3187
      %v3270 = vpop.f32.mrf.mxu0
      %v3271 = vadd.f32 %v3173, %v3270
      %v3272 = vpop.f32.mrf.mxu0
      %v3273 = vadd.f32 %v3173, %v3272
      %3274 = vmatprep.mubr.f32.mxu0 0.0
      %3275 = vmatmul.mubr.f32.gmra.mxu0 %v3190
      %v3276 = vpop.f32.mrf.mxu0
      %v3277 = vadd.f32 %v3178, %v3276
      %v3278 = vpop.f32.mrf.mxu0
      %v3279 = vadd.f32 %v3178, %v3278
      %3280 = vdwg.mxu0
      %3281 = vst [vmem:[%s649] sm:$0xff] %v3259
      %3282 = vst [vmem:[%s649 + $0x8] sm:$0xff] %v3261
      %3283 = vst [vmem:[%s649 + $0x10] sm:$0xff] %v3265
      %3284 = vst [vmem:[%s649 + $0x18] sm:$0xff] %v3267
      %3285 = vst [vmem:[%s649 + $0x20] sm:$0xff] %v3271
      %3286 = vst [vmem:[%s649 + $0x28] sm:$0xff] %v3273
      %3287 = vst [vmem:[%s649 + $0x30] sm:$0xff] %v3277
      %3288 = vst [vmem:[%s649 + $0x38] sm:$0xff] %v3279
      %p3289 = scmp.lt.s32.totalorder %s31, 1
      %s3290 = scalar_select %p3289, %s31, 1
      %s3291 = smul.addr %s3290, 8
      %s3292 = smul.addr %s3291, 8
      %s3293 = scalar_lea.vmem %s20, %s3292
      // Predicated region
      $region101: #{ground_trans_lite.1} parent=99 // pred_check
        %p3294 = pneg %p479
      $region102: #{ground_trans_lite.1} parent=99 // pred_check_branch
        %3296 = sbr.rel (%p3294) target = $region104
      $region103: #{ground_trans_lite.1} parent=99 // pred_region
        _
      $region104: #{ground_trans_lite.1} parent=99 // pred_fallthru
        _
    $region100: #{ground_trans_lite.1} parent=5 // pred_fallthru
      _
    %p3297 = scmp.le.s32.totalorder 2, %s26
    // Predicated region
    $region105: #{ground_trans_lite.1} parent=5 // pred_check
      %p3298 = pneg %p3297
    $region106: #{ground_trans_lite.1} parent=5 // pred_check_branch
      %3300 = sbr.rel (%p3298) target = $region108
    $region107: #{ground_trans_lite.1} parent=5 // pred_region
      %s3301 = ssub.s32 %s26, 2
      // Predicated region
      $region109: #{ground_trans_lite.1} parent=107 // pred_check
        %p3302 = pneg %p485
      $region110: #{ground_trans_lite.1} parent=107 // pred_check_branch
        %3304 = sbr.rel (%p3302) target = $region112
      $region111: #{ground_trans_lite.1} parent=107 // pred_region
        %p3305 = scmp.lt.s32.totalorder %s32, 1
        %s3306 = scalar_select %p3305, %s32, 1
        %s3307 = smul.addr %s3306, 8
        %s3308 = smul.addr %s3307, 8
        %s3309 = scalar_lea.vmem %s20, %s3308
      $region112: #{ground_trans_lite.1} parent=107 // pred_fallthru
        _
    $region108: #{ground_trans_lite.1} parent=5 // pred_fallthru
      _
  $region6: #{ground_trans_lite.1} parent=0 // loop_footer
    %s30 = sadd.s32 1, %s26
  $region7: #{ground_trans_lite.1} parent=0 // loop_footer_branch
    %25 = sbr.rel target = $region3
  $region8: #{ground_trans_lite.1} parent=0 // loop_exit
    _

</llo_original>
